<compile_context>
chip_gen: v7x
topology: tpu7x:2x2x1
jax: 0.10.0
libtpu: 0.0.40
codegen_flags: <defaults>
</compile_context>

<pallas_src>
import jax
import jax.numpy as jnp
from jax.experimental import pallas as pl
from jax.experimental.pallas import tpu as pltpu


def _spa_kernel(org_ref, enh_ref, out_ref):
    f32 = jnp.float32
    _, C, TH, W = org_ref.shape          # one H-strip of one image
    _, _, hp, wp = out_ref.shape         # full pooled map (resident across strips)
    hp_t = TH // 4                       # pooled rows produced by this strip
    inv_c = 1.0 / C

    k = pl.program_id(1)
    n_k = pl.num_programs(1)
    prec = jax.lax.Precision.HIGHEST

    # ---- constant matrices, generated in-kernel (iota compares, no DMA) -------
    # Row-pool matrix with the channel mean folded in: entries 0.25 / C.
    p_i = jax.lax.broadcasted_iota(jnp.int32, (hp_t, TH), 0)
    t_i = jax.lax.broadcasted_iota(jnp.int32, (hp_t, TH), 1)
    pht = jnp.where((t_i >= 4 * p_i) & (t_i < 4 * p_i + 4),
                    0.25 * inv_c, 0.0).astype(f32)            # (hp_t, TH)
    # Column-pool matrix: entries 0.25.
    w_i = jax.lax.broadcasted_iota(jnp.int32, (W, wp), 0)
    q_i = jax.lax.broadcasted_iota(jnp.int32, (W, wp), 1)
    pw = jnp.where((w_i >= 4 * q_i) & (w_i < 4 * q_i + 4),
                   0.25, 0.0).astype(f32)                     # (W, wp)

    # ---- diff-first pooling: pooled = AvgPool4(mean_c(org - enh)) for strip ---
    rows = jnp.zeros((hp_t, W), f32)
    for c in range(C):                   # static loop; channel mean rides MXU K
        d_c = org_ref[0, c].astype(f32) - enh_ref[0, c].astype(f32)   # (TH, W)
        rows = rows + jnp.dot(pht, d_c, precision=prec,
                              preferred_element_type=f32)
    pooled = jnp.dot(rows, pw, precision=prec,
                     preferred_element_type=f32)              # (hp_t, wp)

    off = k * hp_t
    if hp_t % 8 == 0:                    # sublane-aligned strip stores when tiling
        off = pl.multiple_of(off, 8)
    out_ref[0, 0, pl.ds(off, hp_t), :] = pooled

    # ---- finalize on the last strip of this image -----------------------------
    @pl.when(k == n_k - 1)
    def _():
        d = out_ref[0, 0, :, :]                               # (hp, wp) pooled diff

        # Border-aware shift matrices (zero padding of the 3x3 convs), via iota.
        ih = jax.lax.broadcasted_iota(jnp.int32, (hp, hp), 0)
        jh = jax.lax.broadcasted_iota(jnp.int32, (hp, hp), 1)
        su = (ih == jh + 1).astype(f32)      # (SU @ X)[i, j] = X[i-1, j]
        sd = (ih + 1 == jh).astype(f32)      # (SD @ X)[i, j] = X[i+1, j]
        iw = jax.lax.broadcasted_iota(jnp.int32, (wp, wp), 0)
        jw = jax.lax.broadcasted_iota(jnp.int32, (wp, wp), 1)
        sl = (iw + 1 == jw).astype(f32)      # (X @ SL)[i, j] = X[i, j-1]
        sr = (iw == jw + 1).astype(f32)      # (X @ SR)[i, j] = X[i, j+1]

        up_n = jnp.dot(su, d, precision=prec, preferred_element_type=f32)
        dn_n = jnp.dot(sd, d, precision=prec, preferred_element_type=f32)
        lf_n = jnp.dot(d, sl, precision=prec, preferred_element_type=f32)
        rt_n = jnp.dot(d, sr, precision=prec, preferred_element_type=f32)

        e = ((d - lf_n) ** 2 + (d - rt_n) ** 2 +
             (d - up_n) ** 2 + (d - dn_n) ** 2)
        out_ref[0, 0, :, :] = e


def _pick_strip_rows(H, W, C, budget_bytes=8 << 20):
    """Rows per H-strip: whole image if the double-buffered f32 input blocks fit
    the budget, else the largest multiple-of-32 divisor of H that does."""
    if 16 * C * H * W <= budget_bytes:          # 2 inputs x 2 buffers x 4 B/elem
        return H
    best = None
    t = 32
    while t <= H:
        if H % t == 0 and 16 * C * t * W <= budget_bytes:
            best = t
        t += 32
    if best is None:
        best = 32 if (H % 32 == 0) else H
    return best


def l_spa_pallas(org, enhance):
    B, C, H, W = org.shape
    assert enhance.shape == org.shape
    assert H % 4 == 0 and W % 4 == 0
    hp, wp = H // 4, W // 4

    TH = _pick_strip_rows(H, W, C)
    n_k = H // TH

    in_spec = pl.BlockSpec((1, C, TH, W), lambda b, k: (b, 0, k, 0))
    out_spec = pl.BlockSpec((1, 1, hp, wp), lambda b, k: (b, 0, 0, 0))

    # 2 inputs x 2 pipeline buffers + a couple of (TH, W) temporaries + output.
    vmem_need = (4 * C * TH * W + 4 * TH * W + 4 * hp * wp) * 4 + (2 << 20)
    vmem_limit = int(min(max(vmem_need, 32 << 20), 128 << 20))

    return pl.pallas_call(
        _spa_kernel,
        out_shape=jax.ShapeDtypeStruct((B, 1, hp, wp), jnp.float32),
        grid_spec=pltpu.PrefetchScalarGridSpec(
            num_scalar_prefetch=0,
            grid=(B, n_k),
            in_specs=[in_spec, in_spec],
            out_specs=out_spec,
        ),
        compiler_params=pltpu.CompilerParams(
            dimension_semantics=("parallel", "arbitrary"),
            vmem_limit_bytes=vmem_limit,
        ),
    )(org, enhance)


def l_spa_reference(org, enhance):
    """Plain-JAX reference mirroring the PyTorch forward."""
    om = jnp.mean(org, axis=1, keepdims=True)
    em = jnp.mean(enhance, axis=1, keepdims=True)

    def pool(x):
        B, _, H, W = x.shape
        return jnp.mean(x.reshape(B, 1, H // 4, 4, W // 4, 4), axis=(3, 5))

    op, ep = pool(om), pool(em)

    def diffs(x):
        p = jnp.pad(x, ((0, 0), (0, 0), (1, 1), (1, 1)))
        left = x - p[:, :, 1:-1, :-2]
        right = x - p[:, :, 1:-1, 2:]
        up = x - p[:, :, :-2, 1:-1]
        down = x - p[:, :, 2:, 1:-1]
        return left, right, up, down

    ol, orr, ou, od = diffs(op)
    el, err, eu, ed = diffs(ep)
    return ((ol - el) ** 2 + (orr - err) ** 2 +
            (ou - eu) ** 2 + (od - ed) ** 2)


if __name__ == "__main__":
    key = jax.random.PRNGKey(0)
    k1, k2 = jax.random.split(key)
    B, C, H, W = 2, 4, 16, 16
    org = jax.random.uniform(k1, (B, C, H, W), dtype=jnp.float32)
    enhance = jax.random.uniform(k2, (B, C, H, W), dtype=jnp.float32)

    out = jax.block_until_ready(l_spa_pallas(org, enhance))
    ref = jax.block_until_ready(l_spa_reference(org, enhance))

    assert out.shape == (B, 1, H // 4, W // 4)
    assert jnp.allclose(out, ref, atol=1e-5, rtol=1e-5), \
        float(jnp.max(jnp.abs(out - ref)))
    print("KERNEL_OK")
</pallas_src>

<mosaic_0001>
module attributes {stable_mosaic.version = 11 : i64} {
  func.func @_spa_kernel(%arg0: i32, %arg1: i32, %arg2: memref<1x4x16x16xf32, #tpu.memory_space<vmem>>, %arg3: memref<1x4x16x16xf32, #tpu.memory_space<vmem>>, %arg4: memref<1x1x4x4xf32, #tpu.memory_space<vmem>>) attributes {dimension_semantics = [#tpu.dimension_semantics<parallel>, #tpu.dimension_semantics<arbitrary>], iteration_bounds = array<i64: 2, 1>, scalar_prefetch = 0 : i64, scratch_operands = 0 : i64, tpu.core_type = #tpu.core_type<tc>, window_params = [{transform_indices = @transform_0, window_bounds = array<i64: 1, 4, 16, 16>}, {transform_indices = @transform_1, window_bounds = array<i64: 1, 4, 16, 16>}, {transform_indices = @transform_2, window_bounds = array<i64: 1, 1, 4, 4>}]} {
    %0 = tpu.iota {dimensions = array<i32: 0>} : vector<4x16xi32>
    %1 = tpu.iota {dimensions = array<i32: 1>} : vector<4x16xi32>
    %c4_i32 = arith.constant 4 : i32
    %2 = vector.broadcast %c4_i32 : i32 to vector<4x16xi32>
    %3 = arith.muli %2, %0 : vector<4x16xi32>
    %4 = arith.cmpi sge, %1, %3 : vector<4x16xi32>
    %c4_i32_0 = arith.constant 4 : i32
    %5 = vector.broadcast %c4_i32_0 : i32 to vector<4x16xi32>
    %6 = arith.muli %5, %0 : vector<4x16xi32>
    %c4_i32_1 = arith.constant 4 : i32
    %7 = vector.broadcast %c4_i32_1 : i32 to vector<4x16xi32>
    %8 = arith.addi %6, %7 : vector<4x16xi32>
    %9 = arith.cmpi slt, %1, %8 : vector<4x16xi32>
    %10 = arith.andi %4, %9 : vector<4x16xi1>
    %cst = arith.constant 6.250000e-02 : f32
    %cst_2 = arith.constant 0.000000e+00 : f32
    %11 = vector.broadcast %cst : f32 to vector<4x16xf32>
    %12 = vector.broadcast %cst_2 : f32 to vector<4x16xf32>
    %13 = arith.select %10, %11, %12 : vector<4x16xi1>, vector<4x16xf32>
    %14 = tpu.iota {dimensions = array<i32: 0>} : vector<16x4xi32>
    %15 = tpu.iota {dimensions = array<i32: 1>} : vector<16x4xi32>
    %c4_i32_3 = arith.constant 4 : i32
    %16 = vector.broadcast %c4_i32_3 : i32 to vector<16x4xi32>
    %17 = arith.muli %16, %15 : vector<16x4xi32>
    %18 = arith.cmpi sge, %14, %17 : vector<16x4xi32>
    %c4_i32_4 = arith.constant 4 : i32
    %19 = vector.broadcast %c4_i32_4 : i32 to vector<16x4xi32>
    %20 = arith.muli %19, %15 : vector<16x4xi32>
    %c4_i32_5 = arith.constant 4 : i32
    %21 = vector.broadcast %c4_i32_5 : i32 to vector<16x4xi32>
    %22 = arith.addi %20, %21 : vector<16x4xi32>
    %23 = arith.cmpi slt, %14, %22 : vector<16x4xi32>
    %24 = arith.andi %18, %23 : vector<16x4xi1>
    %cst_6 = arith.constant 2.500000e-01 : f32
    %cst_7 = arith.constant 0.000000e+00 : f32
    %25 = vector.broadcast %cst_6 : f32 to vector<16x4xf32>
    %26 = vector.broadcast %cst_7 : f32 to vector<16x4xf32>
    %27 = arith.select %24, %25, %26 : vector<16x4xi1>, vector<16x4xf32>
    %cst_8 = arith.constant 0.000000e+00 : f32
    %28 = vector.broadcast %cst_8 : f32 to vector<4x16xf32>
    %c0 = arith.constant 0 : index
    %c0_9 = arith.constant 0 : index
    %c0_10 = arith.constant 0 : index
    %c0_11 = arith.constant 0 : index
    %29 = vector.load %arg2[%c0, %c0_9, %c0_10, %c0_11] : memref<1x4x16x16xf32, #tpu.memory_space<vmem>>, vector<1x1x16x16xf32>
    %30 = vector.shape_cast %29 : vector<1x1x16x16xf32> to vector<16x16xf32>
    %c0_12 = arith.constant 0 : index
    %c0_13 = arith.constant 0 : index
    %c0_14 = arith.constant 0 : index
    %c0_15 = arith.constant 0 : index
    %31 = vector.load %arg3[%c0_12, %c0_13, %c0_14, %c0_15] : memref<1x4x16x16xf32, #tpu.memory_space<vmem>>, vector<1x1x16x16xf32>
    %32 = vector.shape_cast %31 : vector<1x1x16x16xf32> to vector<16x16xf32>
    %33 = arith.subf %30, %32 : vector<16x16xf32>
    %cst_16 = arith.constant dense<0.000000e+00> : vector<4x16xf32>
    %34 = tpu.matmul %13, %33, %cst_16 {dimension_numbers = #tpu.dot_dimension_numbers<[1], [0], [0], [1], [0, 0, 1, 1], [], []>, precision = #tpu.contract_precision<fp32>} : vector<4x16xf32>, vector<16x16xf32>, vector<4x16xf32> -> vector<4x16xf32>
    %35 = arith.addf %28, %34 : vector<4x16xf32>
    %c0_17 = arith.constant 0 : index
    %c1 = arith.constant 1 : index
    %c0_18 = arith.constant 0 : index
    %c0_19 = arith.constant 0 : index
    %36 = vector.load %arg2[%c0_17, %c1, %c0_18, %c0_19] : memref<1x4x16x16xf32, #tpu.memory_space<vmem>>, vector<1x1x16x16xf32>
    %37 = vector.shape_cast %36 : vector<1x1x16x16xf32> to vector<16x16xf32>
    %c0_20 = arith.constant 0 : index
    %c1_21 = arith.constant 1 : index
    %c0_22 = arith.constant 0 : index
    %c0_23 = arith.constant 0 : index
    %38 = vector.load %arg3[%c0_20, %c1_21, %c0_22, %c0_23] : memref<1x4x16x16xf32, #tpu.memory_space<vmem>>, vector<1x1x16x16xf32>
    %39 = vector.shape_cast %38 : vector<1x1x16x16xf32> to vector<16x16xf32>
    %40 = arith.subf %37, %39 : vector<16x16xf32>
    %cst_24 = arith.constant dense<0.000000e+00> : vector<4x16xf32>
    %41 = tpu.matmul %13, %40, %cst_24 {dimension_numbers = #tpu.dot_dimension_numbers<[1], [0], [0], [1], [0, 0, 1, 1], [], []>, precision = #tpu.contract_precision<fp32>} : vector<4x16xf32>, vector<16x16xf32>, vector<4x16xf32> -> vector<4x16xf32>
    %42 = arith.addf %35, %41 : vector<4x16xf32>
    %c0_25 = arith.constant 0 : index
    %c2 = arith.constant 2 : index
    %c0_26 = arith.constant 0 : index
    %c0_27 = arith.constant 0 : index
    %43 = vector.load %arg2[%c0_25, %c2, %c0_26, %c0_27] : memref<1x4x16x16xf32, #tpu.memory_space<vmem>>, vector<1x1x16x16xf32>
    %44 = vector.shape_cast %43 : vector<1x1x16x16xf32> to vector<16x16xf32>
    %c0_28 = arith.constant 0 : index
    %c2_29 = arith.constant 2 : index
    %c0_30 = arith.constant 0 : index
    %c0_31 = arith.constant 0 : index
    %45 = vector.load %arg3[%c0_28, %c2_29, %c0_30, %c0_31] : memref<1x4x16x16xf32, #tpu.memory_space<vmem>>, vector<1x1x16x16xf32>
    %46 = vector.shape_cast %45 : vector<1x1x16x16xf32> to vector<16x16xf32>
    %47 = arith.subf %44, %46 : vector<16x16xf32>
    %cst_32 = arith.constant dense<0.000000e+00> : vector<4x16xf32>
    %48 = tpu.matmul %13, %47, %cst_32 {dimension_numbers = #tpu.dot_dimension_numbers<[1], [0], [0], [1], [0, 0, 1, 1], [], []>, precision = #tpu.contract_precision<fp32>} : vector<4x16xf32>, vector<16x16xf32>, vector<4x16xf32> -> vector<4x16xf32>
    %49 = arith.addf %42, %48 : vector<4x16xf32>
    %c0_33 = arith.constant 0 : index
    %c3 = arith.constant 3 : index
    %c0_34 = arith.constant 0 : index
    %c0_35 = arith.constant 0 : index
    %50 = vector.load %arg2[%c0_33, %c3, %c0_34, %c0_35] : memref<1x4x16x16xf32, #tpu.memory_space<vmem>>, vector<1x1x16x16xf32>
    %51 = vector.shape_cast %50 : vector<1x1x16x16xf32> to vector<16x16xf32>
    %c0_36 = arith.constant 0 : index
    %c3_37 = arith.constant 3 : index
    %c0_38 = arith.constant 0 : index
    %c0_39 = arith.constant 0 : index
    %52 = vector.load %arg3[%c0_36, %c3_37, %c0_38, %c0_39] : memref<1x4x16x16xf32, #tpu.memory_space<vmem>>, vector<1x1x16x16xf32>
    %53 = vector.shape_cast %52 : vector<1x1x16x16xf32> to vector<16x16xf32>
    %54 = arith.subf %51, %53 : vector<16x16xf32>
    %cst_40 = arith.constant dense<0.000000e+00> : vector<4x16xf32>
    %55 = tpu.matmul %13, %54, %cst_40 {dimension_numbers = #tpu.dot_dimension_numbers<[1], [0], [0], [1], [0, 0, 1, 1], [], []>, precision = #tpu.contract_precision<fp32>} : vector<4x16xf32>, vector<16x16xf32>, vector<4x16xf32> -> vector<4x16xf32>
    %56 = arith.addf %49, %55 : vector<4x16xf32>
    %cst_41 = arith.constant dense<0.000000e+00> : vector<4x4xf32>
    %57 = tpu.matmul %56, %27, %cst_41 {dimension_numbers = #tpu.dot_dimension_numbers<[1], [0], [0], [1], [0, 0, 1, 1], [], []>, precision = #tpu.contract_precision<fp32>} : vector<4x16xf32>, vector<16x4xf32>, vector<4x4xf32> -> vector<4x4xf32>
    %c4_i32_42 = arith.constant 4 : i32
    %58 = arith.muli %arg1, %c4_i32_42 : i32
    %c0_43 = arith.constant 0 : index
    %c0_44 = arith.constant 0 : index
    %59 = arith.index_cast %58 : i32 to index
    %c0_45 = arith.constant 0 : index
    %60 = vector.load %arg4[%c0_43, %c0_44, %59, %c0_45] : memref<1x1x4x4xf32, #tpu.memory_space<vmem>>, vector<1x1x4x4xf32>
    %61 = vector.shape_cast %60 : vector<1x1x4x4xf32> to vector<4x4xf32>
    %62 = vector.shape_cast %57 : vector<4x4xf32> to vector<1x1x4x4xf32>
    tpu.vector_store %arg4[%c0_43, %c0_44, %59, %c0_45], %62 {strides = array<i32>} : memref<1x1x4x4xf32, #tpu.memory_space<vmem>>, vector<1x1x4x4xf32>,
    %c0_i32 = arith.constant 0 : i32
    %63 = arith.cmpi eq, %arg1, %c0_i32 : i32
    %64 = arith.extui %63 : i1 to i32
    %c0_i32_46 = arith.constant 0 : i32
    %65 = arith.cmpi ne, %64, %c0_i32_46 : i32
    scf.if %65 {
      %c0_47 = arith.constant 0 : index
      %c0_48 = arith.constant 0 : index
      %c0_49 = arith.constant 0 : index
      %c0_50 = arith.constant 0 : index
      %66 = vector.load %arg4[%c0_47, %c0_48, %c0_49, %c0_50] : memref<1x1x4x4xf32, #tpu.memory_space<vmem>>, vector<1x1x4x4xf32>
      %67 = vector.shape_cast %66 : vector<1x1x4x4xf32> to vector<4x4xf32>
      %68 = tpu.iota {dimensions = array<i32: 0>} : vector<4x4xi32>
      %69 = tpu.iota {dimensions = array<i32: 1>} : vector<4x4xi32>
      %c1_i32 = arith.constant 1 : i32
      %70 = vector.broadcast %c1_i32 : i32 to vector<4x4xi32>
      %71 = arith.addi %69, %70 : vector<4x4xi32>
      %72 = arith.cmpi eq, %68, %71 : vector<4x4xi32>
      %73 = arith.extui %72 : vector<4x4xi1> to vector<4x4xi32>
      %74 = arith.sitofp %73 : vector<4x4xi32> to vector<4x4xf32>
      %c1_i32_51 = arith.constant 1 : i32
      %75 = vector.broadcast %c1_i32_51 : i32 to vector<4x4xi32>
      %76 = arith.addi %68, %75 : vector<4x4xi32>
      %77 = arith.cmpi eq, %76, %69 : vector<4x4xi32>
      %78 = arith.extui %77 : vector<4x4xi1> to vector<4x4xi32>
      %79 = arith.sitofp %78 : vector<4x4xi32> to vector<4x4xf32>
      %80 = tpu.iota {dimensions = array<i32: 0>} : vector<4x4xi32>
      %81 = tpu.iota {dimensions = array<i32: 1>} : vector<4x4xi32>
      %c1_i32_52 = arith.constant 1 : i32
      %82 = vector.broadcast %c1_i32_52 : i32 to vector<4x4xi32>
      %83 = arith.addi %80, %82 : vector<4x4xi32>
      %84 = arith.cmpi eq, %83, %81 : vector<4x4xi32>
      %85 = arith.extui %84 : vector<4x4xi1> to vector<4x4xi32>
      %86 = arith.sitofp %85 : vector<4x4xi32> to vector<4x4xf32>
      %c1_i32_53 = arith.constant 1 : i32
      %87 = vector.broadcast %c1_i32_53 : i32 to vector<4x4xi32>
      %88 = arith.addi %81, %87 : vector<4x4xi32>
      %89 = arith.cmpi eq, %80, %88 : vector<4x4xi32>
      %90 = arith.extui %89 : vector<4x4xi1> to vector<4x4xi32>
      %91 = arith.sitofp %90 : vector<4x4xi32> to vector<4x4xf32>
      %cst_54 = arith.constant dense<0.000000e+00> : vector<4x4xf32>
      %92 = tpu.matmul %74, %67, %cst_54 {dimension_numbers = #tpu.dot_dimension_numbers<[1], [0], [0], [1], [0, 0, 1, 1], [], []>, precision = #tpu.contract_precision<fp32>} : vector<4x4xf32>, vector<4x4xf32>, vector<4x4xf32> -> vector<4x4xf32>
      %cst_55 = arith.constant dense<0.000000e+00> : vector<4x4xf32>
      %93 = tpu.matmul %79, %67, %cst_55 {dimension_numbers = #tpu.dot_dimension_numbers<[1], [0], [0], [1], [0, 0, 1, 1], [], []>, precision = #tpu.contract_precision<fp32>} : vector<4x4xf32>, vector<4x4xf32>, vector<4x4xf32> -> vector<4x4xf32>
      %cst_56 = arith.constant dense<0.000000e+00> : vector<4x4xf32>
      %94 = tpu.matmul %67, %86, %cst_56 {dimension_numbers = #tpu.dot_dimension_numbers<[1], [0], [0], [1], [0, 0, 1, 1], [], []>, precision = #tpu.contract_precision<fp32>} : vector<4x4xf32>, vector<4x4xf32>, vector<4x4xf32> -> vector<4x4xf32>
      %cst_57 = arith.constant dense<0.000000e+00> : vector<4x4xf32>
      %95 = tpu.matmul %67, %91, %cst_57 {dimension_numbers = #tpu.dot_dimension_numbers<[1], [0], [0], [1], [0, 0, 1, 1], [], []>, precision = #tpu.contract_precision<fp32>} : vector<4x4xf32>, vector<4x4xf32>, vector<4x4xf32> -> vector<4x4xf32>
      %96 = arith.subf %67, %94 : vector<4x4xf32>
      %97 = arith.mulf %96, %96 : vector<4x4xf32>
      %98 = arith.subf %67, %95 : vector<4x4xf32>
      %99 = arith.mulf %98, %98 : vector<4x4xf32>
      %100 = arith.addf %97, %99 : vector<4x4xf32>
      %101 = arith.subf %67, %92 : vector<4x4xf32>
      %102 = arith.mulf %101, %101 : vector<4x4xf32>
      %103 = arith.addf %100, %102 : vector<4x4xf32>
      %104 = arith.subf %67, %93 : vector<4x4xf32>
      %105 = arith.mulf %104, %104 : vector<4x4xf32>
      %106 = arith.addf %103, %105 : vector<4x4xf32>
      %c0_58 = arith.constant 0 : index
      %c0_59 = arith.constant 0 : index
      %c0_60 = arith.constant 0 : index
      %c0_61 = arith.constant 0 : index
      %107 = vector.load %arg4[%c0_58, %c0_59, %c0_60, %c0_61] : memref<1x1x4x4xf32, #tpu.memory_space<vmem>>, vector<1x1x4x4xf32>
      %108 = vector.shape_cast %107 : vector<1x1x4x4xf32> to vector<4x4xf32>
      %109 = vector.shape_cast %106 : vector<4x4xf32> to vector<1x1x4x4xf32>
      tpu.vector_store %arg4[%c0_58, %c0_59, %c0_60, %c0_61], %109 {strides = array<i32>} : memref<1x1x4x4xf32, #tpu.memory_space<vmem>>, vector<1x1x4x4xf32>,
    } else {
    }
    return
  }
  func.func @transform_0(%arg0: i32, %arg1: i32) -> (i32, i32, i32, i32) {
    %c0_i32 = arith.constant 0 : i32
    %c0_i32_0 = arith.constant 0 : i32
    %c0_i32_1 = arith.constant 0 : i32
    return %arg0, %c0_i32, %arg1, %c0_i32_0 : i32, i32, i32, i32
  }
  func.func @transform_1(%arg0: i32, %arg1: i32) -> (i32, i32, i32, i32) {
    %c0_i32 = arith.constant 0 : i32
    %c0_i32_0 = arith.constant 0 : i32
    %c0_i32_1 = arith.constant 0 : i32
    return %arg0, %c0_i32, %arg1, %c0_i32_0 : i32, i32, i32, i32
  }
  func.func @transform_2(%arg0: i32, %arg1: i32) -> (i32, i32, i32, i32) {
    %c0_i32 = arith.constant 0 : i32
    %c0_i32_0 = arith.constant 0 : i32
    %c0_i32_1 = arith.constant 0 : i32
    %c0_i32_2 = arith.constant 0 : i32
    return %arg0, %c0_i32, %c0_i32_0, %c0_i32_1 : i32, i32, i32, i32
  }
}

</mosaic_0001>

<llo_original>
// kernel: tpu_custom_call.1
$region0: #{tpu_custom_call.1}
  #allocation0 [shape = 'u32[]', space=smem, size = 0x4, offset = 0x4, fixed_abs, tag = 'smem constant byte address 0x4 - core index']
  #allocation1 [shape = 'u32[144,128]{1,0:T(1,128)}', space=vmem, size = 0x12000, scoped, tag = 'internal scratch']
  %s0 = inlined_call_operand.hbm [shape: f32[2,4,16,16], index: 0, kind: input, shape index: {}]
  %s1 = inlined_call_operand.hbm [shape: f32[2,4,16,16], index: 1, kind: input, shape index: {}]
  %s2 = inlined_call_operand.hbm [shape: f32[2,1,4,4], index: 2, kind: output, shape index: {}]
  %s3 = sld [smem:[#allocation0]]
  $region53: #{tpu_custom_call.1} parent=0
    _
  %s5 = ssub.s32 1, %s3
  %s6 = scalar_select 0, %s5, %s3
  $region1: #{tpu_custom_call.1} parent=0
    #allocation2 [shape = 'u8[65536]{0}', space=vmem, size = 0x10000, scoped, tag = 'input window, operand 0']
    #allocation3 [shape = 's32[2]{0}', space=sflag, size = 0x8, scoped, tag = 'scoped memory for tpu_custom_call.1']
    #allocation4 [shape = 's32[2]{0}', space=sflag, size = 0x8, scoped, tag = 'scoped memory for tpu_custom_call.1']
    #allocation5 [shape = 'u8[65536]{0}', space=vmem, size = 0x10000, scoped, tag = 'input window, operand 1']
    #allocation6 [shape = 's32[2]{0}', space=sflag, size = 0x8, scoped, tag = 'scoped memory for tpu_custom_call.1']
    #allocation7 [shape = 'u8[4096]{0}', space=vmem, size = 0x1000, scoped, tag = 'output window, operand 0']
    %7 = vsyncpa [#allocation3], 0
    %s8 = scalar_lea.sflag [#allocation3], 1
    %9 = vsyncpa %s8, 0
    %10 = vsyncpa [#allocation6], 0
    %s11 = scalar_lea.sflag [#allocation6], 1
    %12 = vsyncpa %s11, 0
    %13 = vsyncpa [#allocation4], 0
    %s14 = scalar_lea.sflag [#allocation4], 1
    %15 = vsyncpa %s14, 0
    loop: start=0, step=1, limit=4
    $region2: #{tpu_custom_call.1} parent=1 // loop_pre_header
      _
    $region3: #{tpu_custom_call.1} parent=1 // loop_header
      %s17 = sphi 0, %s21
      %p18 = scmp.ge.s32.totalorder %s17, 4
      %s24 = sphi 0, %s36
      %s25 = sphi 0, %s32
      %s26 = sphi 0, %s24
      %s27 = sphi 0, %s25
      %s28 = sphi 0, %s26
      %s29 = sphi 0, %s27
      %s41 = sphi 0, %s43
      %s44 = sphi 0, %s41
      %s45 = sphi 0, %s44
      %s61 = sphi 0, %s45
      %s69 = sphi 0, %s71
      %s72 = sphi 0, %s69
      %s73 = sphi 0, %s72
      %s89 = sphi 0, %s73
      %s95 = sphi 0, %s97
      %s98 = sphi 0, %s95
      %s99 = sphi 0, %s98
      %s115 = sphi 0, %s99
    $region4: #{tpu_custom_call.1} parent=1 // loop_header_branch
      %20 = sbr.rel (%p18) target = $region8
    $region5: #{tpu_custom_call.1} parent=1 // loop_body
      %s22 = ssub.s32 %s17, 1
      %s23 = ssub.s32 %s17, 2
      %s30 = sadd.s32 1, %s25
      %p31 = scmp.ge.s32.totalorder %s30, 1
      %s32 = scalar_select %p31, 0, %s30
      %s33 = sadd.s32 1, %s24
      %s34 = scalar_select %p31, %s33, %s24
      %p35 = scmp.ge.s32.totalorder %s34, 2
      %s36 = scalar_select %p35, 0, %s34
      %s37 = ssub.s32 %s24, %s36
      %s38 = ssub.s32 %s25, %s32
      %s39 = sor.u32 %s37, %s38
      %p40 = scmp.eq.s32.totalorder %s39, 0
      %s42 = sadd.s32 %s41, 1
      %s43 = scalar_select %p40, %s41, %s42
      %p46 = pneg %p40
      %p47 = scmp.eq.s32.totalorder %s17, 1
      %p48 = por %p46, %p47
      %p49 = scmp.ne.s32.totalorder %s41, %s44
      %p50 = scmp.eq.s32.totalorder %s17, 0
      %p51 = por %p49, %p50
      %p52 = scmp.ne.s32.totalorder %s41, %s44
      %p53 = scmp.eq.s32.totalorder %s22, 1
      %p54 = por %p52, %p53
      %p55 = scmp.ne.s32.totalorder %s44, %s45
      %p56 = scmp.eq.s32.totalorder %s22, 0
      %p57 = por %p55, %p56
      %p58 = scmp.ne.s32.totalorder %s44, %s45
      %p59 = scmp.eq.s32.totalorder %s23, 1
      %p60 = por %p58, %p59
      %p62 = scmp.ne.s32.totalorder %s45, %s61
      %p63 = scmp.eq.s32.totalorder %s23, 0
      %p64 = por %p62, %p63
      %s65 = ssub.s32 %s24, %s36
      %s66 = ssub.s32 %s25, %s32
      %s67 = sor.u32 %s65, %s66
      %p68 = scmp.eq.s32.totalorder %s67, 0
      %s70 = sadd.s32 %s69, 1
      %s71 = scalar_select %p68, %s69, %s70
      %p74 = pneg %p68
      %p75 = scmp.eq.s32.totalorder %s17, 1
      %p76 = por %p74, %p75
      %p77 = scmp.ne.s32.totalorder %s69, %s72
      %p78 = scmp.eq.s32.totalorder %s17, 0
      %p79 = por %p77, %p78
      %p80 = scmp.ne.s32.totalorder %s69, %s72
      %p81 = scmp.eq.s32.totalorder %s22, 1
      %p82 = por %p80, %p81
      %p83 = scmp.ne.s32.totalorder %s72, %s73
      %p84 = scmp.eq.s32.totalorder %s22, 0
      %p85 = por %p83, %p84
      %p86 = scmp.ne.s32.totalorder %s72, %s73
      %p87 = scmp.eq.s32.totalorder %s23, 1
      %p88 = por %p86, %p87
      %p90 = scmp.ne.s32.totalorder %s73, %s89
      %p91 = scmp.eq.s32.totalorder %s23, 0
      %p92 = por %p90, %p91
      %s93 = ssub.s32 %s24, %s36
      %p94 = scmp.eq.s32.totalorder %s93, 0
      %s96 = sadd.s32 %s95, 1
      %s97 = scalar_select %p94, %s95, %s96
      %p100 = pneg %p94
      %p101 = scmp.eq.s32.totalorder %s17, 1
      %p102 = por %p100, %p101
      %p103 = scmp.ne.s32.totalorder %s95, %s98
      %p104 = scmp.eq.s32.totalorder %s17, 0
      %p105 = por %p103, %p104
      %p106 = scmp.ne.s32.totalorder %s95, %s98
      %p107 = scmp.eq.s32.totalorder %s22, 1
      %p108 = por %p106, %p107
      %p109 = scmp.ne.s32.totalorder %s98, %s99
      %p110 = scmp.eq.s32.totalorder %s22, 0
      %p111 = por %p109, %p110
      %p112 = scmp.ne.s32.totalorder %s98, %s99
      %p113 = scmp.eq.s32.totalorder %s23, 1
      %p114 = por %p112, %p113
      %p116 = scmp.ne.s32.totalorder %s99, %s115
      %p117 = scmp.eq.s32.totalorder %s23, 0
      %p118 = por %p116, %p117
      %p119 = scmp.le.s32.totalorder 1, %s17
      %p120 = scmp.lt.s32.totalorder %s17, 3
      %p121 = pnand %p119, %p120
      %p122 = pneg %p121
      // Predicated region
      $region9: #{tpu_custom_call.1} parent=5 // pred_check
        _
      $region10: #{tpu_custom_call.1} parent=5 // pred_check_branch
        %124 = sbr.rel (%p121) target = $region12
      $region11: #{tpu_custom_call.1} parent=5 // pred_region
        %s125 = ssub.s32 %s17, 1
      $region12: #{tpu_custom_call.1} parent=5 // pred_fallthru
        _
      %p126 = scmp.lt.s32.totalorder %s17, 2
      // Predicated region
      $region13: #{tpu_custom_call.1} parent=5 // pred_check
        %p127 = pneg %p126
      $region14: #{tpu_custom_call.1} parent=5 // pred_check_branch
        %129 = sbr.rel (%p127) target = $region16
      $region15: #{tpu_custom_call.1} parent=5 // pred_region
        // Predicated region
        $region17: #{tpu_custom_call.1} parent=15 // pred_check
          %p130 = pneg %p51
        $region18: #{tpu_custom_call.1} parent=15 // pred_check_branch
          %132 = sbr.rel (%p130) target = $region20
        $region19: #{tpu_custom_call.1} parent=15 // pred_region
          %s133 = sand.u32 %s41, 1
          %s134 = scalar_lea.sflag [#allocation3], %s133
          %s135 = sand.u32 %s41, 1
          %s136 = smul.addr %s135, 64
          %s137 = scalar_lea.vmem [#allocation2], %s136
          %s138 = smul.u32 2, %s25
          %s140 = ssub.s32 1024, 1024
          %141 = vsyncadd %s134, %s140
          %s142 = smul.addr %s24, 8
          %s143 = sadd.s32 %s138, %s142
          %s144 = smul.addr %s143, 128
          %s145 = scalar_lea.hbm %s0, %s144
          %s146 = sshll.u32 %s137, 4
          %s147 = int_to_ptr.vmem [resolvable:$true] %s146
          %152 = dma.hbm_to_vmem [thread:$0]  %s145, 1024, %s147, %s134, 128, 128, 8
        $region20: #{tpu_custom_call.1} parent=15 // pred_fallthru
          _
        // Predicated region
        $region21: #{tpu_custom_call.1} parent=15 // pred_check
          %p153 = pneg %p79
        $region22: #{tpu_custom_call.1} parent=15 // pred_check_branch
          %155 = sbr.rel (%p153) target = $region24
        $region23: #{tpu_custom_call.1} parent=15 // pred_region
          %s156 = sand.u32 %s69, 1
          %s157 = scalar_lea.sflag [#allocation6], %s156
          %s158 = sand.u32 %s69, 1
          %s159 = smul.addr %s158, 64
          %s160 = scalar_lea.vmem [#allocation5], %s159
          %s161 = smul.u32 2, %s25
          %s163 = ssub.s32 1024, 1024
          %164 = vsyncadd %s157, %s163
          %s165 = smul.addr %s24, 8
          %s166 = sadd.s32 %s161, %s165
          %s167 = smul.addr %s166, 128
          %s168 = scalar_lea.hbm %s1, %s167
          %s169 = sshll.u32 %s160, 4
          %s170 = int_to_ptr.vmem [resolvable:$true] %s169
          %175 = dma.hbm_to_vmem [thread:$0]  %s168, 1024, %s170, %s157, 128, 128, 8
        $region24: #{tpu_custom_call.1} parent=15 // pred_fallthru
          _
      $region16: #{tpu_custom_call.1} parent=5 // pred_fallthru
        _
      %p176 = scmp.le.s32.totalorder 1, %s17
      %p177 = scmp.lt.s32.totalorder %s17, 3
      %p178 = pnand %p176, %p177
      %p179 = pneg %p178
      // Predicated region
      $region25: #{tpu_custom_call.1} parent=5 // pred_check
        _
      $region26: #{tpu_custom_call.1} parent=5 // pred_check_branch
        %181 = sbr.rel (%p178) target = $region28
      $region27: #{tpu_custom_call.1} parent=5 // pred_region
        %s182 = ssub.s32 %s17, 1
        %s183 = sand.u32 %s44, 1
        %s184 = scalar_lea.sflag [#allocation3], %s183
        %s185 = sand.u32 %s44, 1
        %s186 = smul.addr %s185, 64
        %s187 = scalar_lea.vmem [#allocation2], %s186
        // Predicated region
        $region29: #{tpu_custom_call.1} parent=27 // pred_check
          %p188 = pneg %p57
        $region30: #{tpu_custom_call.1} parent=27 // pred_check_branch
          %190 = sbr.rel (%p188) target = $region32
        $region31: #{tpu_custom_call.1} parent=27 // pred_region
          %191 = dma.done %s184, 1024
        $region32: #{tpu_custom_call.1} parent=27 // pred_fallthru
          _
        %s192 = sand.u32 %s72, 1
        %s193 = scalar_lea.sflag [#allocation6], %s192
        %s194 = sand.u32 %s72, 1
        %s195 = smul.addr %s194, 64
        %s196 = scalar_lea.vmem [#allocation5], %s195
        // Predicated region
        $region33: #{tpu_custom_call.1} parent=27 // pred_check
          %p197 = pneg %p85
        $region34: #{tpu_custom_call.1} parent=27 // pred_check_branch
          %199 = sbr.rel (%p197) target = $region36
        $region35: #{tpu_custom_call.1} parent=27 // pred_region
          %200 = dma.done %s193, 1024
        $region36: #{tpu_custom_call.1} parent=27 // pred_fallthru
          _
        %s201 = sand.u32 %s44, 1
        %s202 = scalar_lea.sflag [#allocation3], %s201
        %s203 = sand.u32 %s44, 1
        %s204 = smul.addr %s203, 64
        %s205 = scalar_lea.vmem [#allocation2], %s204
        %p206 = pneg %p57
        %p207 = pneg %p54
        %s208 = sand.u32 %s72, 1
        %s209 = scalar_lea.sflag [#allocation6], %s208
        %s210 = sand.u32 %s72, 1
        %s211 = smul.addr %s210, 64
        %s212 = scalar_lea.vmem [#allocation5], %s211
        %p213 = pneg %p85
        %p214 = pneg %p82
        %p215 = pneg %p111
        %p216 = pneg %p108
        %s217 = sand.u32 %s98, 1
        %s218 = scalar_lea.sflag [#allocation4], %s217
        %s219 = sand.u32 %s98, 1
        %s220 = smul.addr %s219, 4
        %s221 = scalar_lea.vmem [#allocation7], %s220
        %s222 = smul.u32 2, %s27
        %s223 = smul.u32 2, %s27
        %v224 = vlaneseq
        %v225 = vshrl.u32 %v224, 7
        %v226 = vlaneseq
        %v227 = vand.u32 %v226, 127
        %v228 = vmul.u32 %v225, 4
        %vm229 = vcmp.ge.s32.totalorder %v227, %v228
        %v230 = vadd.s32 %v228, 4
        %vm231 = vcmp.lt.s32.totalorder %v227, %v230
        %vm232 = vmand %vm229, %vm231
        %v233 = vsel %vm232, 0.0625, 0.0
        %v234 = vadd.s32 %v225, 8
        %v235 = vmul.u32 %v227, 4
        %vm236 = vcmp.ge.s32.totalorder %v225, %v235
        %vm237 = vcmp.ge.s32.totalorder %v234, %v235
        %v238 = vadd.s32 %v235, 4
        %vm239 = vcmp.lt.s32.totalorder %v225, %v238
        %vm240 = vcmp.lt.s32.totalorder %v234, %v238
        %vm241 = vmand %vm236, %vm239
        %vm242 = vmand %vm237, %vm240
        %v243 = vsel %vm241, 0.25, 0.0
        %v244 = vsel %vm242, 0.25, 0.0
        %v245 = vld [vmem:[%s187] sm:$0xff]
        %v246 = vld [vmem:[%s187 + $0x8] sm:$0xff]
        %v247 = vld [vmem:[%s196] sm:$0xff]
        %v248 = vld [vmem:[%s196 + $0x8] sm:$0xff]
        %v249 = vsub.f32 %v245, %v247
        %v250 = vsub.f32 %v246, %v248
        %s251 = scalar_lea.vmem %s187, 16 [#allocation2]
        %v252 = vld [vmem:[%s251] sm:$0xff]
        %v253 = vld [vmem:[%s251 + $0x8] sm:$0xff]
        %s254 = scalar_lea.vmem %s196, 16 [#allocation5]
        %v255 = vld [vmem:[%s254] sm:$0xff]
        %v256 = vld [vmem:[%s254 + $0x8] sm:$0xff]
        %v257 = vsub.f32 %v252, %v255
        %v258 = vsub.f32 %v253, %v256
        %vm259 = vcmask 130048
        %v261 = vsel %vm259, %v233, 0
        %263 = vmatprep.subr.mxu0 0.0
        %v264 = vand.u32 %v257, 4294901760
        %265 = vmatpush1.msra.mxu0 %v264
        %266 = vmatprep.subr.mxu0 0.0
        %v267 = vand.u32 %v258, 4294901760
        %268 = vmatpush1.msra.mxu0 %v267
        %269 = vmatprep.subr.mxu0 0.0
        %270 = vmatpush1.msra.mxu0 0.0
        %271 = vmatprep.subr.mxu0 0.0
        %272 = vmatpush1.msra.mxu0 0.0
        %273 = vmatprep.subr.mxu0 0.0
        %274 = vmatpush1.msra.mxu0 0.0
        %275 = vmatprep.subr.mxu0 0.0
        %276 = vmatpush1.msra.mxu0 0.0
        %277 = vmatprep.subr.mxu0 0.0
        %278 = vmatpush1.msra.mxu0 0.0
        %279 = vmatprep.subr.mxu0 0.0
        %280 = vmatpush1.msra.mxu0 0.0
        %281 = vmatprep.subr.mxu0 0.0
        %282 = vmatpush1.msra.mxu0 0.0
        %283 = vmatprep.subr.mxu0 0.0
        %284 = vmatpush1.msra.mxu0 0.0
        %285 = vmatprep.subr.mxu0 0.0
        %286 = vmatpush1.msra.mxu0 0.0
        %287 = vmatprep.subr.mxu0 0.0
        %288 = vmatpush1.msra.mxu0 0.0
        %289 = vmatprep.subr.mxu0 0.0
        %290 = vmatpush1.msra.mxu0 0.0
        %291 = vmatprep.subr.mxu0 0.0
        %292 = vmatpush1.msra.mxu0 0.0
        %293 = vmatprep.subr.mxu0 0.0
        %294 = vmatpush1.msra.mxu0 0.0
        %295 = vmatprep.subr.mxu0 0.0
        %296 = vmatpush1.msra.mxu0 0.0
        %297 = vmatprep.subr.mxu0 0.0
        %298 = vmatpush1.msra.mxu0 0.0
        %299 = vmatprep.subr.mxu0 0.0
        %300 = vmatpush1.msra.mxu0 0.0
        %301 = vmatprep.subr.mxu0 0.0
        %302 = vmatpush1.msra.mxu0 0.0
        %303 = vmatprep.subr.mxu0 0.0
        %304 = vmatpush1.msra.mxu0 0.0
        %305 = vmatprep.subr.mxu0 0.0
        %306 = vmatpush1.msra.mxu0 0.0
        %307 = vmatprep.subr.mxu0 0.0
        %308 = vmatpush1.msra.mxu0 0.0
        %309 = vmatprep.subr.mxu0 0.0
        %310 = vmatpush1.msra.mxu0 0.0
        %311 = vmatprep.subr.mxu0 0.0
        %312 = vmatpush1.msra.mxu0 0.0
        %313 = vmatprep.subr.mxu0 0.0
        %314 = vmatpush1.msra.mxu0 0.0
        %315 = vmatprep.subr.mxu0 0.0
        %316 = vmatpush1.msra.mxu0 0.0
        %317 = vmatprep.subr.mxu0 0.0
        %318 = vmatpush1.msra.mxu0 0.0
        %319 = vmatprep.subr.mxu0 0.0
        %320 = vmatpush1.msra.mxu0 0.0
        %321 = vmatprep.subr.mxu0 0.0
        %322 = vmatpush1.msra.mxu0 0.0
        %323 = vmatprep.subr.mxu0 0.0
        %324 = vmatpush1.msra.mxu0 0.0
        %325 = vmatprep.subr.mxu0 0.0
        %326 = vmatpush1.msra.mxu0 0.0
        %327 = vmatprep.subr.mxu0 0.0
        %328 = vmatpush1.msra.mxu0 0.0
        %329 = vmatprep.mubr.f32.mxu0 0.0
        %v330 = vand.u32 %v261, 4294901760
        %v331 = vsub.f32 %v261, %v330
        %v332 = vand.u32 %v331, 4294901760
        %v333 = vsub.f32 %v331, %v332
        %v334 = vand.u32 %v333, 4294901760
        %335 = vmatmul.mubr.f32.gmra.mrb[0].mxu0 %v334
        %v336 = vpop.f32.mrb[0].mxu0
        %v337 = vadd.f32 0.0, %v336
        %v338 = vpop.f32.mrb[0].mxu0
        %339 = vdwg.mxu0
        %340 = vmatprep.subr.mxu0 0.0
        %v341 = vand.u32 %v257, 4294901760
        %v342 = vsub.f32 %v257, %v341
        %v343 = vand.u32 %v342, 4294901760
        %v344 = vsub.f32 %v342, %v343
        %v345 = vand.u32 %v344, 4294901760
        %346 = vmatpush1.msra.mxu0 %v345
        %347 = vmatprep.subr.mxu0 0.0
        %v348 = vand.u32 %v258, 4294901760
        %v349 = vsub.f32 %v258, %v348
        %v350 = vand.u32 %v349, 4294901760
        %v351 = vsub.f32 %v349, %v350
        %v352 = vand.u32 %v351, 4294901760
        %353 = vmatpush1.msra.mxu0 %v352
        %354 = vmatprep.subr.mxu0 0.0
        %355 = vmatpush1.msra.mxu0 0.0
        %356 = vmatprep.subr.mxu0 0.0
        %357 = vmatpush1.msra.mxu0 0.0
        %358 = vmatprep.subr.mxu0 0.0
        %359 = vmatpush1.msra.mxu0 0.0
        %360 = vmatprep.subr.mxu0 0.0
        %361 = vmatpush1.msra.mxu0 0.0
        %362 = vmatprep.subr.mxu0 0.0
        %363 = vmatpush1.msra.mxu0 0.0
        %364 = vmatprep.subr.mxu0 0.0
        %365 = vmatpush1.msra.mxu0 0.0
        %366 = vmatprep.subr.mxu0 0.0
        %367 = vmatpush1.msra.mxu0 0.0
        %368 = vmatprep.subr.mxu0 0.0
        %369 = vmatpush1.msra.mxu0 0.0
        %370 = vmatprep.subr.mxu0 0.0
        %371 = vmatpush1.msra.mxu0 0.0
        %372 = vmatprep.subr.mxu0 0.0
        %373 = vmatpush1.msra.mxu0 0.0
        %374 = vmatprep.subr.mxu0 0.0
        %375 = vmatpush1.msra.mxu0 0.0
        %376 = vmatprep.subr.mxu0 0.0
        %377 = vmatpush1.msra.mxu0 0.0
        %378 = vmatprep.subr.mxu0 0.0
        %379 = vmatpush1.msra.mxu0 0.0
        %380 = vmatprep.subr.mxu0 0.0
        %381 = vmatpush1.msra.mxu0 0.0
        %382 = vmatprep.subr.mxu0 0.0
        %383 = vmatpush1.msra.mxu0 0.0
        %384 = vmatprep.subr.mxu0 0.0
        %385 = vmatpush1.msra.mxu0 0.0
        %386 = vmatprep.subr.mxu0 0.0
        %387 = vmatpush1.msra.mxu0 0.0
        %388 = vmatprep.subr.mxu0 0.0
        %389 = vmatpush1.msra.mxu0 0.0
        %390 = vmatprep.subr.mxu0 0.0
        %391 = vmatpush1.msra.mxu0 0.0
        %392 = vmatprep.subr.mxu0 0.0
        %393 = vmatpush1.msra.mxu0 0.0
        %394 = vmatprep.subr.mxu0 0.0
        %395 = vmatpush1.msra.mxu0 0.0
        %396 = vmatprep.subr.mxu0 0.0
        %397 = vmatpush1.msra.mxu0 0.0
        %398 = vmatprep.subr.mxu0 0.0
        %399 = vmatpush1.msra.mxu0 0.0
        %400 = vmatprep.subr.mxu0 0.0
        %401 = vmatpush1.msra.mxu0 0.0
        %402 = vmatprep.subr.mxu0 0.0
        %403 = vmatpush1.msra.mxu0 0.0
        %404 = vmatprep.subr.mxu0 0.0
        %405 = vmatpush1.msra.mxu0 0.0
        %406 = vmatprep.subr.mxu0 0.0
        %407 = vmatpush1.msra.mxu0 0.0
        %408 = vmatprep.subr.mxu0 0.0
        %409 = vmatpush1.msra.mxu0 0.0
        %410 = vmatprep.subr.mxu0 0.0
        %411 = vmatpush1.msra.mxu0 0.0
        %412 = vmatprep.subr.mxu0 0.0
        %413 = vmatpush1.msra.mxu0 0.0
        %414 = vmatprep.mubr.f32.mxu0 0.0
        %v415 = vand.u32 %v261, 4294901760
        %416 = vmatmul.mubr.f32.gmra.mrb[0].mxu0 %v415
        %v417 = vpop.f32.mrb[0].mxu0
        %v418 = vadd.f32 %v337, %v417
        %v419 = vpop.f32.mrb[0].mxu0
        %420 = vdwg.mxu0
        %421 = vmatprep.subr.mxu0 0.0
        %v422 = vand.u32 %v257, 4294901760
        %v423 = vsub.f32 %v257, %v422
        %424 = vmatpush1.msra.mxu0 %v423
        %425 = vmatprep.subr.mxu0 0.0
        %v426 = vand.u32 %v258, 4294901760
        %v427 = vsub.f32 %v258, %v426
        %428 = vmatpush1.msra.mxu0 %v427
        %429 = vmatprep.subr.mxu0 0.0
        %430 = vmatpush1.msra.mxu0 0.0
        %431 = vmatprep.subr.mxu0 0.0
        %432 = vmatpush1.msra.mxu0 0.0
        %433 = vmatprep.subr.mxu0 0.0
        %434 = vmatpush1.msra.mxu0 0.0
        %435 = vmatprep.subr.mxu0 0.0
        %436 = vmatpush1.msra.mxu0 0.0
        %437 = vmatprep.subr.mxu0 0.0
        %438 = vmatpush1.msra.mxu0 0.0
        %439 = vmatprep.subr.mxu0 0.0
        %440 = vmatpush1.msra.mxu0 0.0
        %441 = vmatprep.subr.mxu0 0.0
        %442 = vmatpush1.msra.mxu0 0.0
        %443 = vmatprep.subr.mxu0 0.0
        %444 = vmatpush1.msra.mxu0 0.0
        %445 = vmatprep.subr.mxu0 0.0
        %446 = vmatpush1.msra.mxu0 0.0
        %447 = vmatprep.subr.mxu0 0.0
        %448 = vmatpush1.msra.mxu0 0.0
        %449 = vmatprep.subr.mxu0 0.0
        %450 = vmatpush1.msra.mxu0 0.0
        %451 = vmatprep.subr.mxu0 0.0
        %452 = vmatpush1.msra.mxu0 0.0
        %453 = vmatprep.subr.mxu0 0.0
        %454 = vmatpush1.msra.mxu0 0.0
        %455 = vmatprep.subr.mxu0 0.0
        %456 = vmatpush1.msra.mxu0 0.0
        %457 = vmatprep.subr.mxu0 0.0
        %458 = vmatpush1.msra.mxu0 0.0
        %459 = vmatprep.subr.mxu0 0.0
        %460 = vmatpush1.msra.mxu0 0.0
        %461 = vmatprep.subr.mxu0 0.0
        %462 = vmatpush1.msra.mxu0 0.0
        %463 = vmatprep.subr.mxu0 0.0
        %464 = vmatpush1.msra.mxu0 0.0
        %465 = vmatprep.subr.mxu0 0.0
        %466 = vmatpush1.msra.mxu0 0.0
        %467 = vmatprep.subr.mxu0 0.0
        %468 = vmatpush1.msra.mxu0 0.0
        %469 = vmatprep.subr.mxu0 0.0
        %470 = vmatpush1.msra.mxu0 0.0
        %471 = vmatprep.subr.mxu0 0.0
        %472 = vmatpush1.msra.mxu0 0.0
        %473 = vmatprep.subr.mxu0 0.0
        %474 = vmatpush1.msra.mxu0 0.0
        %475 = vmatprep.subr.mxu0 0.0
        %476 = vmatpush1.msra.mxu0 0.0
        %477 = vmatprep.subr.mxu0 0.0
        %478 = vmatpush1.msra.mxu0 0.0
        %479 = vmatprep.subr.mxu0 0.0
        %480 = vmatpush1.msra.mxu0 0.0
        %481 = vmatprep.subr.mxu0 0.0
        %482 = vmatpush1.msra.mxu0 0.0
        %483 = vmatprep.subr.mxu0 0.0
        %484 = vmatpush1.msra.mxu0 0.0
        %485 = vmatprep.subr.mxu0 0.0
        %486 = vmatpush1.msra.mxu0 0.0
        %487 = vmatprep.subr.mxu0 0.0
        %488 = vmatpush1.msra.mxu0 0.0
        %489 = vmatprep.mubr.f32.mxu0 0.0
        %v490 = vand.u32 %v261, 4294901760
        %v491 = vsub.f32 %v261, %v490
        %492 = vmatmul.mubr.f32.gmra.mrb[0].mxu0 %v491
        %v493 = vpop.f32.mrb[0].mxu0
        %v494 = vadd.f32 %v418, %v493
        %v495 = vpop.f32.mrb[0].mxu0
        %496 = vdwg.mxu0
        %497 = vmatprep.subr.mxu0 0.0
        %v498 = vand.u32 %v257, 4294901760
        %499 = vmatpush1.msra.mxu0 %v498
        %500 = vmatprep.subr.mxu0 0.0
        %v501 = vand.u32 %v258, 4294901760
        %502 = vmatpush1.msra.mxu0 %v501
        %503 = vmatprep.subr.mxu0 0.0
        %504 = vmatpush1.msra.mxu0 0.0
        %505 = vmatprep.subr.mxu0 0.0
        %506 = vmatpush1.msra.mxu0 0.0
        %507 = vmatprep.subr.mxu0 0.0
        %508 = vmatpush1.msra.mxu0 0.0
        %509 = vmatprep.subr.mxu0 0.0
        %510 = vmatpush1.msra.mxu0 0.0
        %511 = vmatprep.subr.mxu0 0.0
        %512 = vmatpush1.msra.mxu0 0.0
        %513 = vmatprep.subr.mxu0 0.0
        %514 = vmatpush1.msra.mxu0 0.0
        %515 = vmatprep.subr.mxu0 0.0
        %516 = vmatpush1.msra.mxu0 0.0
        %517 = vmatprep.subr.mxu0 0.0
        %518 = vmatpush1.msra.mxu0 0.0
        %519 = vmatprep.subr.mxu0 0.0
        %520 = vmatpush1.msra.mxu0 0.0
        %521 = vmatprep.subr.mxu0 0.0
        %522 = vmatpush1.msra.mxu0 0.0
        %523 = vmatprep.subr.mxu0 0.0
        %524 = vmatpush1.msra.mxu0 0.0
        %525 = vmatprep.subr.mxu0 0.0
        %526 = vmatpush1.msra.mxu0 0.0
        %527 = vmatprep.subr.mxu0 0.0
        %528 = vmatpush1.msra.mxu0 0.0
        %529 = vmatprep.subr.mxu0 0.0
        %530 = vmatpush1.msra.mxu0 0.0
        %531 = vmatprep.subr.mxu0 0.0
        %532 = vmatpush1.msra.mxu0 0.0
        %533 = vmatprep.subr.mxu0 0.0
        %534 = vmatpush1.msra.mxu0 0.0
        %535 = vmatprep.subr.mxu0 0.0
        %536 = vmatpush1.msra.mxu0 0.0
        %537 = vmatprep.subr.mxu0 0.0
        %538 = vmatpush1.msra.mxu0 0.0
        %539 = vmatprep.subr.mxu0 0.0
        %540 = vmatpush1.msra.mxu0 0.0
        %541 = vmatprep.subr.mxu0 0.0
        %542 = vmatpush1.msra.mxu0 0.0
        %543 = vmatprep.subr.mxu0 0.0
        %544 = vmatpush1.msra.mxu0 0.0
        %545 = vmatprep.subr.mxu0 0.0
        %546 = vmatpush1.msra.mxu0 0.0
        %547 = vmatprep.subr.mxu0 0.0
        %548 = vmatpush1.msra.mxu0 0.0
        %549 = vmatprep.subr.mxu0 0.0
        %550 = vmatpush1.msra.mxu0 0.0
        %551 = vmatprep.subr.mxu0 0.0
        %552 = vmatpush1.msra.mxu0 0.0
        %553 = vmatprep.subr.mxu0 0.0
        %554 = vmatpush1.msra.mxu0 0.0
        %555 = vmatprep.subr.mxu0 0.0
        %556 = vmatpush1.msra.mxu0 0.0
        %557 = vmatprep.subr.mxu0 0.0
        %558 = vmatpush1.msra.mxu0 0.0
        %559 = vmatprep.subr.mxu0 0.0
        %560 = vmatpush1.msra.mxu0 0.0
        %561 = vmatprep.subr.mxu0 0.0
        %562 = vmatpush1.msra.mxu0 0.0
        %563 = vmatprep.mubr.f32.mxu0 0.0
        %v564 = vand.u32 %v261, 4294901760
        %v565 = vsub.f32 %v261, %v564
        %v566 = vand.u32 %v565, 4294901760
        %567 = vmatmul.mubr.f32.gmra.mrb[0].mxu0 %v566
        %v568 = vpop.f32.mrb[0].mxu0
        %v569 = vadd.f32 %v494, %v568
        %v570 = vpop.f32.mrb[0].mxu0
        %571 = vdwg.mxu0
        %572 = vmatprep.subr.mxu0 0.0
        %v573 = vand.u32 %v257, 4294901760
        %v574 = vsub.f32 %v257, %v573
        %v575 = vand.u32 %v574, 4294901760
        %576 = vmatpush1.msra.mxu0 %v575
        %577 = vmatprep.subr.mxu0 0.0
        %v578 = vand.u32 %v258, 4294901760
        %v579 = vsub.f32 %v258, %v578
        %v580 = vand.u32 %v579, 4294901760
        %581 = vmatpush1.msra.mxu0 %v580
        %582 = vmatprep.subr.mxu0 0.0
        %583 = vmatpush1.msra.mxu0 0.0
        %584 = vmatprep.subr.mxu0 0.0
        %585 = vmatpush1.msra.mxu0 0.0
        %586 = vmatprep.subr.mxu0 0.0
        %587 = vmatpush1.msra.mxu0 0.0
        %588 = vmatprep.subr.mxu0 0.0
        %589 = vmatpush1.msra.mxu0 0.0
        %590 = vmatprep.subr.mxu0 0.0
        %591 = vmatpush1.msra.mxu0 0.0
        %592 = vmatprep.subr.mxu0 0.0
        %593 = vmatpush1.msra.mxu0 0.0
        %594 = vmatprep.subr.mxu0 0.0
        %595 = vmatpush1.msra.mxu0 0.0
        %596 = vmatprep.subr.mxu0 0.0
        %597 = vmatpush1.msra.mxu0 0.0
        %598 = vmatprep.subr.mxu0 0.0
        %599 = vmatpush1.msra.mxu0 0.0
        %600 = vmatprep.subr.mxu0 0.0
        %601 = vmatpush1.msra.mxu0 0.0
        %602 = vmatprep.subr.mxu0 0.0
        %603 = vmatpush1.msra.mxu0 0.0
        %604 = vmatprep.subr.mxu0 0.0
        %605 = vmatpush1.msra.mxu0 0.0
        %606 = vmatprep.subr.mxu0 0.0
        %607 = vmatpush1.msra.mxu0 0.0
        %608 = vmatprep.subr.mxu0 0.0
        %609 = vmatpush1.msra.mxu0 0.0
        %610 = vmatprep.subr.mxu0 0.0
        %611 = vmatpush1.msra.mxu0 0.0
        %612 = vmatprep.subr.mxu0 0.0
        %613 = vmatpush1.msra.mxu0 0.0
        %614 = vmatprep.subr.mxu0 0.0
        %615 = vmatpush1.msra.mxu0 0.0
        %616 = vmatprep.subr.mxu0 0.0
        %617 = vmatpush1.msra.mxu0 0.0
        %618 = vmatprep.subr.mxu0 0.0
        %619 = vmatpush1.msra.mxu0 0.0
        %620 = vmatprep.subr.mxu0 0.0
        %621 = vmatpush1.msra.mxu0 0.0
        %622 = vmatprep.subr.mxu0 0.0
        %623 = vmatpush1.msra.mxu0 0.0
        %624 = vmatprep.subr.mxu0 0.0
        %625 = vmatpush1.msra.mxu0 0.0
        %626 = vmatprep.subr.mxu0 0.0
        %627 = vmatpush1.msra.mxu0 0.0
        %628 = vmatprep.subr.mxu0 0.0
        %629 = vmatpush1.msra.mxu0 0.0
        %630 = vmatprep.subr.mxu0 0.0
        %631 = vmatpush1.msra.mxu0 0.0
        %632 = vmatprep.subr.mxu0 0.0
        %633 = vmatpush1.msra.mxu0 0.0
        %634 = vmatprep.subr.mxu0 0.0
        %635 = vmatpush1.msra.mxu0 0.0
        %636 = vmatprep.subr.mxu0 0.0
        %637 = vmatpush1.msra.mxu0 0.0
        %638 = vmatprep.subr.mxu0 0.0
        %639 = vmatpush1.msra.mxu0 0.0
        %640 = vmatprep.subr.mxu0 0.0
        %641 = vmatpush1.msra.mxu0 0.0
        %642 = vmatprep.mubr.f32.mxu0 0.0
        %v643 = vand.u32 %v261, 4294901760
        %644 = vmatmul.mubr.f32.gmra.mrb[0].mxu0 %v643
        %v645 = vpop.f32.mrb[0].mxu0
        %v646 = vadd.f32 %v569, %v645
        %v647 = vpop.f32.mrb[0].mxu0
        %648 = vdwg.mxu0
        %649 = vmatprep.subr.mxu0 0.0
        %v650 = vand.u32 %v257, 4294901760
        %651 = vmatpush1.msra.mxu0 %v650
        %652 = vmatprep.subr.mxu0 0.0
        %v653 = vand.u32 %v258, 4294901760
        %654 = vmatpush1.msra.mxu0 %v653
        %655 = vmatprep.subr.mxu0 0.0
        %656 = vmatpush1.msra.mxu0 0.0
        %657 = vmatprep.subr.mxu0 0.0
        %658 = vmatpush1.msra.mxu0 0.0
        %659 = vmatprep.subr.mxu0 0.0
        %660 = vmatpush1.msra.mxu0 0.0
        %661 = vmatprep.subr.mxu0 0.0
        %662 = vmatpush1.msra.mxu0 0.0
        %663 = vmatprep.subr.mxu0 0.0
        %664 = vmatpush1.msra.mxu0 0.0
        %665 = vmatprep.subr.mxu0 0.0
        %666 = vmatpush1.msra.mxu0 0.0
        %667 = vmatprep.subr.mxu0 0.0
        %668 = vmatpush1.msra.mxu0 0.0
        %669 = vmatprep.subr.mxu0 0.0
        %670 = vmatpush1.msra.mxu0 0.0
        %671 = vmatprep.subr.mxu0 0.0
        %672 = vmatpush1.msra.mxu0 0.0
        %673 = vmatprep.subr.mxu0 0.0
        %674 = vmatpush1.msra.mxu0 0.0
        %675 = vmatprep.subr.mxu0 0.0
        %676 = vmatpush1.msra.mxu0 0.0
        %677 = vmatprep.subr.mxu0 0.0
        %678 = vmatpush1.msra.mxu0 0.0
        %679 = vmatprep.subr.mxu0 0.0
        %680 = vmatpush1.msra.mxu0 0.0
        %681 = vmatprep.subr.mxu0 0.0
        %682 = vmatpush1.msra.mxu0 0.0
        %683 = vmatprep.subr.mxu0 0.0
        %684 = vmatpush1.msra.mxu0 0.0
        %685 = vmatprep.subr.mxu0 0.0
        %686 = vmatpush1.msra.mxu0 0.0
        %687 = vmatprep.subr.mxu0 0.0
        %688 = vmatpush1.msra.mxu0 0.0
        %689 = vmatprep.subr.mxu0 0.0
        %690 = vmatpush1.msra.mxu0 0.0
        %691 = vmatprep.subr.mxu0 0.0
        %692 = vmatpush1.msra.mxu0 0.0
        %693 = vmatprep.subr.mxu0 0.0
        %694 = vmatpush1.msra.mxu0 0.0
        %695 = vmatprep.subr.mxu0 0.0
        %696 = vmatpush1.msra.mxu0 0.0
        %697 = vmatprep.subr.mxu0 0.0
        %698 = vmatpush1.msra.mxu0 0.0
        %699 = vmatprep.subr.mxu0 0.0
        %700 = vmatpush1.msra.mxu0 0.0
        %701 = vmatprep.subr.mxu0 0.0
        %702 = vmatpush1.msra.mxu0 0.0
        %703 = vmatprep.subr.mxu0 0.0
        %704 = vmatpush1.msra.mxu0 0.0
        %705 = vmatprep.subr.mxu0 0.0
        %706 = vmatpush1.msra.mxu0 0.0
        %707 = vmatprep.subr.mxu0 0.0
        %708 = vmatpush1.msra.mxu0 0.0
        %709 = vmatprep.subr.mxu0 0.0
        %710 = vmatpush1.msra.mxu0 0.0
        %711 = vmatprep.subr.mxu0 0.0
        %712 = vmatpush1.msra.mxu0 0.0
        %713 = vmatprep.subr.mxu0 0.0
        %714 = vmatpush1.msra.mxu0 0.0
        %715 = vmatprep.mubr.f32.mxu0 0.0
        %v716 = vand.u32 %v261, 4294901760
        %717 = vmatmul.mubr.f32.gmra.mrb[0].mxu0 %v716
        %v718 = vpop.f32.mrb[0].mxu0
        %v719 = vadd.f32 %v646, %v718
        %v720 = vpop.f32.mrb[0].mxu0
        %721 = vdwg.mxu0
        %722 = vmatprep.subr.mxu0 0.0
        %v723 = vand.u32 %v249, 4294901760
        %724 = vmatpush1.msra.mxu0 %v723
        %725 = vmatprep.subr.mxu0 0.0
        %v726 = vand.u32 %v250, 4294901760
        %727 = vmatpush1.msra.mxu0 %v726
        %728 = vmatprep.subr.mxu0 0.0
        %729 = vmatpush1.msra.mxu0 0.0
        %730 = vmatprep.subr.mxu0 0.0
        %731 = vmatpush1.msra.mxu0 0.0
        %732 = vmatprep.subr.mxu0 0.0
        %733 = vmatpush1.msra.mxu0 0.0
        %734 = vmatprep.subr.mxu0 0.0
        %735 = vmatpush1.msra.mxu0 0.0
        %736 = vmatprep.subr.mxu0 0.0
        %737 = vmatpush1.msra.mxu0 0.0
        %738 = vmatprep.subr.mxu0 0.0
        %739 = vmatpush1.msra.mxu0 0.0
        %740 = vmatprep.subr.mxu0 0.0
        %741 = vmatpush1.msra.mxu0 0.0
        %742 = vmatprep.subr.mxu0 0.0
        %743 = vmatpush1.msra.mxu0 0.0
        %744 = vmatprep.subr.mxu0 0.0
        %745 = vmatpush1.msra.mxu0 0.0
        %746 = vmatprep.subr.mxu0 0.0
        %747 = vmatpush1.msra.mxu0 0.0
        %748 = vmatprep.subr.mxu0 0.0
        %749 = vmatpush1.msra.mxu0 0.0
        %750 = vmatprep.subr.mxu0 0.0
        %751 = vmatpush1.msra.mxu0 0.0
        %752 = vmatprep.subr.mxu0 0.0
        %753 = vmatpush1.msra.mxu0 0.0
        %754 = vmatprep.subr.mxu0 0.0
        %755 = vmatpush1.msra.mxu0 0.0
        %756 = vmatprep.subr.mxu0 0.0
        %757 = vmatpush1.msra.mxu0 0.0
        %758 = vmatprep.subr.mxu0 0.0
        %759 = vmatpush1.msra.mxu0 0.0
        %760 = vmatprep.subr.mxu0 0.0
        %761 = vmatpush1.msra.mxu0 0.0
        %762 = vmatprep.subr.mxu0 0.0
        %763 = vmatpush1.msra.mxu0 0.0
        %764 = vmatprep.subr.mxu0 0.0
        %765 = vmatpush1.msra.mxu0 0.0
        %766 = vmatprep.subr.mxu0 0.0
        %767 = vmatpush1.msra.mxu0 0.0
        %768 = vmatprep.subr.mxu0 0.0
        %769 = vmatpush1.msra.mxu0 0.0
        %770 = vmatprep.subr.mxu0 0.0
        %771 = vmatpush1.msra.mxu0 0.0
        %772 = vmatprep.subr.mxu0 0.0
        %773 = vmatpush1.msra.mxu0 0.0
        %774 = vmatprep.subr.mxu0 0.0
        %775 = vmatpush1.msra.mxu0 0.0
        %776 = vmatprep.subr.mxu0 0.0
        %777 = vmatpush1.msra.mxu0 0.0
        %778 = vmatprep.subr.mxu0 0.0
        %779 = vmatpush1.msra.mxu0 0.0
        %780 = vmatprep.subr.mxu0 0.0
        %781 = vmatpush1.msra.mxu0 0.0
        %782 = vmatprep.subr.mxu0 0.0
        %783 = vmatpush1.msra.mxu0 0.0
        %784 = vmatprep.subr.mxu0 0.0
        %785 = vmatpush1.msra.mxu0 0.0
        %786 = vmatprep.subr.mxu0 0.0
        %787 = vmatpush1.msra.mxu0 0.0
        %788 = vmatprep.mubr.f32.mxu0 0.0
        %v789 = vand.u32 %v261, 4294901760
        %v790 = vsub.f32 %v261, %v789
        %v791 = vand.u32 %v790, 4294901760
        %v792 = vsub.f32 %v790, %v791
        %v793 = vand.u32 %v792, 4294901760
        %794 = vmatmul.mubr.f32.gmra.mrb[0].mxu0 %v793
        %v795 = vpop.f32.mrb[0].mxu0
        %v796 = vadd.f32 %v719, %v795
        %v797 = vpop.f32.mrb[0].mxu0
        %798 = vdwg.mxu0
        %799 = vmatprep.subr.mxu0 0.0
        %v800 = vand.u32 %v249, 4294901760
        %v801 = vsub.f32 %v249, %v800
        %v802 = vand.u32 %v801, 4294901760
        %v803 = vsub.f32 %v801, %v802
        %v804 = vand.u32 %v803, 4294901760
        %805 = vmatpush1.msra.mxu0 %v804
        %806 = vmatprep.subr.mxu0 0.0
        %v807 = vand.u32 %v250, 4294901760
        %v808 = vsub.f32 %v250, %v807
        %v809 = vand.u32 %v808, 4294901760
        %v810 = vsub.f32 %v808, %v809
        %v811 = vand.u32 %v810, 4294901760
        %812 = vmatpush1.msra.mxu0 %v811
        %813 = vmatprep.subr.mxu0 0.0
        %814 = vmatpush1.msra.mxu0 0.0
        %815 = vmatprep.subr.mxu0 0.0
        %816 = vmatpush1.msra.mxu0 0.0
        %817 = vmatprep.subr.mxu0 0.0
        %818 = vmatpush1.msra.mxu0 0.0
        %819 = vmatprep.subr.mxu0 0.0
        %820 = vmatpush1.msra.mxu0 0.0
        %821 = vmatprep.subr.mxu0 0.0
        %822 = vmatpush1.msra.mxu0 0.0
        %823 = vmatprep.subr.mxu0 0.0
        %824 = vmatpush1.msra.mxu0 0.0
        %825 = vmatprep.subr.mxu0 0.0
        %826 = vmatpush1.msra.mxu0 0.0
        %827 = vmatprep.subr.mxu0 0.0
        %828 = vmatpush1.msra.mxu0 0.0
        %829 = vmatprep.subr.mxu0 0.0
        %830 = vmatpush1.msra.mxu0 0.0
        %831 = vmatprep.subr.mxu0 0.0
        %832 = vmatpush1.msra.mxu0 0.0
        %833 = vmatprep.subr.mxu0 0.0
        %834 = vmatpush1.msra.mxu0 0.0
        %835 = vmatprep.subr.mxu0 0.0
        %836 = vmatpush1.msra.mxu0 0.0
        %837 = vmatprep.subr.mxu0 0.0
        %838 = vmatpush1.msra.mxu0 0.0
        %839 = vmatprep.subr.mxu0 0.0
        %840 = vmatpush1.msra.mxu0 0.0
        %841 = vmatprep.subr.mxu0 0.0
        %842 = vmatpush1.msra.mxu0 0.0
        %843 = vmatprep.subr.mxu0 0.0
        %844 = vmatpush1.msra.mxu0 0.0
        %845 = vmatprep.subr.mxu0 0.0
        %846 = vmatpush1.msra.mxu0 0.0
        %847 = vmatprep.subr.mxu0 0.0
        %848 = vmatpush1.msra.mxu0 0.0
        %849 = vmatprep.subr.mxu0 0.0
        %850 = vmatpush1.msra.mxu0 0.0
        %851 = vmatprep.subr.mxu0 0.0
        %852 = vmatpush1.msra.mxu0 0.0
        %853 = vmatprep.subr.mxu0 0.0
        %854 = vmatpush1.msra.mxu0 0.0
        %855 = vmatprep.subr.mxu0 0.0
        %856 = vmatpush1.msra.mxu0 0.0
        %857 = vmatprep.subr.mxu0 0.0
        %858 = vmatpush1.msra.mxu0 0.0
        %859 = vmatprep.subr.mxu0 0.0
        %860 = vmatpush1.msra.mxu0 0.0
        %861 = vmatprep.subr.mxu0 0.0
        %862 = vmatpush1.msra.mxu0 0.0
        %863 = vmatprep.subr.mxu0 0.0
        %864 = vmatpush1.msra.mxu0 0.0
        %865 = vmatprep.subr.mxu0 0.0
        %866 = vmatpush1.msra.mxu0 0.0
        %867 = vmatprep.subr.mxu0 0.0
        %868 = vmatpush1.msra.mxu0 0.0
        %869 = vmatprep.subr.mxu0 0.0
        %870 = vmatpush1.msra.mxu0 0.0
        %871 = vmatprep.subr.mxu0 0.0
        %872 = vmatpush1.msra.mxu0 0.0
        %873 = vmatprep.mubr.f32.mxu0 0.0
        %v874 = vand.u32 %v261, 4294901760
        %875 = vmatmul.mubr.f32.gmra.mrb[0].mxu0 %v874
        %v876 = vpop.f32.mrb[0].mxu0
        %v877 = vadd.f32 %v796, %v876
        %v878 = vpop.f32.mrb[0].mxu0
        %879 = vdwg.mxu0
        %880 = vmatprep.subr.mxu0 0.0
        %v881 = vand.u32 %v249, 4294901760
        %v882 = vsub.f32 %v249, %v881
        %883 = vmatpush1.msra.mxu0 %v882
        %884 = vmatprep.subr.mxu0 0.0
        %v885 = vand.u32 %v250, 4294901760
        %v886 = vsub.f32 %v250, %v885
        %887 = vmatpush1.msra.mxu0 %v886
        %888 = vmatprep.subr.mxu0 0.0
        %889 = vmatpush1.msra.mxu0 0.0
        %890 = vmatprep.subr.mxu0 0.0
        %891 = vmatpush1.msra.mxu0 0.0
        %892 = vmatprep.subr.mxu0 0.0
        %893 = vmatpush1.msra.mxu0 0.0
        %894 = vmatprep.subr.mxu0 0.0
        %895 = vmatpush1.msra.mxu0 0.0
        %896 = vmatprep.subr.mxu0 0.0
        %897 = vmatpush1.msra.mxu0 0.0
        %898 = vmatprep.subr.mxu0 0.0
        %899 = vmatpush1.msra.mxu0 0.0
        %900 = vmatprep.subr.mxu0 0.0
        %901 = vmatpush1.msra.mxu0 0.0
        %902 = vmatprep.subr.mxu0 0.0
        %903 = vmatpush1.msra.mxu0 0.0
        %904 = vmatprep.subr.mxu0 0.0
        %905 = vmatpush1.msra.mxu0 0.0
        %906 = vmatprep.subr.mxu0 0.0
        %907 = vmatpush1.msra.mxu0 0.0
        %908 = vmatprep.subr.mxu0 0.0
        %909 = vmatpush1.msra.mxu0 0.0
        %910 = vmatprep.subr.mxu0 0.0
        %911 = vmatpush1.msra.mxu0 0.0
        %912 = vmatprep.subr.mxu0 0.0
        %913 = vmatpush1.msra.mxu0 0.0
        %914 = vmatprep.subr.mxu0 0.0
        %915 = vmatpush1.msra.mxu0 0.0
        %916 = vmatprep.subr.mxu0 0.0
        %917 = vmatpush1.msra.mxu0 0.0
        %918 = vmatprep.subr.mxu0 0.0
        %919 = vmatpush1.msra.mxu0 0.0
        %920 = vmatprep.subr.mxu0 0.0
        %921 = vmatpush1.msra.mxu0 0.0
        %922 = vmatprep.subr.mxu0 0.0
        %923 = vmatpush1.msra.mxu0 0.0
        %924 = vmatprep.subr.mxu0 0.0
        %925 = vmatpush1.msra.mxu0 0.0
        %926 = vmatprep.subr.mxu0 0.0
        %927 = vmatpush1.msra.mxu0 0.0
        %928 = vmatprep.subr.mxu0 0.0
        %929 = vmatpush1.msra.mxu0 0.0
        %930 = vmatprep.subr.mxu0 0.0
        %931 = vmatpush1.msra.mxu0 0.0
        %932 = vmatprep.subr.mxu0 0.0
        %933 = vmatpush1.msra.mxu0 0.0
        %934 = vmatprep.subr.mxu0 0.0
        %935 = vmatpush1.msra.mxu0 0.0
        %936 = vmatprep.subr.mxu0 0.0
        %937 = vmatpush1.msra.mxu0 0.0
        %938 = vmatprep.subr.mxu0 0.0
        %939 = vmatpush1.msra.mxu0 0.0
        %940 = vmatprep.subr.mxu0 0.0
        %941 = vmatpush1.msra.mxu0 0.0
        %942 = vmatprep.subr.mxu0 0.0
        %943 = vmatpush1.msra.mxu0 0.0
        %944 = vmatprep.subr.mxu0 0.0
        %945 = vmatpush1.msra.mxu0 0.0
        %946 = vmatprep.subr.mxu0 0.0
        %947 = vmatpush1.msra.mxu0 0.0
        %948 = vmatprep.mubr.f32.mxu0 0.0
        %v949 = vand.u32 %v261, 4294901760
        %v950 = vsub.f32 %v261, %v949
        %951 = vmatmul.mubr.f32.gmra.mrb[0].mxu0 %v950
        %v952 = vpop.f32.mrb[0].mxu0
        %v953 = vadd.f32 %v877, %v952
        %v954 = vpop.f32.mrb[0].mxu0
        %955 = vdwg.mxu0
        %956 = vmatprep.subr.mxu0 0.0
        %v957 = vand.u32 %v249, 4294901760
        %958 = vmatpush1.msra.mxu0 %v957
        %959 = vmatprep.subr.mxu0 0.0
        %v960 = vand.u32 %v250, 4294901760
        %961 = vmatpush1.msra.mxu0 %v960
        %962 = vmatprep.subr.mxu0 0.0
        %963 = vmatpush1.msra.mxu0 0.0
        %964 = vmatprep.subr.mxu0 0.0
        %965 = vmatpush1.msra.mxu0 0.0
        %966 = vmatprep.subr.mxu0 0.0
        %967 = vmatpush1.msra.mxu0 0.0
        %968 = vmatprep.subr.mxu0 0.0
        %969 = vmatpush1.msra.mxu0 0.0
        %970 = vmatprep.subr.mxu0 0.0
        %971 = vmatpush1.msra.mxu0 0.0
        %972 = vmatprep.subr.mxu0 0.0
        %973 = vmatpush1.msra.mxu0 0.0
        %974 = vmatprep.subr.mxu0 0.0
        %975 = vmatpush1.msra.mxu0 0.0
        %976 = vmatprep.subr.mxu0 0.0
        %977 = vmatpush1.msra.mxu0 0.0
        %978 = vmatprep.subr.mxu0 0.0
        %979 = vmatpush1.msra.mxu0 0.0
        %980 = vmatprep.subr.mxu0 0.0
        %981 = vmatpush1.msra.mxu0 0.0
        %982 = vmatprep.subr.mxu0 0.0
        %983 = vmatpush1.msra.mxu0 0.0
        %984 = vmatprep.subr.mxu0 0.0
        %985 = vmatpush1.msra.mxu0 0.0
        %986 = vmatprep.subr.mxu0 0.0
        %987 = vmatpush1.msra.mxu0 0.0
        %988 = vmatprep.subr.mxu0 0.0
        %989 = vmatpush1.msra.mxu0 0.0
        %990 = vmatprep.subr.mxu0 0.0
        %991 = vmatpush1.msra.mxu0 0.0
        %992 = vmatprep.subr.mxu0 0.0
        %993 = vmatpush1.msra.mxu0 0.0
        %994 = vmatprep.subr.mxu0 0.0
        %995 = vmatpush1.msra.mxu0 0.0
        %996 = vmatprep.subr.mxu0 0.0
        %997 = vmatpush1.msra.mxu0 0.0
        %998 = vmatprep.subr.mxu0 0.0
        %999 = vmatpush1.msra.mxu0 0.0
        %1000 = vmatprep.subr.mxu0 0.0
        %1001 = vmatpush1.msra.mxu0 0.0
        %1002 = vmatprep.subr.mxu0 0.0
        %1003 = vmatpush1.msra.mxu0 0.0
        %1004 = vmatprep.subr.mxu0 0.0
        %1005 = vmatpush1.msra.mxu0 0.0
        %1006 = vmatprep.subr.mxu0 0.0
        %1007 = vmatpush1.msra.mxu0 0.0
        %1008 = vmatprep.subr.mxu0 0.0
        %1009 = vmatpush1.msra.mxu0 0.0
        %1010 = vmatprep.subr.mxu0 0.0
        %1011 = vmatpush1.msra.mxu0 0.0
        %1012 = vmatprep.subr.mxu0 0.0
        %1013 = vmatpush1.msra.mxu0 0.0
        %1014 = vmatprep.subr.mxu0 0.0
        %1015 = vmatpush1.msra.mxu0 0.0
        %1016 = vmatprep.subr.mxu0 0.0
        %1017 = vmatpush1.msra.mxu0 0.0
        %1018 = vmatprep.subr.mxu0 0.0
        %1019 = vmatpush1.msra.mxu0 0.0
        %1020 = vmatprep.subr.mxu0 0.0
        %1021 = vmatpush1.msra.mxu0 0.0
        %1022 = vmatprep.mubr.f32.mxu0 0.0
        %v1023 = vand.u32 %v261, 4294901760
        %v1024 = vsub.f32 %v261, %v1023
        %v1025 = vand.u32 %v1024, 4294901760
        %1026 = vmatmul.mubr.f32.gmra.mrb[0].mxu0 %v1025
        %v1027 = vpop.f32.mrb[0].mxu0
        %v1028 = vadd.f32 %v953, %v1027
        %v1029 = vpop.f32.mrb[0].mxu0
        %1030 = vdwg.mxu0
        %1031 = vmatprep.subr.mxu0 0.0
        %v1032 = vand.u32 %v249, 4294901760
        %v1033 = vsub.f32 %v249, %v1032
        %v1034 = vand.u32 %v1033, 4294901760
        %1035 = vmatpush1.msra.mxu0 %v1034
        %1036 = vmatprep.subr.mxu0 0.0
        %v1037 = vand.u32 %v250, 4294901760
        %v1038 = vsub.f32 %v250, %v1037
        %v1039 = vand.u32 %v1038, 4294901760
        %1040 = vmatpush1.msra.mxu0 %v1039
        %1041 = vmatprep.subr.mxu0 0.0
        %1042 = vmatpush1.msra.mxu0 0.0
        %1043 = vmatprep.subr.mxu0 0.0
        %1044 = vmatpush1.msra.mxu0 0.0
        %1045 = vmatprep.subr.mxu0 0.0
        %1046 = vmatpush1.msra.mxu0 0.0
        %1047 = vmatprep.subr.mxu0 0.0
        %1048 = vmatpush1.msra.mxu0 0.0
        %1049 = vmatprep.subr.mxu0 0.0
        %1050 = vmatpush1.msra.mxu0 0.0
        %1051 = vmatprep.subr.mxu0 0.0
        %1052 = vmatpush1.msra.mxu0 0.0
        %1053 = vmatprep.subr.mxu0 0.0
        %1054 = vmatpush1.msra.mxu0 0.0
        %1055 = vmatprep.subr.mxu0 0.0
        %1056 = vmatpush1.msra.mxu0 0.0
        %1057 = vmatprep.subr.mxu0 0.0
        %1058 = vmatpush1.msra.mxu0 0.0
        %1059 = vmatprep.subr.mxu0 0.0
        %1060 = vmatpush1.msra.mxu0 0.0
        %1061 = vmatprep.subr.mxu0 0.0
        %1062 = vmatpush1.msra.mxu0 0.0
        %1063 = vmatprep.subr.mxu0 0.0
        %1064 = vmatpush1.msra.mxu0 0.0
        %1065 = vmatprep.subr.mxu0 0.0
        %1066 = vmatpush1.msra.mxu0 0.0
        %1067 = vmatprep.subr.mxu0 0.0
        %1068 = vmatpush1.msra.mxu0 0.0
        %1069 = vmatprep.subr.mxu0 0.0
        %1070 = vmatpush1.msra.mxu0 0.0
        %1071 = vmatprep.subr.mxu0 0.0
        %1072 = vmatpush1.msra.mxu0 0.0
        %1073 = vmatprep.subr.mxu0 0.0
        %1074 = vmatpush1.msra.mxu0 0.0
        %1075 = vmatprep.subr.mxu0 0.0
        %1076 = vmatpush1.msra.mxu0 0.0
        %1077 = vmatprep.subr.mxu0 0.0
        %1078 = vmatpush1.msra.mxu0 0.0
        %1079 = vmatprep.subr.mxu0 0.0
        %1080 = vmatpush1.msra.mxu0 0.0
        %1081 = vmatprep.subr.mxu0 0.0
        %1082 = vmatpush1.msra.mxu0 0.0
        %1083 = vmatprep.subr.mxu0 0.0
        %1084 = vmatpush1.msra.mxu0 0.0
        %1085 = vmatprep.subr.mxu0 0.0
        %1086 = vmatpush1.msra.mxu0 0.0
        %1087 = vmatprep.subr.mxu0 0.0
        %1088 = vmatpush1.msra.mxu0 0.0
        %1089 = vmatprep.subr.mxu0 0.0
        %1090 = vmatpush1.msra.mxu0 0.0
        %1091 = vmatprep.subr.mxu0 0.0
        %1092 = vmatpush1.msra.mxu0 0.0
        %1093 = vmatprep.subr.mxu0 0.0
        %1094 = vmatpush1.msra.mxu0 0.0
        %1095 = vmatprep.subr.mxu0 0.0
        %1096 = vmatpush1.msra.mxu0 0.0
        %1097 = vmatprep.subr.mxu0 0.0
        %1098 = vmatpush1.msra.mxu0 0.0
        %1099 = vmatprep.subr.mxu0 0.0
        %1100 = vmatpush1.msra.mxu0 0.0
        %1101 = vmatprep.mubr.f32.mxu0 0.0
        %v1102 = vand.u32 %v261, 4294901760
        %1103 = vmatmul.mubr.f32.gmra.mrb[0].mxu0 %v1102
        %v1104 = vpop.f32.mrb[0].mxu0
        %v1105 = vadd.f32 %v1028, %v1104
        %v1106 = vpop.f32.mrb[0].mxu0
        %1107 = vdwg.mxu0
        %1108 = vmatprep.subr.mxu0 0.0
        %v1109 = vand.u32 %v249, 4294901760
        %1110 = vmatpush1.msra.mxu0 %v1109
        %1111 = vmatprep.subr.mxu0 0.0
        %v1112 = vand.u32 %v250, 4294901760
        %1113 = vmatpush1.msra.mxu0 %v1112
        %1114 = vmatprep.subr.mxu0 0.0
        %1115 = vmatpush1.msra.mxu0 0.0
        %1116 = vmatprep.subr.mxu0 0.0
        %1117 = vmatpush1.msra.mxu0 0.0
        %1118 = vmatprep.subr.mxu0 0.0
        %1119 = vmatpush1.msra.mxu0 0.0
        %1120 = vmatprep.subr.mxu0 0.0
        %1121 = vmatpush1.msra.mxu0 0.0
        %1122 = vmatprep.subr.mxu0 0.0
        %1123 = vmatpush1.msra.mxu0 0.0
        %1124 = vmatprep.subr.mxu0 0.0
        %1125 = vmatpush1.msra.mxu0 0.0
        %1126 = vmatprep.subr.mxu0 0.0
        %1127 = vmatpush1.msra.mxu0 0.0
        %1128 = vmatprep.subr.mxu0 0.0
        %1129 = vmatpush1.msra.mxu0 0.0
        %1130 = vmatprep.subr.mxu0 0.0
        %1131 = vmatpush1.msra.mxu0 0.0
        %1132 = vmatprep.subr.mxu0 0.0
        %1133 = vmatpush1.msra.mxu0 0.0
        %1134 = vmatprep.subr.mxu0 0.0
        %1135 = vmatpush1.msra.mxu0 0.0
        %1136 = vmatprep.subr.mxu0 0.0
        %1137 = vmatpush1.msra.mxu0 0.0
        %1138 = vmatprep.subr.mxu0 0.0
        %1139 = vmatpush1.msra.mxu0 0.0
        %1140 = vmatprep.subr.mxu0 0.0
        %1141 = vmatpush1.msra.mxu0 0.0
        %1142 = vmatprep.subr.mxu0 0.0
        %1143 = vmatpush1.msra.mxu0 0.0
        %1144 = vmatprep.subr.mxu0 0.0
        %1145 = vmatpush1.msra.mxu0 0.0
        %1146 = vmatprep.subr.mxu0 0.0
        %1147 = vmatpush1.msra.mxu0 0.0
        %1148 = vmatprep.subr.mxu0 0.0
        %1149 = vmatpush1.msra.mxu0 0.0
        %1150 = vmatprep.subr.mxu0 0.0
        %1151 = vmatpush1.msra.mxu0 0.0
        %1152 = vmatprep.subr.mxu0 0.0
        %1153 = vmatpush1.msra.mxu0 0.0
        %1154 = vmatprep.subr.mxu0 0.0
        %1155 = vmatpush1.msra.mxu0 0.0
        %1156 = vmatprep.subr.mxu0 0.0
        %1157 = vmatpush1.msra.mxu0 0.0
        %1158 = vmatprep.subr.mxu0 0.0
        %1159 = vmatpush1.msra.mxu0 0.0
        %1160 = vmatprep.subr.mxu0 0.0
        %1161 = vmatpush1.msra.mxu0 0.0
        %1162 = vmatprep.subr.mxu0 0.0
        %1163 = vmatpush1.msra.mxu0 0.0
        %1164 = vmatprep.subr.mxu0 0.0
        %1165 = vmatpush1.msra.mxu0 0.0
        %1166 = vmatprep.subr.mxu0 0.0
        %1167 = vmatpush1.msra.mxu0 0.0
        %1168 = vmatprep.subr.mxu0 0.0
        %1169 = vmatpush1.msra.mxu0 0.0
        %1170 = vmatprep.subr.mxu0 0.0
        %1171 = vmatpush1.msra.mxu0 0.0
        %1172 = vmatprep.subr.mxu0 0.0
        %1173 = vmatpush1.msra.mxu0 0.0
        %1174 = vmatprep.mubr.f32.mxu0 0.0
        %v1175 = vand.u32 %v261, 4294901760
        %1176 = vmatmul.mubr.f32.gmra.mrb[0].mxu0 %v1175
        %v1177 = vpop.f32.mrb[0].mxu0
        %v1178 = vadd.f32 %v1105, %v1177
        %v1179 = vpop.f32.mrb[0].mxu0
        %1180 = vdwg.mxu0
        %s1181 = scalar_lea.vmem %s187, 32 [#allocation2]
        %v1182 = vld [vmem:[%s1181] sm:$0xff]
        %v1183 = vld [vmem:[%s1181 + $0x8] sm:$0xff]
        %s1184 = scalar_lea.vmem %s196, 32 [#allocation5]
        %v1185 = vld [vmem:[%s1184] sm:$0xff]
        %v1186 = vld [vmem:[%s1184 + $0x8] sm:$0xff]
        %v1187 = vsub.f32 %v1182, %v1185
        %v1188 = vsub.f32 %v1183, %v1186
        %1189 = vmatprep.subr.mxu0 0.0
        %v1190 = vand.u32 %v1187, 4294901760
        %1191 = vmatpush1.msra.mxu0 %v1190
        %1192 = vmatprep.subr.mxu0 0.0
        %v1193 = vand.u32 %v1188, 4294901760
        %1194 = vmatpush1.msra.mxu0 %v1193
        %1195 = vmatprep.subr.mxu0 0.0
        %1196 = vmatpush1.msra.mxu0 0.0
        %1197 = vmatprep.subr.mxu0 0.0
        %1198 = vmatpush1.msra.mxu0 0.0
        %1199 = vmatprep.subr.mxu0 0.0
        %1200 = vmatpush1.msra.mxu0 0.0
        %1201 = vmatprep.subr.mxu0 0.0
        %1202 = vmatpush1.msra.mxu0 0.0
        %1203 = vmatprep.subr.mxu0 0.0
        %1204 = vmatpush1.msra.mxu0 0.0
        %1205 = vmatprep.subr.mxu0 0.0
        %1206 = vmatpush1.msra.mxu0 0.0
        %1207 = vmatprep.subr.mxu0 0.0
        %1208 = vmatpush1.msra.mxu0 0.0
        %1209 = vmatprep.subr.mxu0 0.0
        %1210 = vmatpush1.msra.mxu0 0.0
        %1211 = vmatprep.subr.mxu0 0.0
        %1212 = vmatpush1.msra.mxu0 0.0
        %1213 = vmatprep.subr.mxu0 0.0
        %1214 = vmatpush1.msra.mxu0 0.0
        %1215 = vmatprep.subr.mxu0 0.0
        %1216 = vmatpush1.msra.mxu0 0.0
        %1217 = vmatprep.subr.mxu0 0.0
        %1218 = vmatpush1.msra.mxu0 0.0
        %1219 = vmatprep.subr.mxu0 0.0
        %1220 = vmatpush1.msra.mxu0 0.0
        %1221 = vmatprep.subr.mxu0 0.0
        %1222 = vmatpush1.msra.mxu0 0.0
        %1223 = vmatprep.subr.mxu0 0.0
        %1224 = vmatpush1.msra.mxu0 0.0
        %1225 = vmatprep.subr.mxu0 0.0
        %1226 = vmatpush1.msra.mxu0 0.0
        %1227 = vmatprep.subr.mxu0 0.0
        %1228 = vmatpush1.msra.mxu0 0.0
        %1229 = vmatprep.subr.mxu0 0.0
        %1230 = vmatpush1.msra.mxu0 0.0
        %1231 = vmatprep.subr.mxu0 0.0
        %1232 = vmatpush1.msra.mxu0 0.0
        %1233 = vmatprep.subr.mxu0 0.0
        %1234 = vmatpush1.msra.mxu0 0.0
        %1235 = vmatprep.subr.mxu0 0.0
        %1236 = vmatpush1.msra.mxu0 0.0
        %1237 = vmatprep.subr.mxu0 0.0
        %1238 = vmatpush1.msra.mxu0 0.0
        %1239 = vmatprep.subr.mxu0 0.0
        %1240 = vmatpush1.msra.mxu0 0.0
        %1241 = vmatprep.subr.mxu0 0.0
        %1242 = vmatpush1.msra.mxu0 0.0
        %1243 = vmatprep.subr.mxu0 0.0
        %1244 = vmatpush1.msra.mxu0 0.0
        %1245 = vmatprep.subr.mxu0 0.0
        %1246 = vmatpush1.msra.mxu0 0.0
        %1247 = vmatprep.subr.mxu0 0.0
        %1248 = vmatpush1.msra.mxu0 0.0
        %1249 = vmatprep.subr.mxu0 0.0
        %1250 = vmatpush1.msra.mxu0 0.0
        %1251 = vmatprep.subr.mxu0 0.0
        %1252 = vmatpush1.msra.mxu0 0.0
        %1253 = vmatprep.subr.mxu0 0.0
        %1254 = vmatpush1.msra.mxu0 0.0
        %1255 = vmatprep.mubr.f32.mxu0 0.0
        %v1256 = vand.u32 %v261, 4294901760
        %v1257 = vsub.f32 %v261, %v1256
        %v1258 = vand.u32 %v1257, 4294901760
        %v1259 = vsub.f32 %v1257, %v1258
        %v1260 = vand.u32 %v1259, 4294901760
        %1261 = vmatmul.mubr.f32.gmra.mrb[0].mxu0 %v1260
        %v1262 = vpop.f32.mrb[0].mxu0
        %v1263 = vadd.f32 0.0, %v1262
        %v1264 = vpop.f32.mrb[0].mxu0
        %1265 = vdwg.mxu0
        %1266 = vmatprep.subr.mxu0 0.0
        %v1267 = vand.u32 %v1187, 4294901760
        %v1268 = vsub.f32 %v1187, %v1267
        %v1269 = vand.u32 %v1268, 4294901760
        %v1270 = vsub.f32 %v1268, %v1269
        %v1271 = vand.u32 %v1270, 4294901760
        %1272 = vmatpush1.msra.mxu0 %v1271
        %1273 = vmatprep.subr.mxu0 0.0
        %v1274 = vand.u32 %v1188, 4294901760
        %v1275 = vsub.f32 %v1188, %v1274
        %v1276 = vand.u32 %v1275, 4294901760
        %v1277 = vsub.f32 %v1275, %v1276
        %v1278 = vand.u32 %v1277, 4294901760
        %1279 = vmatpush1.msra.mxu0 %v1278
        %1280 = vmatprep.subr.mxu0 0.0
        %1281 = vmatpush1.msra.mxu0 0.0
        %1282 = vmatprep.subr.mxu0 0.0
        %1283 = vmatpush1.msra.mxu0 0.0
        %1284 = vmatprep.subr.mxu0 0.0
        %1285 = vmatpush1.msra.mxu0 0.0
        %1286 = vmatprep.subr.mxu0 0.0
        %1287 = vmatpush1.msra.mxu0 0.0
        %1288 = vmatprep.subr.mxu0 0.0
        %1289 = vmatpush1.msra.mxu0 0.0
        %1290 = vmatprep.subr.mxu0 0.0
        %1291 = vmatpush1.msra.mxu0 0.0
        %1292 = vmatprep.subr.mxu0 0.0
        %1293 = vmatpush1.msra.mxu0 0.0
        %1294 = vmatprep.subr.mxu0 0.0
        %1295 = vmatpush1.msra.mxu0 0.0
        %1296 = vmatprep.subr.mxu0 0.0
        %1297 = vmatpush1.msra.mxu0 0.0
        %1298 = vmatprep.subr.mxu0 0.0
        %1299 = vmatpush1.msra.mxu0 0.0
        %1300 = vmatprep.subr.mxu0 0.0
        %1301 = vmatpush1.msra.mxu0 0.0
        %1302 = vmatprep.subr.mxu0 0.0
        %1303 = vmatpush1.msra.mxu0 0.0
        %1304 = vmatprep.subr.mxu0 0.0
        %1305 = vmatpush1.msra.mxu0 0.0
        %1306 = vmatprep.subr.mxu0 0.0
        %1307 = vmatpush1.msra.mxu0 0.0
        %1308 = vmatprep.subr.mxu0 0.0
        %1309 = vmatpush1.msra.mxu0 0.0
        %1310 = vmatprep.subr.mxu0 0.0
        %1311 = vmatpush1.msra.mxu0 0.0
        %1312 = vmatprep.subr.mxu0 0.0
        %1313 = vmatpush1.msra.mxu0 0.0
        %1314 = vmatprep.subr.mxu0 0.0
        %1315 = vmatpush1.msra.mxu0 0.0
        %1316 = vmatprep.subr.mxu0 0.0
        %1317 = vmatpush1.msra.mxu0 0.0
        %1318 = vmatprep.subr.mxu0 0.0
        %1319 = vmatpush1.msra.mxu0 0.0
        %1320 = vmatprep.subr.mxu0 0.0
        %1321 = vmatpush1.msra.mxu0 0.0
        %1322 = vmatprep.subr.mxu0 0.0
        %1323 = vmatpush1.msra.mxu0 0.0
        %1324 = vmatprep.subr.mxu0 0.0
        %1325 = vmatpush1.msra.mxu0 0.0
        %1326 = vmatprep.subr.mxu0 0.0
        %1327 = vmatpush1.msra.mxu0 0.0
        %1328 = vmatprep.subr.mxu0 0.0
        %1329 = vmatpush1.msra.mxu0 0.0
        %1330 = vmatprep.subr.mxu0 0.0
        %1331 = vmatpush1.msra.mxu0 0.0
        %1332 = vmatprep.subr.mxu0 0.0
        %1333 = vmatpush1.msra.mxu0 0.0
        %1334 = vmatprep.subr.mxu0 0.0
        %1335 = vmatpush1.msra.mxu0 0.0
        %1336 = vmatprep.subr.mxu0 0.0
        %1337 = vmatpush1.msra.mxu0 0.0
        %1338 = vmatprep.subr.mxu0 0.0
        %1339 = vmatpush1.msra.mxu0 0.0
        %1340 = vmatprep.mubr.f32.mxu0 0.0
        %v1341 = vand.u32 %v261, 4294901760
        %1342 = vmatmul.mubr.f32.gmra.mrb[0].mxu0 %v1341
        %v1343 = vpop.f32.mrb[0].mxu0
        %v1344 = vadd.f32 %v1263, %v1343
        %v1345 = vpop.f32.mrb[0].mxu0
        %1346 = vdwg.mxu0
        %1347 = vmatprep.subr.mxu0 0.0
        %v1348 = vand.u32 %v1187, 4294901760
        %v1349 = vsub.f32 %v1187, %v1348
        %1350 = vmatpush1.msra.mxu0 %v1349
        %1351 = vmatprep.subr.mxu0 0.0
        %v1352 = vand.u32 %v1188, 4294901760
        %v1353 = vsub.f32 %v1188, %v1352
        %1354 = vmatpush1.msra.mxu0 %v1353
        %1355 = vmatprep.subr.mxu0 0.0
        %1356 = vmatpush1.msra.mxu0 0.0
        %1357 = vmatprep.subr.mxu0 0.0
        %1358 = vmatpush1.msra.mxu0 0.0
        %1359 = vmatprep.subr.mxu0 0.0
        %1360 = vmatpush1.msra.mxu0 0.0
        %1361 = vmatprep.subr.mxu0 0.0
        %1362 = vmatpush1.msra.mxu0 0.0
        %1363 = vmatprep.subr.mxu0 0.0
        %1364 = vmatpush1.msra.mxu0 0.0
        %1365 = vmatprep.subr.mxu0 0.0
        %1366 = vmatpush1.msra.mxu0 0.0
        %1367 = vmatprep.subr.mxu0 0.0
        %1368 = vmatpush1.msra.mxu0 0.0
        %1369 = vmatprep.subr.mxu0 0.0
        %1370 = vmatpush1.msra.mxu0 0.0
        %1371 = vmatprep.subr.mxu0 0.0
        %1372 = vmatpush1.msra.mxu0 0.0
        %1373 = vmatprep.subr.mxu0 0.0
        %1374 = vmatpush1.msra.mxu0 0.0
        %1375 = vmatprep.subr.mxu0 0.0
        %1376 = vmatpush1.msra.mxu0 0.0
        %1377 = vmatprep.subr.mxu0 0.0
        %1378 = vmatpush1.msra.mxu0 0.0
        %1379 = vmatprep.subr.mxu0 0.0
        %1380 = vmatpush1.msra.mxu0 0.0
        %1381 = vmatprep.subr.mxu0 0.0
        %1382 = vmatpush1.msra.mxu0 0.0
        %1383 = vmatprep.subr.mxu0 0.0
        %1384 = vmatpush1.msra.mxu0 0.0
        %1385 = vmatprep.subr.mxu0 0.0
        %1386 = vmatpush1.msra.mxu0 0.0
        %1387 = vmatprep.subr.mxu0 0.0
        %1388 = vmatpush1.msra.mxu0 0.0
        %1389 = vmatprep.subr.mxu0 0.0
        %1390 = vmatpush1.msra.mxu0 0.0
        %1391 = vmatprep.subr.mxu0 0.0
        %1392 = vmatpush1.msra.mxu0 0.0
        %1393 = vmatprep.subr.mxu0 0.0
        %1394 = vmatpush1.msra.mxu0 0.0
        %1395 = vmatprep.subr.mxu0 0.0
        %1396 = vmatpush1.msra.mxu0 0.0
        %1397 = vmatprep.subr.mxu0 0.0
        %1398 = vmatpush1.msra.mxu0 0.0
        %1399 = vmatprep.subr.mxu0 0.0
        %1400 = vmatpush1.msra.mxu0 0.0
        %1401 = vmatprep.subr.mxu0 0.0
        %1402 = vmatpush1.msra.mxu0 0.0
        %1403 = vmatprep.subr.mxu0 0.0
        %1404 = vmatpush1.msra.mxu0 0.0
        %1405 = vmatprep.subr.mxu0 0.0
        %1406 = vmatpush1.msra.mxu0 0.0
        %1407 = vmatprep.subr.mxu0 0.0
        %1408 = vmatpush1.msra.mxu0 0.0
        %1409 = vmatprep.subr.mxu0 0.0
        %1410 = vmatpush1.msra.mxu0 0.0
        %1411 = vmatprep.subr.mxu0 0.0
        %1412 = vmatpush1.msra.mxu0 0.0
        %1413 = vmatprep.subr.mxu0 0.0
        %1414 = vmatpush1.msra.mxu0 0.0
        %1415 = vmatprep.mubr.f32.mxu0 0.0
        %v1416 = vand.u32 %v261, 4294901760
        %v1417 = vsub.f32 %v261, %v1416
        %1418 = vmatmul.mubr.f32.gmra.mrb[0].mxu0 %v1417
        %v1419 = vpop.f32.mrb[0].mxu0
        %v1420 = vadd.f32 %v1344, %v1419
        %v1421 = vpop.f32.mrb[0].mxu0
        %1422 = vdwg.mxu0
        %1423 = vmatprep.subr.mxu0 0.0
        %v1424 = vand.u32 %v1187, 4294901760
        %1425 = vmatpush1.msra.mxu0 %v1424
        %1426 = vmatprep.subr.mxu0 0.0
        %v1427 = vand.u32 %v1188, 4294901760
        %1428 = vmatpush1.msra.mxu0 %v1427
        %1429 = vmatprep.subr.mxu0 0.0
        %1430 = vmatpush1.msra.mxu0 0.0
        %1431 = vmatprep.subr.mxu0 0.0
        %1432 = vmatpush1.msra.mxu0 0.0
        %1433 = vmatprep.subr.mxu0 0.0
        %1434 = vmatpush1.msra.mxu0 0.0
        %1435 = vmatprep.subr.mxu0 0.0
        %1436 = vmatpush1.msra.mxu0 0.0
        %1437 = vmatprep.subr.mxu0 0.0
        %1438 = vmatpush1.msra.mxu0 0.0
        %1439 = vmatprep.subr.mxu0 0.0
        %1440 = vmatpush1.msra.mxu0 0.0
        %1441 = vmatprep.subr.mxu0 0.0
        %1442 = vmatpush1.msra.mxu0 0.0
        %1443 = vmatprep.subr.mxu0 0.0
        %1444 = vmatpush1.msra.mxu0 0.0
        %1445 = vmatprep.subr.mxu0 0.0
        %1446 = vmatpush1.msra.mxu0 0.0
        %1447 = vmatprep.subr.mxu0 0.0
        %1448 = vmatpush1.msra.mxu0 0.0
        %1449 = vmatprep.subr.mxu0 0.0
        %1450 = vmatpush1.msra.mxu0 0.0
        %1451 = vmatprep.subr.mxu0 0.0
        %1452 = vmatpush1.msra.mxu0 0.0
        %1453 = vmatprep.subr.mxu0 0.0
        %1454 = vmatpush1.msra.mxu0 0.0
        %1455 = vmatprep.subr.mxu0 0.0
        %1456 = vmatpush1.msra.mxu0 0.0
        %1457 = vmatprep.subr.mxu0 0.0
        %1458 = vmatpush1.msra.mxu0 0.0
        %1459 = vmatprep.subr.mxu0 0.0
        %1460 = vmatpush1.msra.mxu0 0.0
        %1461 = vmatprep.subr.mxu0 0.0
        %1462 = vmatpush1.msra.mxu0 0.0
        %1463 = vmatprep.subr.mxu0 0.0
        %1464 = vmatpush1.msra.mxu0 0.0
        %1465 = vmatprep.subr.mxu0 0.0
        %1466 = vmatpush1.msra.mxu0 0.0
        %1467 = vmatprep.subr.mxu0 0.0
        %1468 = vmatpush1.msra.mxu0 0.0
        %1469 = vmatprep.subr.mxu0 0.0
        %1470 = vmatpush1.msra.mxu0 0.0
        %1471 = vmatprep.subr.mxu0 0.0
        %1472 = vmatpush1.msra.mxu0 0.0
        %1473 = vmatprep.subr.mxu0 0.0
        %1474 = vmatpush1.msra.mxu0 0.0
        %1475 = vmatprep.subr.mxu0 0.0
        %1476 = vmatpush1.msra.mxu0 0.0
        %1477 = vmatprep.subr.mxu0 0.0
        %1478 = vmatpush1.msra.mxu0 0.0
        %1479 = vmatprep.subr.mxu0 0.0
        %1480 = vmatpush1.msra.mxu0 0.0
        %1481 = vmatprep.subr.mxu0 0.0
        %1482 = vmatpush1.msra.mxu0 0.0
        %1483 = vmatprep.subr.mxu0 0.0
        %1484 = vmatpush1.msra.mxu0 0.0
        %1485 = vmatprep.subr.mxu0 0.0
        %1486 = vmatpush1.msra.mxu0 0.0
        %1487 = vmatprep.subr.mxu0 0.0
        %1488 = vmatpush1.msra.mxu0 0.0
        %1489 = vmatprep.mubr.f32.mxu0 0.0
        %v1490 = vand.u32 %v261, 4294901760
        %v1491 = vsub.f32 %v261, %v1490
        %v1492 = vand.u32 %v1491, 4294901760
        %1493 = vmatmul.mubr.f32.gmra.mrb[0].mxu0 %v1492
        %v1494 = vpop.f32.mrb[0].mxu0
        %v1495 = vadd.f32 %v1420, %v1494
        %v1496 = vpop.f32.mrb[0].mxu0
        %1497 = vdwg.mxu0
        %1498 = vmatprep.subr.mxu0 0.0
        %v1499 = vand.u32 %v1187, 4294901760
        %v1500 = vsub.f32 %v1187, %v1499
        %v1501 = vand.u32 %v1500, 4294901760
        %1502 = vmatpush1.msra.mxu0 %v1501
        %1503 = vmatprep.subr.mxu0 0.0
        %v1504 = vand.u32 %v1188, 4294901760
        %v1505 = vsub.f32 %v1188, %v1504
        %v1506 = vand.u32 %v1505, 4294901760
        %1507 = vmatpush1.msra.mxu0 %v1506
        %1508 = vmatprep.subr.mxu0 0.0
        %1509 = vmatpush1.msra.mxu0 0.0
        %1510 = vmatprep.subr.mxu0 0.0
        %1511 = vmatpush1.msra.mxu0 0.0
        %1512 = vmatprep.subr.mxu0 0.0
        %1513 = vmatpush1.msra.mxu0 0.0
        %1514 = vmatprep.subr.mxu0 0.0
        %1515 = vmatpush1.msra.mxu0 0.0
        %1516 = vmatprep.subr.mxu0 0.0
        %1517 = vmatpush1.msra.mxu0 0.0
        %1518 = vmatprep.subr.mxu0 0.0
        %1519 = vmatpush1.msra.mxu0 0.0
        %1520 = vmatprep.subr.mxu0 0.0
        %1521 = vmatpush1.msra.mxu0 0.0
        %1522 = vmatprep.subr.mxu0 0.0
        %1523 = vmatpush1.msra.mxu0 0.0
        %1524 = vmatprep.subr.mxu0 0.0
        %1525 = vmatpush1.msra.mxu0 0.0
        %1526 = vmatprep.subr.mxu0 0.0
        %1527 = vmatpush1.msra.mxu0 0.0
        %1528 = vmatprep.subr.mxu0 0.0
        %1529 = vmatpush1.msra.mxu0 0.0
        %1530 = vmatprep.subr.mxu0 0.0
        %1531 = vmatpush1.msra.mxu0 0.0
        %1532 = vmatprep.subr.mxu0 0.0
        %1533 = vmatpush1.msra.mxu0 0.0
        %1534 = vmatprep.subr.mxu0 0.0
        %1535 = vmatpush1.msra.mxu0 0.0
        %1536 = vmatprep.subr.mxu0 0.0
        %1537 = vmatpush1.msra.mxu0 0.0
        %1538 = vmatprep.subr.mxu0 0.0
        %1539 = vmatpush1.msra.mxu0 0.0
        %1540 = vmatprep.subr.mxu0 0.0
        %1541 = vmatpush1.msra.mxu0 0.0
        %1542 = vmatprep.subr.mxu0 0.0
        %1543 = vmatpush1.msra.mxu0 0.0
        %1544 = vmatprep.subr.mxu0 0.0
        %1545 = vmatpush1.msra.mxu0 0.0
        %1546 = vmatprep.subr.mxu0 0.0
        %1547 = vmatpush1.msra.mxu0 0.0
        %1548 = vmatprep.subr.mxu0 0.0
        %1549 = vmatpush1.msra.mxu0 0.0
        %1550 = vmatprep.subr.mxu0 0.0
        %1551 = vmatpush1.msra.mxu0 0.0
        %1552 = vmatprep.subr.mxu0 0.0
        %1553 = vmatpush1.msra.mxu0 0.0
        %1554 = vmatprep.subr.mxu0 0.0
        %1555 = vmatpush1.msra.mxu0 0.0
        %1556 = vmatprep.subr.mxu0 0.0
        %1557 = vmatpush1.msra.mxu0 0.0
        %1558 = vmatprep.subr.mxu0 0.0
        %1559 = vmatpush1.msra.mxu0 0.0
        %1560 = vmatprep.subr.mxu0 0.0
        %1561 = vmatpush1.msra.mxu0 0.0
        %1562 = vmatprep.subr.mxu0 0.0
        %1563 = vmatpush1.msra.mxu0 0.0
        %1564 = vmatprep.subr.mxu0 0.0
        %1565 = vmatpush1.msra.mxu0 0.0
        %1566 = vmatprep.subr.mxu0 0.0
        %1567 = vmatpush1.msra.mxu0 0.0
        %1568 = vmatprep.mubr.f32.mxu0 0.0
        %v1569 = vand.u32 %v261, 4294901760
        %1570 = vmatmul.mubr.f32.gmra.mrb[0].mxu0 %v1569
        %v1571 = vpop.f32.mrb[0].mxu0
        %v1572 = vadd.f32 %v1495, %v1571
        %v1573 = vpop.f32.mrb[0].mxu0
        %1574 = vdwg.mxu0
        %1575 = vmatprep.subr.mxu0 0.0
        %v1576 = vand.u32 %v1187, 4294901760
        %1577 = vmatpush1.msra.mxu0 %v1576
        %1578 = vmatprep.subr.mxu0 0.0
        %v1579 = vand.u32 %v1188, 4294901760
        %1580 = vmatpush1.msra.mxu0 %v1579
        %1581 = vmatprep.subr.mxu0 0.0
        %1582 = vmatpush1.msra.mxu0 0.0
        %1583 = vmatprep.subr.mxu0 0.0
        %1584 = vmatpush1.msra.mxu0 0.0
        %1585 = vmatprep.subr.mxu0 0.0
        %1586 = vmatpush1.msra.mxu0 0.0
        %1587 = vmatprep.subr.mxu0 0.0
        %1588 = vmatpush1.msra.mxu0 0.0
        %1589 = vmatprep.subr.mxu0 0.0
        %1590 = vmatpush1.msra.mxu0 0.0
        %1591 = vmatprep.subr.mxu0 0.0
        %1592 = vmatpush1.msra.mxu0 0.0
        %1593 = vmatprep.subr.mxu0 0.0
        %1594 = vmatpush1.msra.mxu0 0.0
        %1595 = vmatprep.subr.mxu0 0.0
        %1596 = vmatpush1.msra.mxu0 0.0
        %1597 = vmatprep.subr.mxu0 0.0
        %1598 = vmatpush1.msra.mxu0 0.0
        %1599 = vmatprep.subr.mxu0 0.0
        %1600 = vmatpush1.msra.mxu0 0.0
        %1601 = vmatprep.subr.mxu0 0.0
        %1602 = vmatpush1.msra.mxu0 0.0
        %1603 = vmatprep.subr.mxu0 0.0
        %1604 = vmatpush1.msra.mxu0 0.0
        %1605 = vmatprep.subr.mxu0 0.0
        %1606 = vmatpush1.msra.mxu0 0.0
        %1607 = vmatprep.subr.mxu0 0.0
        %1608 = vmatpush1.msra.mxu0 0.0
        %1609 = vmatprep.subr.mxu0 0.0
        %1610 = vmatpush1.msra.mxu0 0.0
        %1611 = vmatprep.subr.mxu0 0.0
        %1612 = vmatpush1.msra.mxu0 0.0
        %1613 = vmatprep.subr.mxu0 0.0
        %1614 = vmatpush1.msra.mxu0 0.0
        %1615 = vmatprep.subr.mxu0 0.0
        %1616 = vmatpush1.msra.mxu0 0.0
        %1617 = vmatprep.subr.mxu0 0.0
        %1618 = vmatpush1.msra.mxu0 0.0
        %1619 = vmatprep.subr.mxu0 0.0
        %1620 = vmatpush1.msra.mxu0 0.0
        %1621 = vmatprep.subr.mxu0 0.0
        %1622 = vmatpush1.msra.mxu0 0.0
        %1623 = vmatprep.subr.mxu0 0.0
        %1624 = vmatpush1.msra.mxu0 0.0
        %1625 = vmatprep.subr.mxu0 0.0
        %1626 = vmatpush1.msra.mxu0 0.0
        %1627 = vmatprep.subr.mxu0 0.0
        %1628 = vmatpush1.msra.mxu0 0.0
        %1629 = vmatprep.subr.mxu0 0.0
        %1630 = vmatpush1.msra.mxu0 0.0
        %1631 = vmatprep.subr.mxu0 0.0
        %1632 = vmatpush1.msra.mxu0 0.0
        %1633 = vmatprep.subr.mxu0 0.0
        %1634 = vmatpush1.msra.mxu0 0.0
        %1635 = vmatprep.subr.mxu0 0.0
        %1636 = vmatpush1.msra.mxu0 0.0
        %1637 = vmatprep.subr.mxu0 0.0
        %1638 = vmatpush1.msra.mxu0 0.0
        %1639 = vmatprep.subr.mxu0 0.0
        %1640 = vmatpush1.msra.mxu0 0.0
        %1641 = vmatprep.mubr.f32.mxu0 0.0
        %v1642 = vand.u32 %v261, 4294901760
        %1643 = vmatmul.mubr.f32.gmra.mrb[0].mxu0 %v1642
        %v1644 = vpop.f32.mrb[0].mxu0
        %v1645 = vadd.f32 %v1572, %v1644
        %v1646 = vpop.f32.mrb[0].mxu0
        %1647 = vdwg.mxu0
        %v1648 = vadd.f32 %v1178, %v1645
        %s1649 = scalar_lea.vmem %s187, 48 [#allocation2]
        %v1650 = vld [vmem:[%s1649] sm:$0xff]
        %v1651 = vld [vmem:[%s1649 + $0x8] sm:$0xff]
        %s1652 = scalar_lea.vmem %s196, 48 [#allocation5]
        %v1653 = vld [vmem:[%s1652] sm:$0xff]
        %v1654 = vld [vmem:[%s1652 + $0x8] sm:$0xff]
        %v1655 = vsub.f32 %v1650, %v1653
        %v1656 = vsub.f32 %v1651, %v1654
        %1657 = vmatprep.subr.mxu0 0.0
        %v1658 = vand.u32 %v1655, 4294901760
        %1659 = vmatpush1.msra.mxu0 %v1658
        %1660 = vmatprep.subr.mxu0 0.0
        %v1661 = vand.u32 %v1656, 4294901760
        %1662 = vmatpush1.msra.mxu0 %v1661
        %1663 = vmatprep.subr.mxu0 0.0
        %1664 = vmatpush1.msra.mxu0 0.0
        %1665 = vmatprep.subr.mxu0 0.0
        %1666 = vmatpush1.msra.mxu0 0.0
        %1667 = vmatprep.subr.mxu0 0.0
        %1668 = vmatpush1.msra.mxu0 0.0
        %1669 = vmatprep.subr.mxu0 0.0
        %1670 = vmatpush1.msra.mxu0 0.0
        %1671 = vmatprep.subr.mxu0 0.0
        %1672 = vmatpush1.msra.mxu0 0.0
        %1673 = vmatprep.subr.mxu0 0.0
        %1674 = vmatpush1.msra.mxu0 0.0
        %1675 = vmatprep.subr.mxu0 0.0
        %1676 = vmatpush1.msra.mxu0 0.0
        %1677 = vmatprep.subr.mxu0 0.0
        %1678 = vmatpush1.msra.mxu0 0.0
        %1679 = vmatprep.subr.mxu0 0.0
        %1680 = vmatpush1.msra.mxu0 0.0
        %1681 = vmatprep.subr.mxu0 0.0
        %1682 = vmatpush1.msra.mxu0 0.0
        %1683 = vmatprep.subr.mxu0 0.0
        %1684 = vmatpush1.msra.mxu0 0.0
        %1685 = vmatprep.subr.mxu0 0.0
        %1686 = vmatpush1.msra.mxu0 0.0
        %1687 = vmatprep.subr.mxu0 0.0
        %1688 = vmatpush1.msra.mxu0 0.0
        %1689 = vmatprep.subr.mxu0 0.0
        %1690 = vmatpush1.msra.mxu0 0.0
        %1691 = vmatprep.subr.mxu0 0.0
        %1692 = vmatpush1.msra.mxu0 0.0
        %1693 = vmatprep.subr.mxu0 0.0
        %1694 = vmatpush1.msra.mxu0 0.0
        %1695 = vmatprep.subr.mxu0 0.0
        %1696 = vmatpush1.msra.mxu0 0.0
        %1697 = vmatprep.subr.mxu0 0.0
        %1698 = vmatpush1.msra.mxu0 0.0
        %1699 = vmatprep.subr.mxu0 0.0
        %1700 = vmatpush1.msra.mxu0 0.0
        %1701 = vmatprep.subr.mxu0 0.0
        %1702 = vmatpush1.msra.mxu0 0.0
        %1703 = vmatprep.subr.mxu0 0.0
        %1704 = vmatpush1.msra.mxu0 0.0
        %1705 = vmatprep.subr.mxu0 0.0
        %1706 = vmatpush1.msra.mxu0 0.0
        %1707 = vmatprep.subr.mxu0 0.0
        %1708 = vmatpush1.msra.mxu0 0.0
        %1709 = vmatprep.subr.mxu0 0.0
        %1710 = vmatpush1.msra.mxu0 0.0
        %1711 = vmatprep.subr.mxu0 0.0
        %1712 = vmatpush1.msra.mxu0 0.0
        %1713 = vmatprep.subr.mxu0 0.0
        %1714 = vmatpush1.msra.mxu0 0.0
        %1715 = vmatprep.subr.mxu0 0.0
        %1716 = vmatpush1.msra.mxu0 0.0
        %1717 = vmatprep.subr.mxu0 0.0
        %1718 = vmatpush1.msra.mxu0 0.0
        %1719 = vmatprep.subr.mxu0 0.0
        %1720 = vmatpush1.msra.mxu0 0.0
        %1721 = vmatprep.subr.mxu0 0.0
        %1722 = vmatpush1.msra.mxu0 0.0
        %1723 = vmatprep.mubr.f32.mxu0 0.0
        %v1724 = vand.u32 %v261, 4294901760
        %v1725 = vsub.f32 %v261, %v1724
        %v1726 = vand.u32 %v1725, 4294901760
        %v1727 = vsub.f32 %v1725, %v1726
        %v1728 = vand.u32 %v1727, 4294901760
        %1729 = vmatmul.mubr.f32.gmra.mrb[0].mxu0 %v1728
        %v1730 = vpop.f32.mrb[0].mxu0
        %v1731 = vadd.f32 0.0, %v1730
        %v1732 = vpop.f32.mrb[0].mxu0
        %1733 = vdwg.mxu0
        %1734 = vmatprep.subr.mxu0 0.0
        %v1735 = vand.u32 %v1655, 4294901760
        %v1736 = vsub.f32 %v1655, %v1735
        %v1737 = vand.u32 %v1736, 4294901760
        %v1738 = vsub.f32 %v1736, %v1737
        %v1739 = vand.u32 %v1738, 4294901760
        %1740 = vmatpush1.msra.mxu0 %v1739
        %1741 = vmatprep.subr.mxu0 0.0
        %v1742 = vand.u32 %v1656, 4294901760
        %v1743 = vsub.f32 %v1656, %v1742
        %v1744 = vand.u32 %v1743, 4294901760
        %v1745 = vsub.f32 %v1743, %v1744
        %v1746 = vand.u32 %v1745, 4294901760
        %1747 = vmatpush1.msra.mxu0 %v1746
        %1748 = vmatprep.subr.mxu0 0.0
        %1749 = vmatpush1.msra.mxu0 0.0
        %1750 = vmatprep.subr.mxu0 0.0
        %1751 = vmatpush1.msra.mxu0 0.0
        %1752 = vmatprep.subr.mxu0 0.0
        %1753 = vmatpush1.msra.mxu0 0.0
        %1754 = vmatprep.subr.mxu0 0.0
        %1755 = vmatpush1.msra.mxu0 0.0
        %1756 = vmatprep.subr.mxu0 0.0
        %1757 = vmatpush1.msra.mxu0 0.0
        %1758 = vmatprep.subr.mxu0 0.0
        %1759 = vmatpush1.msra.mxu0 0.0
        %1760 = vmatprep.subr.mxu0 0.0
        %1761 = vmatpush1.msra.mxu0 0.0
        %1762 = vmatprep.subr.mxu0 0.0
        %1763 = vmatpush1.msra.mxu0 0.0
        %1764 = vmatprep.subr.mxu0 0.0
        %1765 = vmatpush1.msra.mxu0 0.0
        %1766 = vmatprep.subr.mxu0 0.0
        %1767 = vmatpush1.msra.mxu0 0.0
        %1768 = vmatprep.subr.mxu0 0.0
        %1769 = vmatpush1.msra.mxu0 0.0
        %1770 = vmatprep.subr.mxu0 0.0
        %1771 = vmatpush1.msra.mxu0 0.0
        %1772 = vmatprep.subr.mxu0 0.0
        %1773 = vmatpush1.msra.mxu0 0.0
        %1774 = vmatprep.subr.mxu0 0.0
        %1775 = vmatpush1.msra.mxu0 0.0
        %1776 = vmatprep.subr.mxu0 0.0
        %1777 = vmatpush1.msra.mxu0 0.0
        %1778 = vmatprep.subr.mxu0 0.0
        %1779 = vmatpush1.msra.mxu0 0.0
        %1780 = vmatprep.subr.mxu0 0.0
        %1781 = vmatpush1.msra.mxu0 0.0
        %1782 = vmatprep.subr.mxu0 0.0
        %1783 = vmatpush1.msra.mxu0 0.0
        %1784 = vmatprep.subr.mxu0 0.0
        %1785 = vmatpush1.msra.mxu0 0.0
        %1786 = vmatprep.subr.mxu0 0.0
        %1787 = vmatpush1.msra.mxu0 0.0
        %1788 = vmatprep.subr.mxu0 0.0
        %1789 = vmatpush1.msra.mxu0 0.0
        %1790 = vmatprep.subr.mxu0 0.0
        %1791 = vmatpush1.msra.mxu0 0.0
        %1792 = vmatprep.subr.mxu0 0.0
        %1793 = vmatpush1.msra.mxu0 0.0
        %1794 = vmatprep.subr.mxu0 0.0
        %1795 = vmatpush1.msra.mxu0 0.0
        %1796 = vmatprep.subr.mxu0 0.0
        %1797 = vmatpush1.msra.mxu0 0.0
        %1798 = vmatprep.subr.mxu0 0.0
        %1799 = vmatpush1.msra.mxu0 0.0
        %1800 = vmatprep.subr.mxu0 0.0
        %1801 = vmatpush1.msra.mxu0 0.0
        %1802 = vmatprep.subr.mxu0 0.0
        %1803 = vmatpush1.msra.mxu0 0.0
        %1804 = vmatprep.subr.mxu0 0.0
        %1805 = vmatpush1.msra.mxu0 0.0
        %1806 = vmatprep.subr.mxu0 0.0
        %1807 = vmatpush1.msra.mxu0 0.0
        %1808 = vmatprep.mubr.f32.mxu0 0.0
        %v1809 = vand.u32 %v261, 4294901760
        %1810 = vmatmul.mubr.f32.gmra.mrb[0].mxu0 %v1809
        %v1811 = vpop.f32.mrb[0].mxu0
        %v1812 = vadd.f32 %v1731, %v1811
        %v1813 = vpop.f32.mrb[0].mxu0
        %1814 = vdwg.mxu0
        %1815 = vmatprep.subr.mxu0 0.0
        %v1816 = vand.u32 %v1655, 4294901760
        %v1817 = vsub.f32 %v1655, %v1816
        %1818 = vmatpush1.msra.mxu0 %v1817
        %1819 = vmatprep.subr.mxu0 0.0
        %v1820 = vand.u32 %v1656, 4294901760
        %v1821 = vsub.f32 %v1656, %v1820
        %1822 = vmatpush1.msra.mxu0 %v1821
        %1823 = vmatprep.subr.mxu0 0.0
        %1824 = vmatpush1.msra.mxu0 0.0
        %1825 = vmatprep.subr.mxu0 0.0
        %1826 = vmatpush1.msra.mxu0 0.0
        %1827 = vmatprep.subr.mxu0 0.0
        %1828 = vmatpush1.msra.mxu0 0.0
        %1829 = vmatprep.subr.mxu0 0.0
        %1830 = vmatpush1.msra.mxu0 0.0
        %1831 = vmatprep.subr.mxu0 0.0
        %1832 = vmatpush1.msra.mxu0 0.0
        %1833 = vmatprep.subr.mxu0 0.0
        %1834 = vmatpush1.msra.mxu0 0.0
        %1835 = vmatprep.subr.mxu0 0.0
        %1836 = vmatpush1.msra.mxu0 0.0
        %1837 = vmatprep.subr.mxu0 0.0
        %1838 = vmatpush1.msra.mxu0 0.0
        %1839 = vmatprep.subr.mxu0 0.0
        %1840 = vmatpush1.msra.mxu0 0.0
        %1841 = vmatprep.subr.mxu0 0.0
        %1842 = vmatpush1.msra.mxu0 0.0
        %1843 = vmatprep.subr.mxu0 0.0
        %1844 = vmatpush1.msra.mxu0 0.0
        %1845 = vmatprep.subr.mxu0 0.0
        %1846 = vmatpush1.msra.mxu0 0.0
        %1847 = vmatprep.subr.mxu0 0.0
        %1848 = vmatpush1.msra.mxu0 0.0
        %1849 = vmatprep.subr.mxu0 0.0
        %1850 = vmatpush1.msra.mxu0 0.0
        %1851 = vmatprep.subr.mxu0 0.0
        %1852 = vmatpush1.msra.mxu0 0.0
        %1853 = vmatprep.subr.mxu0 0.0
        %1854 = vmatpush1.msra.mxu0 0.0
        %1855 = vmatprep.subr.mxu0 0.0
        %1856 = vmatpush1.msra.mxu0 0.0
        %1857 = vmatprep.subr.mxu0 0.0
        %1858 = vmatpush1.msra.mxu0 0.0
        %1859 = vmatprep.subr.mxu0 0.0
        %1860 = vmatpush1.msra.mxu0 0.0
        %1861 = vmatprep.subr.mxu0 0.0
        %1862 = vmatpush1.msra.mxu0 0.0
        %1863 = vmatprep.subr.mxu0 0.0
        %1864 = vmatpush1.msra.mxu0 0.0
        %1865 = vmatprep.subr.mxu0 0.0
        %1866 = vmatpush1.msra.mxu0 0.0
        %1867 = vmatprep.subr.mxu0 0.0
        %1868 = vmatpush1.msra.mxu0 0.0
        %1869 = vmatprep.subr.mxu0 0.0
        %1870 = vmatpush1.msra.mxu0 0.0
        %1871 = vmatprep.subr.mxu0 0.0
        %1872 = vmatpush1.msra.mxu0 0.0
        %1873 = vmatprep.subr.mxu0 0.0
        %1874 = vmatpush1.msra.mxu0 0.0
        %1875 = vmatprep.subr.mxu0 0.0
        %1876 = vmatpush1.msra.mxu0 0.0
        %1877 = vmatprep.subr.mxu0 0.0
        %1878 = vmatpush1.msra.mxu0 0.0
        %1879 = vmatprep.subr.mxu0 0.0
        %1880 = vmatpush1.msra.mxu0 0.0
        %1881 = vmatprep.subr.mxu0 0.0
        %1882 = vmatpush1.msra.mxu0 0.0
        %1883 = vmatprep.mubr.f32.mxu0 0.0
        %v1884 = vand.u32 %v261, 4294901760
        %v1885 = vsub.f32 %v261, %v1884
        %1886 = vmatmul.mubr.f32.gmra.mrb[0].mxu0 %v1885
        %v1887 = vpop.f32.mrb[0].mxu0
        %v1888 = vadd.f32 %v1812, %v1887
        %v1889 = vpop.f32.mrb[0].mxu0
        %1890 = vdwg.mxu0
        %1891 = vmatprep.subr.mxu0 0.0
        %v1892 = vand.u32 %v1655, 4294901760
        %1893 = vmatpush1.msra.mxu0 %v1892
        %1894 = vmatprep.subr.mxu0 0.0
        %v1895 = vand.u32 %v1656, 4294901760
        %1896 = vmatpush1.msra.mxu0 %v1895
        %1897 = vmatprep.subr.mxu0 0.0
        %1898 = vmatpush1.msra.mxu0 0.0
        %1899 = vmatprep.subr.mxu0 0.0
        %1900 = vmatpush1.msra.mxu0 0.0
        %1901 = vmatprep.subr.mxu0 0.0
        %1902 = vmatpush1.msra.mxu0 0.0
        %1903 = vmatprep.subr.mxu0 0.0
        %1904 = vmatpush1.msra.mxu0 0.0
        %1905 = vmatprep.subr.mxu0 0.0
        %1906 = vmatpush1.msra.mxu0 0.0
        %1907 = vmatprep.subr.mxu0 0.0
        %1908 = vmatpush1.msra.mxu0 0.0
        %1909 = vmatprep.subr.mxu0 0.0
        %1910 = vmatpush1.msra.mxu0 0.0
        %1911 = vmatprep.subr.mxu0 0.0
        %1912 = vmatpush1.msra.mxu0 0.0
        %1913 = vmatprep.subr.mxu0 0.0
        %1914 = vmatpush1.msra.mxu0 0.0
        %1915 = vmatprep.subr.mxu0 0.0
        %1916 = vmatpush1.msra.mxu0 0.0
        %1917 = vmatprep.subr.mxu0 0.0
        %1918 = vmatpush1.msra.mxu0 0.0
        %1919 = vmatprep.subr.mxu0 0.0
        %1920 = vmatpush1.msra.mxu0 0.0
        %1921 = vmatprep.subr.mxu0 0.0
        %1922 = vmatpush1.msra.mxu0 0.0
        %1923 = vmatprep.subr.mxu0 0.0
        %1924 = vmatpush1.msra.mxu0 0.0
        %1925 = vmatprep.subr.mxu0 0.0
        %1926 = vmatpush1.msra.mxu0 0.0
        %1927 = vmatprep.subr.mxu0 0.0
        %1928 = vmatpush1.msra.mxu0 0.0
        %1929 = vmatprep.subr.mxu0 0.0
        %1930 = vmatpush1.msra.mxu0 0.0
        %1931 = vmatprep.subr.mxu0 0.0
        %1932 = vmatpush1.msra.mxu0 0.0
        %1933 = vmatprep.subr.mxu0 0.0
        %1934 = vmatpush1.msra.mxu0 0.0
        %1935 = vmatprep.subr.mxu0 0.0
        %1936 = vmatpush1.msra.mxu0 0.0
        %1937 = vmatprep.subr.mxu0 0.0
        %1938 = vmatpush1.msra.mxu0 0.0
        %1939 = vmatprep.subr.mxu0 0.0
        %1940 = vmatpush1.msra.mxu0 0.0
        %1941 = vmatprep.subr.mxu0 0.0
        %1942 = vmatpush1.msra.mxu0 0.0
        %1943 = vmatprep.subr.mxu0 0.0
        %1944 = vmatpush1.msra.mxu0 0.0
        %1945 = vmatprep.subr.mxu0 0.0
        %1946 = vmatpush1.msra.mxu0 0.0
        %1947 = vmatprep.subr.mxu0 0.0
        %1948 = vmatpush1.msra.mxu0 0.0
        %1949 = vmatprep.subr.mxu0 0.0
        %1950 = vmatpush1.msra.mxu0 0.0
        %1951 = vmatprep.subr.mxu0 0.0
        %1952 = vmatpush1.msra.mxu0 0.0
        %1953 = vmatprep.subr.mxu0 0.0
        %1954 = vmatpush1.msra.mxu0 0.0
        %1955 = vmatprep.subr.mxu0 0.0
        %1956 = vmatpush1.msra.mxu0 0.0
        %1957 = vmatprep.mubr.f32.mxu0 0.0
        %v1958 = vand.u32 %v261, 4294901760
        %v1959 = vsub.f32 %v261, %v1958
        %v1960 = vand.u32 %v1959, 4294901760
        %1961 = vmatmul.mubr.f32.gmra.mrb[0].mxu0 %v1960
        %v1962 = vpop.f32.mrb[0].mxu0
        %v1963 = vadd.f32 %v1888, %v1962
        %v1964 = vpop.f32.mrb[0].mxu0
        %1965 = vdwg.mxu0
        %1966 = vmatprep.subr.mxu0 0.0
        %v1967 = vand.u32 %v1655, 4294901760
        %v1968 = vsub.f32 %v1655, %v1967
        %v1969 = vand.u32 %v1968, 4294901760
        %1970 = vmatpush1.msra.mxu0 %v1969
        %1971 = vmatprep.subr.mxu0 0.0
        %v1972 = vand.u32 %v1656, 4294901760
        %v1973 = vsub.f32 %v1656, %v1972
        %v1974 = vand.u32 %v1973, 4294901760
        %1975 = vmatpush1.msra.mxu0 %v1974
        %1976 = vmatprep.subr.mxu0 0.0
        %1977 = vmatpush1.msra.mxu0 0.0
        %1978 = vmatprep.subr.mxu0 0.0
        %1979 = vmatpush1.msra.mxu0 0.0
        %1980 = vmatprep.subr.mxu0 0.0
        %1981 = vmatpush1.msra.mxu0 0.0
        %1982 = vmatprep.subr.mxu0 0.0
        %1983 = vmatpush1.msra.mxu0 0.0
        %1984 = vmatprep.subr.mxu0 0.0
        %1985 = vmatpush1.msra.mxu0 0.0
        %1986 = vmatprep.subr.mxu0 0.0
        %1987 = vmatpush1.msra.mxu0 0.0
        %1988 = vmatprep.subr.mxu0 0.0
        %1989 = vmatpush1.msra.mxu0 0.0
        %1990 = vmatprep.subr.mxu0 0.0
        %1991 = vmatpush1.msra.mxu0 0.0
        %1992 = vmatprep.subr.mxu0 0.0
        %1993 = vmatpush1.msra.mxu0 0.0
        %1994 = vmatprep.subr.mxu0 0.0
        %1995 = vmatpush1.msra.mxu0 0.0
        %1996 = vmatprep.subr.mxu0 0.0
        %1997 = vmatpush1.msra.mxu0 0.0
        %1998 = vmatprep.subr.mxu0 0.0
        %1999 = vmatpush1.msra.mxu0 0.0
        %2000 = vmatprep.subr.mxu0 0.0
        %2001 = vmatpush1.msra.mxu0 0.0
        %2002 = vmatprep.subr.mxu0 0.0
        %2003 = vmatpush1.msra.mxu0 0.0
        %2004 = vmatprep.subr.mxu0 0.0
        %2005 = vmatpush1.msra.mxu0 0.0
        %2006 = vmatprep.subr.mxu0 0.0
        %2007 = vmatpush1.msra.mxu0 0.0
        %2008 = vmatprep.subr.mxu0 0.0
        %2009 = vmatpush1.msra.mxu0 0.0
        %2010 = vmatprep.subr.mxu0 0.0
        %2011 = vmatpush1.msra.mxu0 0.0
        %2012 = vmatprep.subr.mxu0 0.0
        %2013 = vmatpush1.msra.mxu0 0.0
        %2014 = vmatprep.subr.mxu0 0.0
        %2015 = vmatpush1.msra.mxu0 0.0
        %2016 = vmatprep.subr.mxu0 0.0
        %2017 = vmatpush1.msra.mxu0 0.0
        %2018 = vmatprep.subr.mxu0 0.0
        %2019 = vmatpush1.msra.mxu0 0.0
        %2020 = vmatprep.subr.mxu0 0.0
        %2021 = vmatpush1.msra.mxu0 0.0
        %2022 = vmatprep.subr.mxu0 0.0
        %2023 = vmatpush1.msra.mxu0 0.0
        %2024 = vmatprep.subr.mxu0 0.0
        %2025 = vmatpush1.msra.mxu0 0.0
        %2026 = vmatprep.subr.mxu0 0.0
        %2027 = vmatpush1.msra.mxu0 0.0
        %2028 = vmatprep.subr.mxu0 0.0
        %2029 = vmatpush1.msra.mxu0 0.0
        %2030 = vmatprep.subr.mxu0 0.0
        %2031 = vmatpush1.msra.mxu0 0.0
        %2032 = vmatprep.subr.mxu0 0.0
        %2033 = vmatpush1.msra.mxu0 0.0
        %2034 = vmatprep.subr.mxu0 0.0
        %2035 = vmatpush1.msra.mxu0 0.0
        %2036 = vmatprep.mubr.f32.mxu0 0.0
        %v2037 = vand.u32 %v261, 4294901760
        %2038 = vmatmul.mubr.f32.gmra.mrb[0].mxu0 %v2037
        %v2039 = vpop.f32.mrb[0].mxu0
        %v2040 = vadd.f32 %v1963, %v2039
        %v2041 = vpop.f32.mrb[0].mxu0
        %2042 = vdwg.mxu0
        %2043 = vmatprep.subr.mxu0 0.0
        %v2044 = vand.u32 %v1655, 4294901760
        %2045 = vmatpush1.msra.mxu0 %v2044
        %2046 = vmatprep.subr.mxu0 0.0
        %v2047 = vand.u32 %v1656, 4294901760
        %2048 = vmatpush1.msra.mxu0 %v2047
        %2049 = vmatprep.subr.mxu0 0.0
        %2050 = vmatpush1.msra.mxu0 0.0
        %2051 = vmatprep.subr.mxu0 0.0
        %2052 = vmatpush1.msra.mxu0 0.0
        %2053 = vmatprep.subr.mxu0 0.0
        %2054 = vmatpush1.msra.mxu0 0.0
        %2055 = vmatprep.subr.mxu0 0.0
        %2056 = vmatpush1.msra.mxu0 0.0
        %2057 = vmatprep.subr.mxu0 0.0
        %2058 = vmatpush1.msra.mxu0 0.0
        %2059 = vmatprep.subr.mxu0 0.0
        %2060 = vmatpush1.msra.mxu0 0.0
        %2061 = vmatprep.subr.mxu0 0.0
        %2062 = vmatpush1.msra.mxu0 0.0
        %2063 = vmatprep.subr.mxu0 0.0
        %2064 = vmatpush1.msra.mxu0 0.0
        %2065 = vmatprep.subr.mxu0 0.0
        %2066 = vmatpush1.msra.mxu0 0.0
        %2067 = vmatprep.subr.mxu0 0.0
        %2068 = vmatpush1.msra.mxu0 0.0
        %2069 = vmatprep.subr.mxu0 0.0
        %2070 = vmatpush1.msra.mxu0 0.0
        %2071 = vmatprep.subr.mxu0 0.0
        %2072 = vmatpush1.msra.mxu0 0.0
        %2073 = vmatprep.subr.mxu0 0.0
        %2074 = vmatpush1.msra.mxu0 0.0
        %2075 = vmatprep.subr.mxu0 0.0
        %2076 = vmatpush1.msra.mxu0 0.0
        %2077 = vmatprep.subr.mxu0 0.0
        %2078 = vmatpush1.msra.mxu0 0.0
        %2079 = vmatprep.subr.mxu0 0.0
        %2080 = vmatpush1.msra.mxu0 0.0
        %2081 = vmatprep.subr.mxu0 0.0
        %2082 = vmatpush1.msra.mxu0 0.0
        %2083 = vmatprep.subr.mxu0 0.0
        %2084 = vmatpush1.msra.mxu0 0.0
        %2085 = vmatprep.subr.mxu0 0.0
        %2086 = vmatpush1.msra.mxu0 0.0
        %2087 = vmatprep.subr.mxu0 0.0
        %2088 = vmatpush1.msra.mxu0 0.0
        %2089 = vmatprep.subr.mxu0 0.0
        %2090 = vmatpush1.msra.mxu0 0.0
        %2091 = vmatprep.subr.mxu0 0.0
        %2092 = vmatpush1.msra.mxu0 0.0
        %2093 = vmatprep.subr.mxu0 0.0
        %2094 = vmatpush1.msra.mxu0 0.0
        %2095 = vmatprep.subr.mxu0 0.0
        %2096 = vmatpush1.msra.mxu0 0.0
        %2097 = vmatprep.subr.mxu0 0.0
        %2098 = vmatpush1.msra.mxu0 0.0
        %2099 = vmatprep.subr.mxu0 0.0
        %2100 = vmatpush1.msra.mxu0 0.0
        %2101 = vmatprep.subr.mxu0 0.0
        %2102 = vmatpush1.msra.mxu0 0.0
        %2103 = vmatprep.subr.mxu0 0.0
        %2104 = vmatpush1.msra.mxu0 0.0
        %2105 = vmatprep.subr.mxu0 0.0
        %2106 = vmatpush1.msra.mxu0 0.0
        %2107 = vmatprep.subr.mxu0 0.0
        %2108 = vmatpush1.msra.mxu0 0.0
        %2109 = vmatprep.mubr.f32.mxu0 0.0
        %v2110 = vand.u32 %v261, 4294901760
        %2111 = vmatmul.mubr.f32.gmra.mrb[0].mxu0 %v2110
        %v2112 = vpop.f32.mrb[0].mxu0
        %v2113 = vadd.f32 %v2040, %v2112
        %v2114 = vpop.f32.mrb[0].mxu0
        %2115 = vdwg.mxu0
        %v2116 = vadd.f32 %v1648, %v2113
        %v2118 = vsel %vm259, %v2116, 0
        %2120 = vmatprep.subr.mxu0 0.0
        %2121 = vmatpush1.msra.mxu0 %v243
        %2122 = vmatprep.subr.mxu0 0.0
        %2123 = vmatpush1.msra.mxu0 %v244
        %2124 = vmatprep.subr.mxu0 0.0
        %2125 = vmatpush1.msra.mxu0 0.0
        %2126 = vmatprep.subr.mxu0 0.0
        %2127 = vmatpush1.msra.mxu0 0.0
        %2128 = vmatprep.subr.mxu0 0.0
        %2129 = vmatpush1.msra.mxu0 0.0
        %2130 = vmatprep.subr.mxu0 0.0
        %2131 = vmatpush1.msra.mxu0 0.0
        %2132 = vmatprep.subr.mxu0 0.0
        %2133 = vmatpush1.msra.mxu0 0.0
        %2134 = vmatprep.subr.mxu0 0.0
        %2135 = vmatpush1.msra.mxu0 0.0
        %2136 = vmatprep.subr.mxu0 0.0
        %2137 = vmatpush1.msra.mxu0 0.0
        %2138 = vmatprep.subr.mxu0 0.0
        %2139 = vmatpush1.msra.mxu0 0.0
        %2140 = vmatprep.subr.mxu0 0.0
        %2141 = vmatpush1.msra.mxu0 0.0
        %2142 = vmatprep.subr.mxu0 0.0
        %2143 = vmatpush1.msra.mxu0 0.0
        %2144 = vmatprep.subr.mxu0 0.0
        %2145 = vmatpush1.msra.mxu0 0.0
        %2146 = vmatprep.subr.mxu0 0.0
        %2147 = vmatpush1.msra.mxu0 0.0
        %2148 = vmatprep.subr.mxu0 0.0
        %2149 = vmatpush1.msra.mxu0 0.0
        %2150 = vmatprep.subr.mxu0 0.0
        %2151 = vmatpush1.msra.mxu0 0.0
        %2152 = vmatprep.subr.mxu0 0.0
        %2153 = vmatpush1.msra.mxu0 0.0
        %2154 = vmatprep.subr.mxu0 0.0
        %2155 = vmatpush1.msra.mxu0 0.0
        %2156 = vmatprep.subr.mxu0 0.0
        %2157 = vmatpush1.msra.mxu0 0.0
        %2158 = vmatprep.subr.mxu0 0.0
        %2159 = vmatpush1.msra.mxu0 0.0
        %2160 = vmatprep.subr.mxu0 0.0
        %2161 = vmatpush1.msra.mxu0 0.0
        %2162 = vmatprep.subr.mxu0 0.0
        %2163 = vmatpush1.msra.mxu0 0.0
        %2164 = vmatprep.subr.mxu0 0.0
        %2165 = vmatpush1.msra.mxu0 0.0
        %2166 = vmatprep.subr.mxu0 0.0
        %2167 = vmatpush1.msra.mxu0 0.0
        %2168 = vmatprep.subr.mxu0 0.0
        %2169 = vmatpush1.msra.mxu0 0.0
        %2170 = vmatprep.subr.mxu0 0.0
        %2171 = vmatpush1.msra.mxu0 0.0
        %2172 = vmatprep.subr.mxu0 0.0
        %2173 = vmatpush1.msra.mxu0 0.0
        %2174 = vmatprep.subr.mxu0 0.0
        %2175 = vmatpush1.msra.mxu0 0.0
        %2176 = vmatprep.subr.mxu0 0.0
        %2177 = vmatpush1.msra.mxu0 0.0
        %2178 = vmatprep.subr.mxu0 0.0
        %2179 = vmatpush1.msra.mxu0 0.0
        %2180 = vmatprep.subr.mxu0 0.0
        %2181 = vmatpush1.msra.mxu0 0.0
        %2182 = vmatprep.subr.mxu0 0.0
        %2183 = vmatpush1.msra.mxu0 0.0
        %2184 = vmatprep.mubr.f32.mxu0 0.0
        %v2185 = vand.u32 %v2118, 4294901760
        %v2186 = vsub.f32 %v2118, %v2185
        %v2187 = vand.u32 %v2186, 4294901760
        %v2188 = vsub.f32 %v2186, %v2187
        %v2189 = vand.u32 %v2188, 4294901760
        %2190 = vmatmul.mubr.f32.gmra.mrb[0].mxu0 %v2189
        %v2191 = vpop.f32.mrb[0].mxu0
        %v2192 = vadd.f32 0.0, %v2191
        %v2193 = vpop.f32.mrb[0].mxu0
        %2194 = vdwg.mxu0
        %2195 = vmatprep.subr.mxu0 0.0
        %v2196 = vsub.f32 %v243, %v243
        %v2197 = vand.u32 %v2196, 4294901760
        %v2198 = vsub.f32 %v2196, %v2197
        %v2199 = vand.u32 %v2198, 4294901760
        %2200 = vmatpush1.msra.mxu0 %v2199
        %2201 = vmatprep.subr.mxu0 0.0
        %v2202 = vsub.f32 %v244, %v244
        %v2203 = vand.u32 %v2202, 4294901760
        %v2204 = vsub.f32 %v2202, %v2203
        %v2205 = vand.u32 %v2204, 4294901760
        %2206 = vmatpush1.msra.mxu0 %v2205
        %2207 = vmatprep.subr.mxu0 0.0
        %2208 = vmatpush1.msra.mxu0 0.0
        %2209 = vmatprep.subr.mxu0 0.0
        %2210 = vmatpush1.msra.mxu0 0.0
        %2211 = vmatprep.subr.mxu0 0.0
        %2212 = vmatpush1.msra.mxu0 0.0
        %2213 = vmatprep.subr.mxu0 0.0
        %2214 = vmatpush1.msra.mxu0 0.0
        %2215 = vmatprep.subr.mxu0 0.0
        %2216 = vmatpush1.msra.mxu0 0.0
        %2217 = vmatprep.subr.mxu0 0.0
        %2218 = vmatpush1.msra.mxu0 0.0
        %2219 = vmatprep.subr.mxu0 0.0
        %2220 = vmatpush1.msra.mxu0 0.0
        %2221 = vmatprep.subr.mxu0 0.0
        %2222 = vmatpush1.msra.mxu0 0.0
        %2223 = vmatprep.subr.mxu0 0.0
        %2224 = vmatpush1.msra.mxu0 0.0
        %2225 = vmatprep.subr.mxu0 0.0
        %2226 = vmatpush1.msra.mxu0 0.0
        %2227 = vmatprep.subr.mxu0 0.0
        %2228 = vmatpush1.msra.mxu0 0.0
        %2229 = vmatprep.subr.mxu0 0.0
        %2230 = vmatpush1.msra.mxu0 0.0
        %2231 = vmatprep.subr.mxu0 0.0
        %2232 = vmatpush1.msra.mxu0 0.0
        %2233 = vmatprep.subr.mxu0 0.0
        %2234 = vmatpush1.msra.mxu0 0.0
        %2235 = vmatprep.subr.mxu0 0.0
        %2236 = vmatpush1.msra.mxu0 0.0
        %2237 = vmatprep.subr.mxu0 0.0
        %2238 = vmatpush1.msra.mxu0 0.0
        %2239 = vmatprep.subr.mxu0 0.0
        %2240 = vmatpush1.msra.mxu0 0.0
        %2241 = vmatprep.subr.mxu0 0.0
        %2242 = vmatpush1.msra.mxu0 0.0
        %2243 = vmatprep.subr.mxu0 0.0
        %2244 = vmatpush1.msra.mxu0 0.0
        %2245 = vmatprep.subr.mxu0 0.0
        %2246 = vmatpush1.msra.mxu0 0.0
        %2247 = vmatprep.subr.mxu0 0.0
        %2248 = vmatpush1.msra.mxu0 0.0
        %2249 = vmatprep.subr.mxu0 0.0
        %2250 = vmatpush1.msra.mxu0 0.0
        %2251 = vmatprep.subr.mxu0 0.0
        %2252 = vmatpush1.msra.mxu0 0.0
        %2253 = vmatprep.subr.mxu0 0.0
        %2254 = vmatpush1.msra.mxu0 0.0
        %2255 = vmatprep.subr.mxu0 0.0
        %2256 = vmatpush1.msra.mxu0 0.0
        %2257 = vmatprep.subr.mxu0 0.0
        %2258 = vmatpush1.msra.mxu0 0.0
        %2259 = vmatprep.subr.mxu0 0.0
        %2260 = vmatpush1.msra.mxu0 0.0
        %2261 = vmatprep.subr.mxu0 0.0
        %2262 = vmatpush1.msra.mxu0 0.0
        %2263 = vmatprep.subr.mxu0 0.0
        %2264 = vmatpush1.msra.mxu0 0.0
        %2265 = vmatprep.subr.mxu0 0.0
        %2266 = vmatpush1.msra.mxu0 0.0
        %2267 = vmatprep.mubr.f32.mxu0 0.0
        %v2268 = vand.u32 %v2118, 4294901760
        %2269 = vmatmul.mubr.f32.gmra.mrb[0].mxu0 %v2268
        %v2270 = vpop.f32.mrb[0].mxu0
        %v2271 = vadd.f32 %v2192, %v2270
        %v2272 = vpop.f32.mrb[0].mxu0
        %2273 = vdwg.mxu0
        %2274 = vmatprep.subr.mxu0 0.0
        %v2275 = vsub.f32 %v243, %v243
        %2276 = vmatpush1.msra.mxu0 %v2275
        %2277 = vmatprep.subr.mxu0 0.0
        %v2278 = vsub.f32 %v244, %v244
        %2279 = vmatpush1.msra.mxu0 %v2278
        %2280 = vmatprep.subr.mxu0 0.0
        %2281 = vmatpush1.msra.mxu0 0.0
        %2282 = vmatprep.subr.mxu0 0.0
        %2283 = vmatpush1.msra.mxu0 0.0
        %2284 = vmatprep.subr.mxu0 0.0
        %2285 = vmatpush1.msra.mxu0 0.0
        %2286 = vmatprep.subr.mxu0 0.0
        %2287 = vmatpush1.msra.mxu0 0.0
        %2288 = vmatprep.subr.mxu0 0.0
        %2289 = vmatpush1.msra.mxu0 0.0
        %2290 = vmatprep.subr.mxu0 0.0
        %2291 = vmatpush1.msra.mxu0 0.0
        %2292 = vmatprep.subr.mxu0 0.0
        %2293 = vmatpush1.msra.mxu0 0.0
        %2294 = vmatprep.subr.mxu0 0.0
        %2295 = vmatpush1.msra.mxu0 0.0
        %2296 = vmatprep.subr.mxu0 0.0
        %2297 = vmatpush1.msra.mxu0 0.0
        %2298 = vmatprep.subr.mxu0 0.0
        %2299 = vmatpush1.msra.mxu0 0.0
        %2300 = vmatprep.subr.mxu0 0.0
        %2301 = vmatpush1.msra.mxu0 0.0
        %2302 = vmatprep.subr.mxu0 0.0
        %2303 = vmatpush1.msra.mxu0 0.0
        %2304 = vmatprep.subr.mxu0 0.0
        %2305 = vmatpush1.msra.mxu0 0.0
        %2306 = vmatprep.subr.mxu0 0.0
        %2307 = vmatpush1.msra.mxu0 0.0
        %2308 = vmatprep.subr.mxu0 0.0
        %2309 = vmatpush1.msra.mxu0 0.0
        %2310 = vmatprep.subr.mxu0 0.0
        %2311 = vmatpush1.msra.mxu0 0.0
        %2312 = vmatprep.subr.mxu0 0.0
        %2313 = vmatpush1.msra.mxu0 0.0
        %2314 = vmatprep.subr.mxu0 0.0
        %2315 = vmatpush1.msra.mxu0 0.0
        %2316 = vmatprep.subr.mxu0 0.0
        %2317 = vmatpush1.msra.mxu0 0.0
        %2318 = vmatprep.subr.mxu0 0.0
        %2319 = vmatpush1.msra.mxu0 0.0
        %2320 = vmatprep.subr.mxu0 0.0
        %2321 = vmatpush1.msra.mxu0 0.0
        %2322 = vmatprep.subr.mxu0 0.0
        %2323 = vmatpush1.msra.mxu0 0.0
        %2324 = vmatprep.subr.mxu0 0.0
        %2325 = vmatpush1.msra.mxu0 0.0
        %2326 = vmatprep.subr.mxu0 0.0
        %2327 = vmatpush1.msra.mxu0 0.0
        %2328 = vmatprep.subr.mxu0 0.0
        %2329 = vmatpush1.msra.mxu0 0.0
        %2330 = vmatprep.subr.mxu0 0.0
        %2331 = vmatpush1.msra.mxu0 0.0
        %2332 = vmatprep.subr.mxu0 0.0
        %2333 = vmatpush1.msra.mxu0 0.0
        %2334 = vmatprep.subr.mxu0 0.0
        %2335 = vmatpush1.msra.mxu0 0.0
        %2336 = vmatprep.subr.mxu0 0.0
        %2337 = vmatpush1.msra.mxu0 0.0
        %2338 = vmatprep.subr.mxu0 0.0
        %2339 = vmatpush1.msra.mxu0 0.0
        %2340 = vmatprep.mubr.f32.mxu0 0.0
        %v2341 = vand.u32 %v2118, 4294901760
        %v2342 = vsub.f32 %v2118, %v2341
        %2343 = vmatmul.mubr.f32.gmra.mrb[0].mxu0 %v2342
        %v2344 = vpop.f32.mrb[0].mxu0
        %v2345 = vadd.f32 %v2271, %v2344
        %v2346 = vpop.f32.mrb[0].mxu0
        %2347 = vdwg.mxu0
        %2348 = vmatprep.subr.mxu0 0.0
        %2349 = vmatpush1.msra.mxu0 %v243
        %2350 = vmatprep.subr.mxu0 0.0
        %2351 = vmatpush1.msra.mxu0 %v244
        %2352 = vmatprep.subr.mxu0 0.0
        %2353 = vmatpush1.msra.mxu0 0.0
        %2354 = vmatprep.subr.mxu0 0.0
        %2355 = vmatpush1.msra.mxu0 0.0
        %2356 = vmatprep.subr.mxu0 0.0
        %2357 = vmatpush1.msra.mxu0 0.0
        %2358 = vmatprep.subr.mxu0 0.0
        %2359 = vmatpush1.msra.mxu0 0.0
        %2360 = vmatprep.subr.mxu0 0.0
        %2361 = vmatpush1.msra.mxu0 0.0
        %2362 = vmatprep.subr.mxu0 0.0
        %2363 = vmatpush1.msra.mxu0 0.0
        %2364 = vmatprep.subr.mxu0 0.0
        %2365 = vmatpush1.msra.mxu0 0.0
        %2366 = vmatprep.subr.mxu0 0.0
        %2367 = vmatpush1.msra.mxu0 0.0
        %2368 = vmatprep.subr.mxu0 0.0
        %2369 = vmatpush1.msra.mxu0 0.0
        %2370 = vmatprep.subr.mxu0 0.0
        %2371 = vmatpush1.msra.mxu0 0.0
        %2372 = vmatprep.subr.mxu0 0.0
        %2373 = vmatpush1.msra.mxu0 0.0
        %2374 = vmatprep.subr.mxu0 0.0
        %2375 = vmatpush1.msra.mxu0 0.0
        %2376 = vmatprep.subr.mxu0 0.0
        %2377 = vmatpush1.msra.mxu0 0.0
        %2378 = vmatprep.subr.mxu0 0.0
        %2379 = vmatpush1.msra.mxu0 0.0
        %2380 = vmatprep.subr.mxu0 0.0
        %2381 = vmatpush1.msra.mxu0 0.0
        %2382 = vmatprep.subr.mxu0 0.0
        %2383 = vmatpush1.msra.mxu0 0.0
        %2384 = vmatprep.subr.mxu0 0.0
        %2385 = vmatpush1.msra.mxu0 0.0
        %2386 = vmatprep.subr.mxu0 0.0
        %2387 = vmatpush1.msra.mxu0 0.0
        %2388 = vmatprep.subr.mxu0 0.0
        %2389 = vmatpush1.msra.mxu0 0.0
        %2390 = vmatprep.subr.mxu0 0.0
        %2391 = vmatpush1.msra.mxu0 0.0
        %2392 = vmatprep.subr.mxu0 0.0
        %2393 = vmatpush1.msra.mxu0 0.0
        %2394 = vmatprep.subr.mxu0 0.0
        %2395 = vmatpush1.msra.mxu0 0.0
        %2396 = vmatprep.subr.mxu0 0.0
        %2397 = vmatpush1.msra.mxu0 0.0
        %2398 = vmatprep.subr.mxu0 0.0
        %2399 = vmatpush1.msra.mxu0 0.0
        %2400 = vmatprep.subr.mxu0 0.0
        %2401 = vmatpush1.msra.mxu0 0.0
        %2402 = vmatprep.subr.mxu0 0.0
        %2403 = vmatpush1.msra.mxu0 0.0
        %2404 = vmatprep.subr.mxu0 0.0
        %2405 = vmatpush1.msra.mxu0 0.0
        %2406 = vmatprep.subr.mxu0 0.0
        %2407 = vmatpush1.msra.mxu0 0.0
        %2408 = vmatprep.subr.mxu0 0.0
        %2409 = vmatpush1.msra.mxu0 0.0
        %2410 = vmatprep.subr.mxu0 0.0
        %2411 = vmatpush1.msra.mxu0 0.0
        %2412 = vmatprep.mubr.f32.mxu0 0.0
        %v2413 = vand.u32 %v2118, 4294901760
        %v2414 = vsub.f32 %v2118, %v2413
        %v2415 = vand.u32 %v2414, 4294901760
        %2416 = vmatmul.mubr.f32.gmra.mrb[0].mxu0 %v2415
        %v2417 = vpop.f32.mrb[0].mxu0
        %v2418 = vadd.f32 %v2345, %v2417
        %v2419 = vpop.f32.mrb[0].mxu0
        %2420 = vdwg.mxu0
        %2421 = vmatprep.subr.mxu0 0.0
        %v2422 = vsub.f32 %v243, %v243
        %v2423 = vand.u32 %v2422, 4294901760
        %2424 = vmatpush1.msra.mxu0 %v2423
        %2425 = vmatprep.subr.mxu0 0.0
        %v2426 = vsub.f32 %v244, %v244
        %v2427 = vand.u32 %v2426, 4294901760
        %2428 = vmatpush1.msra.mxu0 %v2427
        %2429 = vmatprep.subr.mxu0 0.0
        %2430 = vmatpush1.msra.mxu0 0.0
        %2431 = vmatprep.subr.mxu0 0.0
        %2432 = vmatpush1.msra.mxu0 0.0
        %2433 = vmatprep.subr.mxu0 0.0
        %2434 = vmatpush1.msra.mxu0 0.0
        %2435 = vmatprep.subr.mxu0 0.0
        %2436 = vmatpush1.msra.mxu0 0.0
        %2437 = vmatprep.subr.mxu0 0.0
        %2438 = vmatpush1.msra.mxu0 0.0
        %2439 = vmatprep.subr.mxu0 0.0
        %2440 = vmatpush1.msra.mxu0 0.0
        %2441 = vmatprep.subr.mxu0 0.0
        %2442 = vmatpush1.msra.mxu0 0.0
        %2443 = vmatprep.subr.mxu0 0.0
        %2444 = vmatpush1.msra.mxu0 0.0
        %2445 = vmatprep.subr.mxu0 0.0
        %2446 = vmatpush1.msra.mxu0 0.0
        %2447 = vmatprep.subr.mxu0 0.0
        %2448 = vmatpush1.msra.mxu0 0.0
        %2449 = vmatprep.subr.mxu0 0.0
        %2450 = vmatpush1.msra.mxu0 0.0
        %2451 = vmatprep.subr.mxu0 0.0
        %2452 = vmatpush1.msra.mxu0 0.0
        %2453 = vmatprep.subr.mxu0 0.0
        %2454 = vmatpush1.msra.mxu0 0.0
        %2455 = vmatprep.subr.mxu0 0.0
        %2456 = vmatpush1.msra.mxu0 0.0
        %2457 = vmatprep.subr.mxu0 0.0
        %2458 = vmatpush1.msra.mxu0 0.0
        %2459 = vmatprep.subr.mxu0 0.0
        %2460 = vmatpush1.msra.mxu0 0.0
        %2461 = vmatprep.subr.mxu0 0.0
        %2462 = vmatpush1.msra.mxu0 0.0
        %2463 = vmatprep.subr.mxu0 0.0
        %2464 = vmatpush1.msra.mxu0 0.0
        %2465 = vmatprep.subr.mxu0 0.0
        %2466 = vmatpush1.msra.mxu0 0.0
        %2467 = vmatprep.subr.mxu0 0.0
        %2468 = vmatpush1.msra.mxu0 0.0
        %2469 = vmatprep.subr.mxu0 0.0
        %2470 = vmatpush1.msra.mxu0 0.0
        %2471 = vmatprep.subr.mxu0 0.0
        %2472 = vmatpush1.msra.mxu0 0.0
        %2473 = vmatprep.subr.mxu0 0.0
        %2474 = vmatpush1.msra.mxu0 0.0
        %2475 = vmatprep.subr.mxu0 0.0
        %2476 = vmatpush1.msra.mxu0 0.0
        %2477 = vmatprep.subr.mxu0 0.0
        %2478 = vmatpush1.msra.mxu0 0.0
        %2479 = vmatprep.subr.mxu0 0.0
        %2480 = vmatpush1.msra.mxu0 0.0
        %2481 = vmatprep.subr.mxu0 0.0
        %2482 = vmatpush1.msra.mxu0 0.0
        %2483 = vmatprep.subr.mxu0 0.0
        %2484 = vmatpush1.msra.mxu0 0.0
        %2485 = vmatprep.subr.mxu0 0.0
        %2486 = vmatpush1.msra.mxu0 0.0
        %2487 = vmatprep.subr.mxu0 0.0
        %2488 = vmatpush1.msra.mxu0 0.0
        %2489 = vmatprep.mubr.f32.mxu0 0.0
        %v2490 = vand.u32 %v2118, 4294901760
        %2491 = vmatmul.mubr.f32.gmra.mrb[0].mxu0 %v2490
        %v2492 = vpop.f32.mrb[0].mxu0
        %v2493 = vadd.f32 %v2418, %v2492
        %v2494 = vpop.f32.mrb[0].mxu0
        %2495 = vdwg.mxu0
        %2496 = vmatprep.subr.mxu0 0.0
        %2497 = vmatpush1.msra.mxu0 %v243
        %2498 = vmatprep.subr.mxu0 0.0
        %2499 = vmatpush1.msra.mxu0 %v244
        %2500 = vmatprep.subr.mxu0 0.0
        %2501 = vmatpush1.msra.mxu0 0.0
        %2502 = vmatprep.subr.mxu0 0.0
        %2503 = vmatpush1.msra.mxu0 0.0
        %2504 = vmatprep.subr.mxu0 0.0
        %2505 = vmatpush1.msra.mxu0 0.0
        %2506 = vmatprep.subr.mxu0 0.0
        %2507 = vmatpush1.msra.mxu0 0.0
        %2508 = vmatprep.subr.mxu0 0.0
        %2509 = vmatpush1.msra.mxu0 0.0
        %2510 = vmatprep.subr.mxu0 0.0
        %2511 = vmatpush1.msra.mxu0 0.0
        %2512 = vmatprep.subr.mxu0 0.0
        %2513 = vmatpush1.msra.mxu0 0.0
        %2514 = vmatprep.subr.mxu0 0.0
        %2515 = vmatpush1.msra.mxu0 0.0
        %2516 = vmatprep.subr.mxu0 0.0
        %2517 = vmatpush1.msra.mxu0 0.0
        %2518 = vmatprep.subr.mxu0 0.0
        %2519 = vmatpush1.msra.mxu0 0.0
        %2520 = vmatprep.subr.mxu0 0.0
        %2521 = vmatpush1.msra.mxu0 0.0
        %2522 = vmatprep.subr.mxu0 0.0
        %2523 = vmatpush1.msra.mxu0 0.0
        %2524 = vmatprep.subr.mxu0 0.0
        %2525 = vmatpush1.msra.mxu0 0.0
        %2526 = vmatprep.subr.mxu0 0.0
        %2527 = vmatpush1.msra.mxu0 0.0
        %2528 = vmatprep.subr.mxu0 0.0
        %2529 = vmatpush1.msra.mxu0 0.0
        %2530 = vmatprep.subr.mxu0 0.0
        %2531 = vmatpush1.msra.mxu0 0.0
        %2532 = vmatprep.subr.mxu0 0.0
        %2533 = vmatpush1.msra.mxu0 0.0
        %2534 = vmatprep.subr.mxu0 0.0
        %2535 = vmatpush1.msra.mxu0 0.0
        %2536 = vmatprep.subr.mxu0 0.0
        %2537 = vmatpush1.msra.mxu0 0.0
        %2538 = vmatprep.subr.mxu0 0.0
        %2539 = vmatpush1.msra.mxu0 0.0
        %2540 = vmatprep.subr.mxu0 0.0
        %2541 = vmatpush1.msra.mxu0 0.0
        %2542 = vmatprep.subr.mxu0 0.0
        %2543 = vmatpush1.msra.mxu0 0.0
        %2544 = vmatprep.subr.mxu0 0.0
        %2545 = vmatpush1.msra.mxu0 0.0
        %2546 = vmatprep.subr.mxu0 0.0
        %2547 = vmatpush1.msra.mxu0 0.0
        %2548 = vmatprep.subr.mxu0 0.0
        %2549 = vmatpush1.msra.mxu0 0.0
        %2550 = vmatprep.subr.mxu0 0.0
        %2551 = vmatpush1.msra.mxu0 0.0
        %2552 = vmatprep.subr.mxu0 0.0
        %2553 = vmatpush1.msra.mxu0 0.0
        %2554 = vmatprep.subr.mxu0 0.0
        %2555 = vmatpush1.msra.mxu0 0.0
        %2556 = vmatprep.subr.mxu0 0.0
        %2557 = vmatpush1.msra.mxu0 0.0
        %2558 = vmatprep.subr.mxu0 0.0
        %2559 = vmatpush1.msra.mxu0 0.0
        %2560 = vmatprep.mubr.f32.mxu0 0.0
        %v2561 = vand.u32 %v2118, 4294901760
        %2562 = vmatmul.mubr.f32.gmra.mrb[0].mxu0 %v2561
        %v2563 = vpop.f32.mrb[0].mxu0
        %v2564 = vadd.f32 %v2493, %v2563
        %v2565 = vpop.f32.mrb[0].mxu0
        %2566 = vdwg.mxu0
        %s2567 = smul.u32 %s27, 4
        %s2568 = scalar_lea.vmem %s221, %s2567 [#allocation7]
        %vm2569 = vcmask 27648
        %2570 = vst.msk [vmem:[%s2568] sm:$0xf] %vm2569, %v2564
        %p2571 = scmp.eq.s32.totalorder %s27, 0
        // Predicated region
        $region37: #{tpu_custom_call.1} parent=27 // pred_check
          %p2572 = pneg %p2571
        $region38: #{tpu_custom_call.1} parent=27 // pred_check_branch
          %2574 = sbr.rel (%p2572) target = $region40
        $region39: #{tpu_custom_call.1} parent=27 // pred_region
          %v2575 = vld [vmem:[%s221] sm:$0xf]
          %v2576 = vadd.s32 %v227, 1
          %vm2577 = vcmp.eq.s32.totalorder %v225, %v2576
          %v2578 = vsel %vm2577, 1, 0
          %v2579 = vcvt.s32.f32 %v2578
          %v2580 = vadd.s32 %v225, 1
          %vm2581 = vcmp.eq.s32.totalorder %v2580, %v227
          %v2582 = vsel %vm2581, 1, 0
          %v2583 = vcvt.s32.f32 %v2582
          %vm2584 = vcmask 31744
          %v2586 = vsel %vm2584, %v2579, 0
          %vm2588 = vcmask 1043456
          %v2590 = vsel %vm2588, %v2575, 0
          %2592 = vmatprep.subr.mxu0 0.0
          %v2593 = vand.u32 %v2590, 4294901760
          %2594 = vmatpush1.msra.mxu0 %v2593
          %2595 = vmatprep.subr.mxu0 0.0
          %2596 = vmatpush1.msra.mxu0 0.0
          %2597 = vmatprep.subr.mxu0 0.0
          %2598 = vmatpush1.msra.mxu0 0.0
          %2599 = vmatprep.subr.mxu0 0.0
          %2600 = vmatpush1.msra.mxu0 0.0
          %2601 = vmatprep.subr.mxu0 0.0
          %2602 = vmatpush1.msra.mxu0 0.0
          %2603 = vmatprep.subr.mxu0 0.0
          %2604 = vmatpush1.msra.mxu0 0.0
          %2605 = vmatprep.subr.mxu0 0.0
          %2606 = vmatpush1.msra.mxu0 0.0
          %2607 = vmatprep.subr.mxu0 0.0
          %2608 = vmatpush1.msra.mxu0 0.0
          %2609 = vmatprep.subr.mxu0 0.0
          %2610 = vmatpush1.msra.mxu0 0.0
          %2611 = vmatprep.subr.mxu0 0.0
          %2612 = vmatpush1.msra.mxu0 0.0
          %2613 = vmatprep.subr.mxu0 0.0
          %2614 = vmatpush1.msra.mxu0 0.0
          %2615 = vmatprep.subr.mxu0 0.0
          %2616 = vmatpush1.msra.mxu0 0.0
          %2617 = vmatprep.subr.mxu0 0.0
          %2618 = vmatpush1.msra.mxu0 0.0
          %2619 = vmatprep.subr.mxu0 0.0
          %2620 = vmatpush1.msra.mxu0 0.0
          %2621 = vmatprep.subr.mxu0 0.0
          %2622 = vmatpush1.msra.mxu0 0.0
          %2623 = vmatprep.subr.mxu0 0.0
          %2624 = vmatpush1.msra.mxu0 0.0
          %2625 = vmatprep.subr.mxu0 0.0
          %2626 = vmatpush1.msra.mxu0 0.0
          %2627 = vmatprep.subr.mxu0 0.0
          %2628 = vmatpush1.msra.mxu0 0.0
          %2629 = vmatprep.subr.mxu0 0.0
          %2630 = vmatpush1.msra.mxu0 0.0
          %2631 = vmatprep.subr.mxu0 0.0
          %2632 = vmatpush1.msra.mxu0 0.0
          %2633 = vmatprep.subr.mxu0 0.0
          %2634 = vmatpush1.msra.mxu0 0.0
          %2635 = vmatprep.subr.mxu0 0.0
          %2636 = vmatpush1.msra.mxu0 0.0
          %2637 = vmatprep.subr.mxu0 0.0
          %2638 = vmatpush1.msra.mxu0 0.0
          %2639 = vmatprep.subr.mxu0 0.0
          %2640 = vmatpush1.msra.mxu0 0.0
          %2641 = vmatprep.subr.mxu0 0.0
          %2642 = vmatpush1.msra.mxu0 0.0
          %2643 = vmatprep.subr.mxu0 0.0
          %2644 = vmatpush1.msra.mxu0 0.0
          %2645 = vmatprep.subr.mxu0 0.0
          %2646 = vmatpush1.msra.mxu0 0.0
          %2647 = vmatprep.subr.mxu0 0.0
          %2648 = vmatpush1.msra.mxu0 0.0
          %2649 = vmatprep.subr.mxu0 0.0
          %2650 = vmatpush1.msra.mxu0 0.0
          %2651 = vmatprep.subr.mxu0 0.0
          %2652 = vmatpush1.msra.mxu0 0.0
          %2653 = vmatprep.subr.mxu0 0.0
          %2654 = vmatpush1.msra.mxu0 0.0
          %2655 = vmatprep.subr.mxu0 0.0
          %2656 = vmatpush1.msra.mxu0 0.0
          %2657 = vmatprep.mubr.f32.mxu0 0.0
          %v2658 = vand.u32 %v2586, 4294901760
          %v2659 = vsub.f32 %v2586, %v2658
          %v2660 = vand.u32 %v2659, 4294901760
          %v2661 = vsub.f32 %v2659, %v2660
          %v2662 = vand.u32 %v2661, 4294901760
          %2663 = vmatmul.mubr.f32.gmra.mrb[0].mxu0 %v2662
          %v2664 = vpop.f32.mrb[0].mxu0
          %v2665 = vadd.f32 0.0, %v2664
          %v2666 = vpop.f32.mrb[0].mxu0
          %2667 = vdwg.mxu0
          %2668 = vmatprep.subr.mxu0 0.0
          %v2669 = vand.u32 %v2590, 4294901760
          %v2670 = vsub.f32 %v2590, %v2669
          %v2671 = vand.u32 %v2670, 4294901760
          %v2672 = vsub.f32 %v2670, %v2671
          %v2673 = vand.u32 %v2672, 4294901760
          %2674 = vmatpush1.msra.mxu0 %v2673
          %2675 = vmatprep.subr.mxu0 0.0
          %2676 = vmatpush1.msra.mxu0 0.0
          %2677 = vmatprep.subr.mxu0 0.0
          %2678 = vmatpush1.msra.mxu0 0.0
          %2679 = vmatprep.subr.mxu0 0.0
          %2680 = vmatpush1.msra.mxu0 0.0
          %2681 = vmatprep.subr.mxu0 0.0
          %2682 = vmatpush1.msra.mxu0 0.0
          %2683 = vmatprep.subr.mxu0 0.0
          %2684 = vmatpush1.msra.mxu0 0.0
          %2685 = vmatprep.subr.mxu0 0.0
          %2686 = vmatpush1.msra.mxu0 0.0
          %2687 = vmatprep.subr.mxu0 0.0
          %2688 = vmatpush1.msra.mxu0 0.0
          %2689 = vmatprep.subr.mxu0 0.0
          %2690 = vmatpush1.msra.mxu0 0.0
          %2691 = vmatprep.subr.mxu0 0.0
          %2692 = vmatpush1.msra.mxu0 0.0
          %2693 = vmatprep.subr.mxu0 0.0
          %2694 = vmatpush1.msra.mxu0 0.0
          %2695 = vmatprep.subr.mxu0 0.0
          %2696 = vmatpush1.msra.mxu0 0.0
          %2697 = vmatprep.subr.mxu0 0.0
          %2698 = vmatpush1.msra.mxu0 0.0
          %2699 = vmatprep.subr.mxu0 0.0
          %2700 = vmatpush1.msra.mxu0 0.0
          %2701 = vmatprep.subr.mxu0 0.0
          %2702 = vmatpush1.msra.mxu0 0.0
          %2703 = vmatprep.subr.mxu0 0.0
          %2704 = vmatpush1.msra.mxu0 0.0
          %2705 = vmatprep.subr.mxu0 0.0
          %2706 = vmatpush1.msra.mxu0 0.0
          %2707 = vmatprep.subr.mxu0 0.0
          %2708 = vmatpush1.msra.mxu0 0.0
          %2709 = vmatprep.subr.mxu0 0.0
          %2710 = vmatpush1.msra.mxu0 0.0
          %2711 = vmatprep.subr.mxu0 0.0
          %2712 = vmatpush1.msra.mxu0 0.0
          %2713 = vmatprep.subr.mxu0 0.0
          %2714 = vmatpush1.msra.mxu0 0.0
          %2715 = vmatprep.subr.mxu0 0.0
          %2716 = vmatpush1.msra.mxu0 0.0
          %2717 = vmatprep.subr.mxu0 0.0
          %2718 = vmatpush1.msra.mxu0 0.0
          %2719 = vmatprep.subr.mxu0 0.0
          %2720 = vmatpush1.msra.mxu0 0.0
          %2721 = vmatprep.subr.mxu0 0.0
          %2722 = vmatpush1.msra.mxu0 0.0
          %2723 = vmatprep.subr.mxu0 0.0
          %2724 = vmatpush1.msra.mxu0 0.0
          %2725 = vmatprep.subr.mxu0 0.0
          %2726 = vmatpush1.msra.mxu0 0.0
          %2727 = vmatprep.subr.mxu0 0.0
          %2728 = vmatpush1.msra.mxu0 0.0
          %2729 = vmatprep.subr.mxu0 0.0
          %2730 = vmatpush1.msra.mxu0 0.0
          %2731 = vmatprep.subr.mxu0 0.0
          %2732 = vmatpush1.msra.mxu0 0.0
          %2733 = vmatprep.subr.mxu0 0.0
          %2734 = vmatpush1.msra.mxu0 0.0
          %2735 = vmatprep.subr.mxu0 0.0
          %2736 = vmatpush1.msra.mxu0 0.0
          %2737 = vmatprep.mubr.f32.mxu0 0.0
          %v2738 = vand.u32 %v2586, 4294901760
          %2739 = vmatmul.mubr.f32.gmra.mrb[0].mxu0 %v2738
          %v2740 = vpop.f32.mrb[0].mxu0
          %v2741 = vadd.f32 %v2665, %v2740
          %v2742 = vpop.f32.mrb[0].mxu0
          %2743 = vdwg.mxu0
          %2744 = vmatprep.subr.mxu0 0.0
          %v2745 = vand.u32 %v2590, 4294901760
          %v2746 = vsub.f32 %v2590, %v2745
          %2747 = vmatpush1.msra.mxu0 %v2746
          %2748 = vmatprep.subr.mxu0 0.0
          %2749 = vmatpush1.msra.mxu0 0.0
          %2750 = vmatprep.subr.mxu0 0.0
          %2751 = vmatpush1.msra.mxu0 0.0
          %2752 = vmatprep.subr.mxu0 0.0
          %2753 = vmatpush1.msra.mxu0 0.0
          %2754 = vmatprep.subr.mxu0 0.0
          %2755 = vmatpush1.msra.mxu0 0.0
          %2756 = vmatprep.subr.mxu0 0.0
          %2757 = vmatpush1.msra.mxu0 0.0
          %2758 = vmatprep.subr.mxu0 0.0
          %2759 = vmatpush1.msra.mxu0 0.0
          %2760 = vmatprep.subr.mxu0 0.0
          %2761 = vmatpush1.msra.mxu0 0.0
          %2762 = vmatprep.subr.mxu0 0.0
          %2763 = vmatpush1.msra.mxu0 0.0
          %2764 = vmatprep.subr.mxu0 0.0
          %2765 = vmatpush1.msra.mxu0 0.0
          %2766 = vmatprep.subr.mxu0 0.0
          %2767 = vmatpush1.msra.mxu0 0.0
          %2768 = vmatprep.subr.mxu0 0.0
          %2769 = vmatpush1.msra.mxu0 0.0
          %2770 = vmatprep.subr.mxu0 0.0
          %2771 = vmatpush1.msra.mxu0 0.0
          %2772 = vmatprep.subr.mxu0 0.0
          %2773 = vmatpush1.msra.mxu0 0.0
          %2774 = vmatprep.subr.mxu0 0.0
          %2775 = vmatpush1.msra.mxu0 0.0
          %2776 = vmatprep.subr.mxu0 0.0
          %2777 = vmatpush1.msra.mxu0 0.0
          %2778 = vmatprep.subr.mxu0 0.0
          %2779 = vmatpush1.msra.mxu0 0.0
          %2780 = vmatprep.subr.mxu0 0.0
          %2781 = vmatpush1.msra.mxu0 0.0
          %2782 = vmatprep.subr.mxu0 0.0
          %2783 = vmatpush1.msra.mxu0 0.0
          %2784 = vmatprep.subr.mxu0 0.0
          %2785 = vmatpush1.msra.mxu0 0.0
          %2786 = vmatprep.subr.mxu0 0.0
          %2787 = vmatpush1.msra.mxu0 0.0
          %2788 = vmatprep.subr.mxu0 0.0
          %2789 = vmatpush1.msra.mxu0 0.0
          %2790 = vmatprep.subr.mxu0 0.0
          %2791 = vmatpush1.msra.mxu0 0.0
          %2792 = vmatprep.subr.mxu0 0.0
          %2793 = vmatpush1.msra.mxu0 0.0
          %2794 = vmatprep.subr.mxu0 0.0
          %2795 = vmatpush1.msra.mxu0 0.0
          %2796 = vmatprep.subr.mxu0 0.0
          %2797 = vmatpush1.msra.mxu0 0.0
          %2798 = vmatprep.subr.mxu0 0.0
          %2799 = vmatpush1.msra.mxu0 0.0
          %2800 = vmatprep.subr.mxu0 0.0
          %2801 = vmatpush1.msra.mxu0 0.0
          %2802 = vmatprep.subr.mxu0 0.0
          %2803 = vmatpush1.msra.mxu0 0.0
          %2804 = vmatprep.subr.mxu0 0.0
          %2805 = vmatpush1.msra.mxu0 0.0
          %2806 = vmatprep.subr.mxu0 0.0
          %2807 = vmatpush1.msra.mxu0 0.0
          %2808 = vmatprep.subr.mxu0 0.0
          %2809 = vmatpush1.msra.mxu0 0.0
          %2810 = vmatprep.mubr.f32.mxu0 0.0
          %v2811 = vand.u32 %v2586, 4294901760
          %v2812 = vsub.f32 %v2586, %v2811
          %2813 = vmatmul.mubr.f32.gmra.mrb[0].mxu0 %v2812
          %v2814 = vpop.f32.mrb[0].mxu0
          %v2815 = vadd.f32 %v2741, %v2814
          %v2816 = vpop.f32.mrb[0].mxu0
          %2817 = vdwg.mxu0
          %2818 = vmatprep.subr.mxu0 0.0
          %v2819 = vand.u32 %v2590, 4294901760
          %2820 = vmatpush1.msra.mxu0 %v2819
          %2821 = vmatprep.subr.mxu0 0.0
          %2822 = vmatpush1.msra.mxu0 0.0
          %2823 = vmatprep.subr.mxu0 0.0
          %2824 = vmatpush1.msra.mxu0 0.0
          %2825 = vmatprep.subr.mxu0 0.0
          %2826 = vmatpush1.msra.mxu0 0.0
          %2827 = vmatprep.subr.mxu0 0.0
          %2828 = vmatpush1.msra.mxu0 0.0
          %2829 = vmatprep.subr.mxu0 0.0
          %2830 = vmatpush1.msra.mxu0 0.0
          %2831 = vmatprep.subr.mxu0 0.0
          %2832 = vmatpush1.msra.mxu0 0.0
          %2833 = vmatprep.subr.mxu0 0.0
          %2834 = vmatpush1.msra.mxu0 0.0
          %2835 = vmatprep.subr.mxu0 0.0
          %2836 = vmatpush1.msra.mxu0 0.0
          %2837 = vmatprep.subr.mxu0 0.0
          %2838 = vmatpush1.msra.mxu0 0.0
          %2839 = vmatprep.subr.mxu0 0.0
          %2840 = vmatpush1.msra.mxu0 0.0
          %2841 = vmatprep.subr.mxu0 0.0
          %2842 = vmatpush1.msra.mxu0 0.0
          %2843 = vmatprep.subr.mxu0 0.0
          %2844 = vmatpush1.msra.mxu0 0.0
          %2845 = vmatprep.subr.mxu0 0.0
          %2846 = vmatpush1.msra.mxu0 0.0
          %2847 = vmatprep.subr.mxu0 0.0
          %2848 = vmatpush1.msra.mxu0 0.0
          %2849 = vmatprep.subr.mxu0 0.0
          %2850 = vmatpush1.msra.mxu0 0.0
          %2851 = vmatprep.subr.mxu0 0.0
          %2852 = vmatpush1.msra.mxu0 0.0
          %2853 = vmatprep.subr.mxu0 0.0
          %2854 = vmatpush1.msra.mxu0 0.0
          %2855 = vmatprep.subr.mxu0 0.0
          %2856 = vmatpush1.msra.mxu0 0.0
          %2857 = vmatprep.subr.mxu0 0.0
          %2858 = vmatpush1.msra.mxu0 0.0
          %2859 = vmatprep.subr.mxu0 0.0
          %2860 = vmatpush1.msra.mxu0 0.0
          %2861 = vmatprep.subr.mxu0 0.0
          %2862 = vmatpush1.msra.mxu0 0.0
          %2863 = vmatprep.subr.mxu0 0.0
          %2864 = vmatpush1.msra.mxu0 0.0
          %2865 = vmatprep.subr.mxu0 0.0
          %2866 = vmatpush1.msra.mxu0 0.0
          %2867 = vmatprep.subr.mxu0 0.0
          %2868 = vmatpush1.msra.mxu0 0.0
          %2869 = vmatprep.subr.mxu0 0.0
          %2870 = vmatpush1.msra.mxu0 0.0
          %2871 = vmatprep.subr.mxu0 0.0
          %2872 = vmatpush1.msra.mxu0 0.0
          %2873 = vmatprep.subr.mxu0 0.0
          %2874 = vmatpush1.msra.mxu0 0.0
          %2875 = vmatprep.subr.mxu0 0.0
          %2876 = vmatpush1.msra.mxu0 0.0
          %2877 = vmatprep.subr.mxu0 0.0
          %2878 = vmatpush1.msra.mxu0 0.0
          %2879 = vmatprep.subr.mxu0 0.0
          %2880 = vmatpush1.msra.mxu0 0.0
          %2881 = vmatprep.subr.mxu0 0.0
          %2882 = vmatpush1.msra.mxu0 0.0
          %2883 = vmatprep.mubr.f32.mxu0 0.0
          %v2884 = vand.u32 %v2586, 4294901760
          %v2885 = vsub.f32 %v2586, %v2884
          %v2886 = vand.u32 %v2885, 4294901760
          %2887 = vmatmul.mubr.f32.gmra.mrb[0].mxu0 %v2886
          %v2888 = vpop.f32.mrb[0].mxu0
          %v2889 = vadd.f32 %v2815, %v2888
          %v2890 = vpop.f32.mrb[0].mxu0
          %2891 = vdwg.mxu0
          %2892 = vmatprep.subr.mxu0 0.0
          %v2893 = vand.u32 %v2590, 4294901760
          %v2894 = vsub.f32 %v2590, %v2893
          %v2895 = vand.u32 %v2894, 4294901760
          %2896 = vmatpush1.msra.mxu0 %v2895
          %2897 = vmatprep.subr.mxu0 0.0
          %2898 = vmatpush1.msra.mxu0 0.0
          %2899 = vmatprep.subr.mxu0 0.0
          %2900 = vmatpush1.msra.mxu0 0.0
          %2901 = vmatprep.subr.mxu0 0.0
          %2902 = vmatpush1.msra.mxu0 0.0
          %2903 = vmatprep.subr.mxu0 0.0
          %2904 = vmatpush1.msra.mxu0 0.0
          %2905 = vmatprep.subr.mxu0 0.0
          %2906 = vmatpush1.msra.mxu0 0.0
          %2907 = vmatprep.subr.mxu0 0.0
          %2908 = vmatpush1.msra.mxu0 0.0
          %2909 = vmatprep.subr.mxu0 0.0
          %2910 = vmatpush1.msra.mxu0 0.0
          %2911 = vmatprep.subr.mxu0 0.0
          %2912 = vmatpush1.msra.mxu0 0.0
          %2913 = vmatprep.subr.mxu0 0.0
          %2914 = vmatpush1.msra.mxu0 0.0
          %2915 = vmatprep.subr.mxu0 0.0
          %2916 = vmatpush1.msra.mxu0 0.0
          %2917 = vmatprep.subr.mxu0 0.0
          %2918 = vmatpush1.msra.mxu0 0.0
          %2919 = vmatprep.subr.mxu0 0.0
          %2920 = vmatpush1.msra.mxu0 0.0
          %2921 = vmatprep.subr.mxu0 0.0
          %2922 = vmatpush1.msra.mxu0 0.0
          %2923 = vmatprep.subr.mxu0 0.0
          %2924 = vmatpush1.msra.mxu0 0.0
          %2925 = vmatprep.subr.mxu0 0.0
          %2926 = vmatpush1.msra.mxu0 0.0
          %2927 = vmatprep.subr.mxu0 0.0
          %2928 = vmatpush1.msra.mxu0 0.0
          %2929 = vmatprep.subr.mxu0 0.0
          %2930 = vmatpush1.msra.mxu0 0.0
          %2931 = vmatprep.subr.mxu0 0.0
          %2932 = vmatpush1.msra.mxu0 0.0
          %2933 = vmatprep.subr.mxu0 0.0
          %2934 = vmatpush1.msra.mxu0 0.0
          %2935 = vmatprep.subr.mxu0 0.0
          %2936 = vmatpush1.msra.mxu0 0.0
          %2937 = vmatprep.subr.mxu0 0.0
          %2938 = vmatpush1.msra.mxu0 0.0
          %2939 = vmatprep.subr.mxu0 0.0
          %2940 = vmatpush1.msra.mxu0 0.0
          %2941 = vmatprep.subr.mxu0 0.0
          %2942 = vmatpush1.msra.mxu0 0.0
          %2943 = vmatprep.subr.mxu0 0.0
          %2944 = vmatpush1.msra.mxu0 0.0
          %2945 = vmatprep.subr.mxu0 0.0
          %2946 = vmatpush1.msra.mxu0 0.0
          %2947 = vmatprep.subr.mxu0 0.0
          %2948 = vmatpush1.msra.mxu0 0.0
          %2949 = vmatprep.subr.mxu0 0.0
          %2950 = vmatpush1.msra.mxu0 0.0
          %2951 = vmatprep.subr.mxu0 0.0
          %2952 = vmatpush1.msra.mxu0 0.0
          %2953 = vmatprep.subr.mxu0 0.0
          %2954 = vmatpush1.msra.mxu0 0.0
          %2955 = vmatprep.subr.mxu0 0.0
          %2956 = vmatpush1.msra.mxu0 0.0
          %2957 = vmatprep.subr.mxu0 0.0
          %2958 = vmatpush1.msra.mxu0 0.0
          %2959 = vmatprep.mubr.f32.mxu0 0.0
          %v2960 = vand.u32 %v2586, 4294901760
          %2961 = vmatmul.mubr.f32.gmra.mrb[0].mxu0 %v2960
          %v2962 = vpop.f32.mrb[0].mxu0
          %v2963 = vadd.f32 %v2889, %v2962
          %v2964 = vpop.f32.mrb[0].mxu0
          %2965 = vdwg.mxu0
          %2966 = vmatprep.subr.mxu0 0.0
          %v2967 = vand.u32 %v2590, 4294901760
          %2968 = vmatpush1.msra.mxu0 %v2967
          %2969 = vmatprep.subr.mxu0 0.0
          %2970 = vmatpush1.msra.mxu0 0.0
          %2971 = vmatprep.subr.mxu0 0.0
          %2972 = vmatpush1.msra.mxu0 0.0
          %2973 = vmatprep.subr.mxu0 0.0
          %2974 = vmatpush1.msra.mxu0 0.0
          %2975 = vmatprep.subr.mxu0 0.0
          %2976 = vmatpush1.msra.mxu0 0.0
          %2977 = vmatprep.subr.mxu0 0.0
          %2978 = vmatpush1.msra.mxu0 0.0
          %2979 = vmatprep.subr.mxu0 0.0
          %2980 = vmatpush1.msra.mxu0 0.0
          %2981 = vmatprep.subr.mxu0 0.0
          %2982 = vmatpush1.msra.mxu0 0.0
          %2983 = vmatprep.subr.mxu0 0.0
          %2984 = vmatpush1.msra.mxu0 0.0
          %2985 = vmatprep.subr.mxu0 0.0
          %2986 = vmatpush1.msra.mxu0 0.0
          %2987 = vmatprep.subr.mxu0 0.0
          %2988 = vmatpush1.msra.mxu0 0.0
          %2989 = vmatprep.subr.mxu0 0.0
          %2990 = vmatpush1.msra.mxu0 0.0
          %2991 = vmatprep.subr.mxu0 0.0
          %2992 = vmatpush1.msra.mxu0 0.0
          %2993 = vmatprep.subr.mxu0 0.0
          %2994 = vmatpush1.msra.mxu0 0.0
          %2995 = vmatprep.subr.mxu0 0.0
          %2996 = vmatpush1.msra.mxu0 0.0
          %2997 = vmatprep.subr.mxu0 0.0
          %2998 = vmatpush1.msra.mxu0 0.0
          %2999 = vmatprep.subr.mxu0 0.0
          %3000 = vmatpush1.msra.mxu0 0.0
          %3001 = vmatprep.subr.mxu0 0.0
          %3002 = vmatpush1.msra.mxu0 0.0
          %3003 = vmatprep.subr.mxu0 0.0
          %3004 = vmatpush1.msra.mxu0 0.0
          %3005 = vmatprep.subr.mxu0 0.0
          %3006 = vmatpush1.msra.mxu0 0.0
          %3007 = vmatprep.subr.mxu0 0.0
          %3008 = vmatpush1.msra.mxu0 0.0
          %3009 = vmatprep.subr.mxu0 0.0
          %3010 = vmatpush1.msra.mxu0 0.0
          %3011 = vmatprep.subr.mxu0 0.0
          %3012 = vmatpush1.msra.mxu0 0.0
          %3013 = vmatprep.subr.mxu0 0.0
          %3014 = vmatpush1.msra.mxu0 0.0
          %3015 = vmatprep.subr.mxu0 0.0
          %3016 = vmatpush1.msra.mxu0 0.0
          %3017 = vmatprep.subr.mxu0 0.0
          %3018 = vmatpush1.msra.mxu0 0.0
          %3019 = vmatprep.subr.mxu0 0.0
          %3020 = vmatpush1.msra.mxu0 0.0
          %3021 = vmatprep.subr.mxu0 0.0
          %3022 = vmatpush1.msra.mxu0 0.0
          %3023 = vmatprep.subr.mxu0 0.0
          %3024 = vmatpush1.msra.mxu0 0.0
          %3025 = vmatprep.subr.mxu0 0.0
          %3026 = vmatpush1.msra.mxu0 0.0
          %3027 = vmatprep.subr.mxu0 0.0
          %3028 = vmatpush1.msra.mxu0 0.0
          %3029 = vmatprep.subr.mxu0 0.0
          %3030 = vmatpush1.msra.mxu0 0.0
          %3031 = vmatprep.mubr.f32.mxu0 0.0
          %v3032 = vand.u32 %v2586, 4294901760
          %3033 = vmatmul.mubr.f32.gmra.mrb[0].mxu0 %v3032
          %v3034 = vpop.f32.mrb[0].mxu0
          %v3035 = vadd.f32 %v2963, %v3034
          %v3036 = vpop.f32.mrb[0].mxu0
          %3037 = vdwg.mxu0
          %v3039 = vsel %vm2584, %v2583, 0
          %3041 = vmatprep.subr.mxu0 0.0
          %v3042 = vand.u32 %v2590, 4294901760
          %3043 = vmatpush1.msra.mxu0 %v3042
          %3044 = vmatprep.subr.mxu0 0.0
          %3045 = vmatpush1.msra.mxu0 0.0
          %3046 = vmatprep.subr.mxu0 0.0
          %3047 = vmatpush1.msra.mxu0 0.0
          %3048 = vmatprep.subr.mxu0 0.0
          %3049 = vmatpush1.msra.mxu0 0.0
          %3050 = vmatprep.subr.mxu0 0.0
          %3051 = vmatpush1.msra.mxu0 0.0
          %3052 = vmatprep.subr.mxu0 0.0
          %3053 = vmatpush1.msra.mxu0 0.0
          %3054 = vmatprep.subr.mxu0 0.0
          %3055 = vmatpush1.msra.mxu0 0.0
          %3056 = vmatprep.subr.mxu0 0.0
          %3057 = vmatpush1.msra.mxu0 0.0
          %3058 = vmatprep.subr.mxu0 0.0
          %3059 = vmatpush1.msra.mxu0 0.0
          %3060 = vmatprep.subr.mxu0 0.0
          %3061 = vmatpush1.msra.mxu0 0.0
          %3062 = vmatprep.subr.mxu0 0.0
          %3063 = vmatpush1.msra.mxu0 0.0
          %3064 = vmatprep.subr.mxu0 0.0
          %3065 = vmatpush1.msra.mxu0 0.0
          %3066 = vmatprep.subr.mxu0 0.0
          %3067 = vmatpush1.msra.mxu0 0.0
          %3068 = vmatprep.subr.mxu0 0.0
          %3069 = vmatpush1.msra.mxu0 0.0
          %3070 = vmatprep.subr.mxu0 0.0
          %3071 = vmatpush1.msra.mxu0 0.0
          %3072 = vmatprep.subr.mxu0 0.0
          %3073 = vmatpush1.msra.mxu0 0.0
          %3074 = vmatprep.subr.mxu0 0.0
          %3075 = vmatpush1.msra.mxu0 0.0
          %3076 = vmatprep.subr.mxu0 0.0
          %3077 = vmatpush1.msra.mxu0 0.0
          %3078 = vmatprep.subr.mxu0 0.0
          %3079 = vmatpush1.msra.mxu0 0.0
          %3080 = vmatprep.subr.mxu0 0.0
          %3081 = vmatpush1.msra.mxu0 0.0
          %3082 = vmatprep.subr.mxu0 0.0
          %3083 = vmatpush1.msra.mxu0 0.0
          %3084 = vmatprep.subr.mxu0 0.0
          %3085 = vmatpush1.msra.mxu0 0.0
          %3086 = vmatprep.subr.mxu0 0.0
          %3087 = vmatpush1.msra.mxu0 0.0
          %3088 = vmatprep.subr.mxu0 0.0
          %3089 = vmatpush1.msra.mxu0 0.0
          %3090 = vmatprep.subr.mxu0 0.0
          %3091 = vmatpush1.msra.mxu0 0.0
          %3092 = vmatprep.subr.mxu0 0.0
          %3093 = vmatpush1.msra.mxu0 0.0
          %3094 = vmatprep.subr.mxu0 0.0
          %3095 = vmatpush1.msra.mxu0 0.0
          %3096 = vmatprep.subr.mxu0 0.0
          %3097 = vmatpush1.msra.mxu0 0.0
          %3098 = vmatprep.subr.mxu0 0.0
          %3099 = vmatpush1.msra.mxu0 0.0
          %3100 = vmatprep.subr.mxu0 0.0
          %3101 = vmatpush1.msra.mxu0 0.0
          %3102 = vmatprep.subr.mxu0 0.0
          %3103 = vmatpush1.msra.mxu0 0.0
          %3104 = vmatprep.subr.mxu0 0.0
          %3105 = vmatpush1.msra.mxu0 0.0
          %3106 = vmatprep.mubr.f32.mxu0 0.0
          %v3107 = vand.u32 %v3039, 4294901760
          %v3108 = vsub.f32 %v3039, %v3107
          %v3109 = vand.u32 %v3108, 4294901760
          %v3110 = vsub.f32 %v3108, %v3109
          %v3111 = vand.u32 %v3110, 4294901760
          %3112 = vmatmul.mubr.f32.gmra.mrb[0].mxu0 %v3111
          %v3113 = vpop.f32.mrb[0].mxu0
          %v3114 = vadd.f32 0.0, %v3113
          %v3115 = vpop.f32.mrb[0].mxu0
          %3116 = vdwg.mxu0
          %3117 = vmatprep.subr.mxu0 0.0
          %v3118 = vand.u32 %v2590, 4294901760
          %v3119 = vsub.f32 %v2590, %v3118
          %v3120 = vand.u32 %v3119, 4294901760
          %v3121 = vsub.f32 %v3119, %v3120
          %v3122 = vand.u32 %v3121, 4294901760
          %3123 = vmatpush1.msra.mxu0 %v3122
          %3124 = vmatprep.subr.mxu0 0.0
          %3125 = vmatpush1.msra.mxu0 0.0
          %3126 = vmatprep.subr.mxu0 0.0
          %3127 = vmatpush1.msra.mxu0 0.0
          %3128 = vmatprep.subr.mxu0 0.0
          %3129 = vmatpush1.msra.mxu0 0.0
          %3130 = vmatprep.subr.mxu0 0.0
          %3131 = vmatpush1.msra.mxu0 0.0
          %3132 = vmatprep.subr.mxu0 0.0
          %3133 = vmatpush1.msra.mxu0 0.0
          %3134 = vmatprep.subr.mxu0 0.0
          %3135 = vmatpush1.msra.mxu0 0.0
          %3136 = vmatprep.subr.mxu0 0.0
          %3137 = vmatpush1.msra.mxu0 0.0
          %3138 = vmatprep.subr.mxu0 0.0
          %3139 = vmatpush1.msra.mxu0 0.0
          %3140 = vmatprep.subr.mxu0 0.0
          %3141 = vmatpush1.msra.mxu0 0.0
          %3142 = vmatprep.subr.mxu0 0.0
          %3143 = vmatpush1.msra.mxu0 0.0
          %3144 = vmatprep.subr.mxu0 0.0
          %3145 = vmatpush1.msra.mxu0 0.0
          %3146 = vmatprep.subr.mxu0 0.0
          %3147 = vmatpush1.msra.mxu0 0.0
          %3148 = vmatprep.subr.mxu0 0.0
          %3149 = vmatpush1.msra.mxu0 0.0
          %3150 = vmatprep.subr.mxu0 0.0
          %3151 = vmatpush1.msra.mxu0 0.0
          %3152 = vmatprep.subr.mxu0 0.0
          %3153 = vmatpush1.msra.mxu0 0.0
          %3154 = vmatprep.subr.mxu0 0.0
          %3155 = vmatpush1.msra.mxu0 0.0
          %3156 = vmatprep.subr.mxu0 0.0
          %3157 = vmatpush1.msra.mxu0 0.0
          %3158 = vmatprep.subr.mxu0 0.0
          %3159 = vmatpush1.msra.mxu0 0.0
          %3160 = vmatprep.subr.mxu0 0.0
          %3161 = vmatpush1.msra.mxu0 0.0
          %3162 = vmatprep.subr.mxu0 0.0
          %3163 = vmatpush1.msra.mxu0 0.0
          %3164 = vmatprep.subr.mxu0 0.0
          %3165 = vmatpush1.msra.mxu0 0.0
          %3166 = vmatprep.subr.mxu0 0.0
          %3167 = vmatpush1.msra.mxu0 0.0
          %3168 = vmatprep.subr.mxu0 0.0
          %3169 = vmatpush1.msra.mxu0 0.0
          %3170 = vmatprep.subr.mxu0 0.0
          %3171 = vmatpush1.msra.mxu0 0.0
          %3172 = vmatprep.subr.mxu0 0.0
          %3173 = vmatpush1.msra.mxu0 0.0
          %3174 = vmatprep.subr.mxu0 0.0
          %3175 = vmatpush1.msra.mxu0 0.0
          %3176 = vmatprep.subr.mxu0 0.0
          %3177 = vmatpush1.msra.mxu0 0.0
          %3178 = vmatprep.subr.mxu0 0.0
          %3179 = vmatpush1.msra.mxu0 0.0
          %3180 = vmatprep.subr.mxu0 0.0
          %3181 = vmatpush1.msra.mxu0 0.0
          %3182 = vmatprep.subr.mxu0 0.0
          %3183 = vmatpush1.msra.mxu0 0.0
          %3184 = vmatprep.subr.mxu0 0.0
          %3185 = vmatpush1.msra.mxu0 0.0
          %3186 = vmatprep.mubr.f32.mxu0 0.0
          %v3187 = vand.u32 %v3039, 4294901760
          %3188 = vmatmul.mubr.f32.gmra.mrb[0].mxu0 %v3187
          %v3189 = vpop.f32.mrb[0].mxu0
          %v3190 = vadd.f32 %v3114, %v3189
          %v3191 = vpop.f32.mrb[0].mxu0
          %3192 = vdwg.mxu0
          %3193 = vmatprep.subr.mxu0 0.0
          %v3194 = vand.u32 %v2590, 4294901760
          %v3195 = vsub.f32 %v2590, %v3194
          %3196 = vmatpush1.msra.mxu0 %v3195
          %3197 = vmatprep.subr.mxu0 0.0
          %3198 = vmatpush1.msra.mxu0 0.0
          %3199 = vmatprep.subr.mxu0 0.0
          %3200 = vmatpush1.msra.mxu0 0.0
          %3201 = vmatprep.subr.mxu0 0.0
          %3202 = vmatpush1.msra.mxu0 0.0
          %3203 = vmatprep.subr.mxu0 0.0
          %3204 = vmatpush1.msra.mxu0 0.0
          %3205 = vmatprep.subr.mxu0 0.0
          %3206 = vmatpush1.msra.mxu0 0.0
          %3207 = vmatprep.subr.mxu0 0.0
          %3208 = vmatpush1.msra.mxu0 0.0
          %3209 = vmatprep.subr.mxu0 0.0
          %3210 = vmatpush1.msra.mxu0 0.0
          %3211 = vmatprep.subr.mxu0 0.0
          %3212 = vmatpush1.msra.mxu0 0.0
          %3213 = vmatprep.subr.mxu0 0.0
          %3214 = vmatpush1.msra.mxu0 0.0
          %3215 = vmatprep.subr.mxu0 0.0
          %3216 = vmatpush1.msra.mxu0 0.0
          %3217 = vmatprep.subr.mxu0 0.0
          %3218 = vmatpush1.msra.mxu0 0.0
          %3219 = vmatprep.subr.mxu0 0.0
          %3220 = vmatpush1.msra.mxu0 0.0
          %3221 = vmatprep.subr.mxu0 0.0
          %3222 = vmatpush1.msra.mxu0 0.0
          %3223 = vmatprep.subr.mxu0 0.0
          %3224 = vmatpush1.msra.mxu0 0.0
          %3225 = vmatprep.subr.mxu0 0.0
          %3226 = vmatpush1.msra.mxu0 0.0
          %3227 = vmatprep.subr.mxu0 0.0
          %3228 = vmatpush1.msra.mxu0 0.0
          %3229 = vmatprep.subr.mxu0 0.0
          %3230 = vmatpush1.msra.mxu0 0.0
          %3231 = vmatprep.subr.mxu0 0.0
          %3232 = vmatpush1.msra.mxu0 0.0
          %3233 = vmatprep.subr.mxu0 0.0
          %3234 = vmatpush1.msra.mxu0 0.0
          %3235 = vmatprep.subr.mxu0 0.0
          %3236 = vmatpush1.msra.mxu0 0.0
          %3237 = vmatprep.subr.mxu0 0.0
          %3238 = vmatpush1.msra.mxu0 0.0
          %3239 = vmatprep.subr.mxu0 0.0
          %3240 = vmatpush1.msra.mxu0 0.0
          %3241 = vmatprep.subr.mxu0 0.0
          %3242 = vmatpush1.msra.mxu0 0.0
          %3243 = vmatprep.subr.mxu0 0.0
          %3244 = vmatpush1.msra.mxu0 0.0
          %3245 = vmatprep.subr.mxu0 0.0
          %3246 = vmatpush1.msra.mxu0 0.0
          %3247 = vmatprep.subr.mxu0 0.0
          %3248 = vmatpush1.msra.mxu0 0.0
          %3249 = vmatprep.subr.mxu0 0.0
          %3250 = vmatpush1.msra.mxu0 0.0
          %3251 = vmatprep.subr.mxu0 0.0
          %3252 = vmatpush1.msra.mxu0 0.0
          %3253 = vmatprep.subr.mxu0 0.0
          %3254 = vmatpush1.msra.mxu0 0.0
          %3255 = vmatprep.subr.mxu0 0.0
          %3256 = vmatpush1.msra.mxu0 0.0
          %3257 = vmatprep.subr.mxu0 0.0
          %3258 = vmatpush1.msra.mxu0 0.0
          %3259 = vmatprep.mubr.f32.mxu0 0.0
          %v3260 = vand.u32 %v3039, 4294901760
          %v3261 = vsub.f32 %v3039, %v3260
          %3262 = vmatmul.mubr.f32.gmra.mrb[0].mxu0 %v3261
          %v3263 = vpop.f32.mrb[0].mxu0
          %v3264 = vadd.f32 %v3190, %v3263
          %v3265 = vpop.f32.mrb[0].mxu0
          %3266 = vdwg.mxu0
          %3267 = vmatprep.subr.mxu0 0.0
          %v3268 = vand.u32 %v2590, 4294901760
          %3269 = vmatpush1.msra.mxu0 %v3268
          %3270 = vmatprep.subr.mxu0 0.0
          %3271 = vmatpush1.msra.mxu0 0.0
          %3272 = vmatprep.subr.mxu0 0.0
          %3273 = vmatpush1.msra.mxu0 0.0
          %3274 = vmatprep.subr.mxu0 0.0
          %3275 = vmatpush1.msra.mxu0 0.0
          %3276 = vmatprep.subr.mxu0 0.0
          %3277 = vmatpush1.msra.mxu0 0.0
          %3278 = vmatprep.subr.mxu0 0.0
          %3279 = vmatpush1.msra.mxu0 0.0
          %3280 = vmatprep.subr.mxu0 0.0
          %3281 = vmatpush1.msra.mxu0 0.0
          %3282 = vmatprep.subr.mxu0 0.0
          %3283 = vmatpush1.msra.mxu0 0.0
          %3284 = vmatprep.subr.mxu0 0.0
          %3285 = vmatpush1.msra.mxu0 0.0
          %3286 = vmatprep.subr.mxu0 0.0
          %3287 = vmatpush1.msra.mxu0 0.0
          %3288 = vmatprep.subr.mxu0 0.0
          %3289 = vmatpush1.msra.mxu0 0.0
          %3290 = vmatprep.subr.mxu0 0.0
          %3291 = vmatpush1.msra.mxu0 0.0
          %3292 = vmatprep.subr.mxu0 0.0
          %3293 = vmatpush1.msra.mxu0 0.0
          %3294 = vmatprep.subr.mxu0 0.0
          %3295 = vmatpush1.msra.mxu0 0.0
          %3296 = vmatprep.subr.mxu0 0.0
          %3297 = vmatpush1.msra.mxu0 0.0
          %3298 = vmatprep.subr.mxu0 0.0
          %3299 = vmatpush1.msra.mxu0 0.0
          %3300 = vmatprep.subr.mxu0 0.0
          %3301 = vmatpush1.msra.mxu0 0.0
          %3302 = vmatprep.subr.mxu0 0.0
          %3303 = vmatpush1.msra.mxu0 0.0
          %3304 = vmatprep.subr.mxu0 0.0
          %3305 = vmatpush1.msra.mxu0 0.0
          %3306 = vmatprep.subr.mxu0 0.0
          %3307 = vmatpush1.msra.mxu0 0.0
          %3308 = vmatprep.subr.mxu0 0.0
          %3309 = vmatpush1.msra.mxu0 0.0
          %3310 = vmatprep.subr.mxu0 0.0
          %3311 = vmatpush1.msra.mxu0 0.0
          %3312 = vmatprep.subr.mxu0 0.0
          %3313 = vmatpush1.msra.mxu0 0.0
          %3314 = vmatprep.subr.mxu0 0.0
          %3315 = vmatpush1.msra.mxu0 0.0
          %3316 = vmatprep.subr.mxu0 0.0
          %3317 = vmatpush1.msra.mxu0 0.0
          %3318 = vmatprep.subr.mxu0 0.0
          %3319 = vmatpush1.msra.mxu0 0.0
          %3320 = vmatprep.subr.mxu0 0.0
          %3321 = vmatpush1.msra.mxu0 0.0
          %3322 = vmatprep.subr.mxu0 0.0
          %3323 = vmatpush1.msra.mxu0 0.0
          %3324 = vmatprep.subr.mxu0 0.0
          %3325 = vmatpush1.msra.mxu0 0.0
          %3326 = vmatprep.subr.mxu0 0.0
          %3327 = vmatpush1.msra.mxu0 0.0
          %3328 = vmatprep.subr.mxu0 0.0
          %3329 = vmatpush1.msra.mxu0 0.0
          %3330 = vmatprep.subr.mxu0 0.0
          %3331 = vmatpush1.msra.mxu0 0.0
          %3332 = vmatprep.mubr.f32.mxu0 0.0
          %v3333 = vand.u32 %v3039, 4294901760
          %v3334 = vsub.f32 %v3039, %v3333
          %v3335 = vand.u32 %v3334, 4294901760
          %3336 = vmatmul.mubr.f32.gmra.mrb[0].mxu0 %v3335
          %v3337 = vpop.f32.mrb[0].mxu0
          %v3338 = vadd.f32 %v3264, %v3337
          %v3339 = vpop.f32.mrb[0].mxu0
          %3340 = vdwg.mxu0
          %3341 = vmatprep.subr.mxu0 0.0
          %v3342 = vand.u32 %v2590, 4294901760
          %v3343 = vsub.f32 %v2590, %v3342
          %v3344 = vand.u32 %v3343, 4294901760
          %3345 = vmatpush1.msra.mxu0 %v3344
          %3346 = vmatprep.subr.mxu0 0.0
          %3347 = vmatpush1.msra.mxu0 0.0
          %3348 = vmatprep.subr.mxu0 0.0
          %3349 = vmatpush1.msra.mxu0 0.0
          %3350 = vmatprep.subr.mxu0 0.0
          %3351 = vmatpush1.msra.mxu0 0.0
          %3352 = vmatprep.subr.mxu0 0.0
          %3353 = vmatpush1.msra.mxu0 0.0
          %3354 = vmatprep.subr.mxu0 0.0
          %3355 = vmatpush1.msra.mxu0 0.0
          %3356 = vmatprep.subr.mxu0 0.0
          %3357 = vmatpush1.msra.mxu0 0.0
          %3358 = vmatprep.subr.mxu0 0.0
          %3359 = vmatpush1.msra.mxu0 0.0
          %3360 = vmatprep.subr.mxu0 0.0
          %3361 = vmatpush1.msra.mxu0 0.0
          %3362 = vmatprep.subr.mxu0 0.0
          %3363 = vmatpush1.msra.mxu0 0.0
          %3364 = vmatprep.subr.mxu0 0.0
          %3365 = vmatpush1.msra.mxu0 0.0
          %3366 = vmatprep.subr.mxu0 0.0
          %3367 = vmatpush1.msra.mxu0 0.0
          %3368 = vmatprep.subr.mxu0 0.0
          %3369 = vmatpush1.msra.mxu0 0.0
          %3370 = vmatprep.subr.mxu0 0.0
          %3371 = vmatpush1.msra.mxu0 0.0
          %3372 = vmatprep.subr.mxu0 0.0
          %3373 = vmatpush1.msra.mxu0 0.0
          %3374 = vmatprep.subr.mxu0 0.0
          %3375 = vmatpush1.msra.mxu0 0.0
          %3376 = vmatprep.subr.mxu0 0.0
          %3377 = vmatpush1.msra.mxu0 0.0
          %3378 = vmatprep.subr.mxu0 0.0
          %3379 = vmatpush1.msra.mxu0 0.0
          %3380 = vmatprep.subr.mxu0 0.0
          %3381 = vmatpush1.msra.mxu0 0.0
          %3382 = vmatprep.subr.mxu0 0.0
          %3383 = vmatpush1.msra.mxu0 0.0
          %3384 = vmatprep.subr.mxu0 0.0
          %3385 = vmatpush1.msra.mxu0 0.0
          %3386 = vmatprep.subr.mxu0 0.0
          %3387 = vmatpush1.msra.mxu0 0.0
          %3388 = vmatprep.subr.mxu0 0.0
          %3389 = vmatpush1.msra.mxu0 0.0
          %3390 = vmatprep.subr.mxu0 0.0
          %3391 = vmatpush1.msra.mxu0 0.0
          %3392 = vmatprep.subr.mxu0 0.0
          %3393 = vmatpush1.msra.mxu0 0.0
          %3394 = vmatprep.subr.mxu0 0.0
          %3395 = vmatpush1.msra.mxu0 0.0
          %3396 = vmatprep.subr.mxu0 0.0
          %3397 = vmatpush1.msra.mxu0 0.0
          %3398 = vmatprep.subr.mxu0 0.0
          %3399 = vmatpush1.msra.mxu0 0.0
          %3400 = vmatprep.subr.mxu0 0.0
          %3401 = vmatpush1.msra.mxu0 0.0
          %3402 = vmatprep.subr.mxu0 0.0
          %3403 = vmatpush1.msra.mxu0 0.0
          %3404 = vmatprep.subr.mxu0 0.0
          %3405 = vmatpush1.msra.mxu0 0.0
          %3406 = vmatprep.subr.mxu0 0.0
          %3407 = vmatpush1.msra.mxu0 0.0
          %3408 = vmatprep.mubr.f32.mxu0 0.0
          %v3409 = vand.u32 %v3039, 4294901760
          %3410 = vmatmul.mubr.f32.gmra.mrb[0].mxu0 %v3409
          %v3411 = vpop.f32.mrb[0].mxu0
          %v3412 = vadd.f32 %v3338, %v3411
          %v3413 = vpop.f32.mrb[0].mxu0
          %3414 = vdwg.mxu0
          %3415 = vmatprep.subr.mxu0 0.0
          %v3416 = vand.u32 %v2590, 4294901760
          %3417 = vmatpush1.msra.mxu0 %v3416
          %3418 = vmatprep.subr.mxu0 0.0
          %3419 = vmatpush1.msra.mxu0 0.0
          %3420 = vmatprep.subr.mxu0 0.0
          %3421 = vmatpush1.msra.mxu0 0.0
          %3422 = vmatprep.subr.mxu0 0.0
          %3423 = vmatpush1.msra.mxu0 0.0
          %3424 = vmatprep.subr.mxu0 0.0
          %3425 = vmatpush1.msra.mxu0 0.0
          %3426 = vmatprep.subr.mxu0 0.0
          %3427 = vmatpush1.msra.mxu0 0.0
          %3428 = vmatprep.subr.mxu0 0.0
          %3429 = vmatpush1.msra.mxu0 0.0
          %3430 = vmatprep.subr.mxu0 0.0
          %3431 = vmatpush1.msra.mxu0 0.0
          %3432 = vmatprep.subr.mxu0 0.0
          %3433 = vmatpush1.msra.mxu0 0.0
          %3434 = vmatprep.subr.mxu0 0.0
          %3435 = vmatpush1.msra.mxu0 0.0
          %3436 = vmatprep.subr.mxu0 0.0
          %3437 = vmatpush1.msra.mxu0 0.0
          %3438 = vmatprep.subr.mxu0 0.0
          %3439 = vmatpush1.msra.mxu0 0.0
          %3440 = vmatprep.subr.mxu0 0.0
          %3441 = vmatpush1.msra.mxu0 0.0
          %3442 = vmatprep.subr.mxu0 0.0
          %3443 = vmatpush1.msra.mxu0 0.0
          %3444 = vmatprep.subr.mxu0 0.0
          %3445 = vmatpush1.msra.mxu0 0.0
          %3446 = vmatprep.subr.mxu0 0.0
          %3447 = vmatpush1.msra.mxu0 0.0
          %3448 = vmatprep.subr.mxu0 0.0
          %3449 = vmatpush1.msra.mxu0 0.0
          %3450 = vmatprep.subr.mxu0 0.0
          %3451 = vmatpush1.msra.mxu0 0.0
          %3452 = vmatprep.subr.mxu0 0.0
          %3453 = vmatpush1.msra.mxu0 0.0
          %3454 = vmatprep.subr.mxu0 0.0
          %3455 = vmatpush1.msra.mxu0 0.0
          %3456 = vmatprep.subr.mxu0 0.0
          %3457 = vmatpush1.msra.mxu0 0.0
          %3458 = vmatprep.subr.mxu0 0.0
          %3459 = vmatpush1.msra.mxu0 0.0
          %3460 = vmatprep.subr.mxu0 0.0
          %3461 = vmatpush1.msra.mxu0 0.0
          %3462 = vmatprep.subr.mxu0 0.0
          %3463 = vmatpush1.msra.mxu0 0.0
          %3464 = vmatprep.subr.mxu0 0.0
          %3465 = vmatpush1.msra.mxu0 0.0
          %3466 = vmatprep.subr.mxu0 0.0
          %3467 = vmatpush1.msra.mxu0 0.0
          %3468 = vmatprep.subr.mxu0 0.0
          %3469 = vmatpush1.msra.mxu0 0.0
          %3470 = vmatprep.subr.mxu0 0.0
          %3471 = vmatpush1.msra.mxu0 0.0
          %3472 = vmatprep.subr.mxu0 0.0
          %3473 = vmatpush1.msra.mxu0 0.0
          %3474 = vmatprep.subr.mxu0 0.0
          %3475 = vmatpush1.msra.mxu0 0.0
          %3476 = vmatprep.subr.mxu0 0.0
          %3477 = vmatpush1.msra.mxu0 0.0
          %3478 = vmatprep.subr.mxu0 0.0
          %3479 = vmatpush1.msra.mxu0 0.0
          %3480 = vmatprep.mubr.f32.mxu0 0.0
          %v3481 = vand.u32 %v3039, 4294901760
          %3482 = vmatmul.mubr.f32.gmra.mrb[0].mxu0 %v3481
          %v3483 = vpop.f32.mrb[0].mxu0
          %v3484 = vadd.f32 %v3412, %v3483
          %v3485 = vpop.f32.mrb[0].mxu0
          %3486 = vdwg.mxu0
          %v3487 = vsel %vm2584, %v2575, 0
          %v3489 = vsel %vm2588, %v2583, 0
          %3491 = vmatprep.subr.mxu0 0.0
          %v3492 = vand.u32 %v3489, 4294901760
          %3493 = vmatpush1.msra.mxu0 %v3492
          %3494 = vmatprep.subr.mxu0 0.0
          %3495 = vmatpush1.msra.mxu0 0.0
          %3496 = vmatprep.subr.mxu0 0.0
          %3497 = vmatpush1.msra.mxu0 0.0
          %3498 = vmatprep.subr.mxu0 0.0
          %3499 = vmatpush1.msra.mxu0 0.0
          %3500 = vmatprep.subr.mxu0 0.0
          %3501 = vmatpush1.msra.mxu0 0.0
          %3502 = vmatprep.subr.mxu0 0.0
          %3503 = vmatpush1.msra.mxu0 0.0
          %3504 = vmatprep.subr.mxu0 0.0
          %3505 = vmatpush1.msra.mxu0 0.0
          %3506 = vmatprep.subr.mxu0 0.0
          %3507 = vmatpush1.msra.mxu0 0.0
          %3508 = vmatprep.subr.mxu0 0.0
          %3509 = vmatpush1.msra.mxu0 0.0
          %3510 = vmatprep.subr.mxu0 0.0
          %3511 = vmatpush1.msra.mxu0 0.0
          %3512 = vmatprep.subr.mxu0 0.0
          %3513 = vmatpush1.msra.mxu0 0.0
          %3514 = vmatprep.subr.mxu0 0.0
          %3515 = vmatpush1.msra.mxu0 0.0
          %3516 = vmatprep.subr.mxu0 0.0
          %3517 = vmatpush1.msra.mxu0 0.0
          %3518 = vmatprep.subr.mxu0 0.0
          %3519 = vmatpush1.msra.mxu0 0.0
          %3520 = vmatprep.subr.mxu0 0.0
          %3521 = vmatpush1.msra.mxu0 0.0
          %3522 = vmatprep.subr.mxu0 0.0
          %3523 = vmatpush1.msra.mxu0 0.0
          %3524 = vmatprep.subr.mxu0 0.0
          %3525 = vmatpush1.msra.mxu0 0.0
          %3526 = vmatprep.subr.mxu0 0.0
          %3527 = vmatpush1.msra.mxu0 0.0
          %3528 = vmatprep.subr.mxu0 0.0
          %3529 = vmatpush1.msra.mxu0 0.0
          %3530 = vmatprep.subr.mxu0 0.0
          %3531 = vmatpush1.msra.mxu0 0.0
          %3532 = vmatprep.subr.mxu0 0.0
          %3533 = vmatpush1.msra.mxu0 0.0
          %3534 = vmatprep.subr.mxu0 0.0
          %3535 = vmatpush1.msra.mxu0 0.0
          %3536 = vmatprep.subr.mxu0 0.0
          %3537 = vmatpush1.msra.mxu0 0.0
          %3538 = vmatprep.subr.mxu0 0.0
          %3539 = vmatpush1.msra.mxu0 0.0
          %3540 = vmatprep.subr.mxu0 0.0
          %3541 = vmatpush1.msra.mxu0 0.0
          %3542 = vmatprep.subr.mxu0 0.0
          %3543 = vmatpush1.msra.mxu0 0.0
          %3544 = vmatprep.subr.mxu0 0.0
          %3545 = vmatpush1.msra.mxu0 0.0
          %3546 = vmatprep.subr.mxu0 0.0
          %3547 = vmatpush1.msra.mxu0 0.0
          %3548 = vmatprep.subr.mxu0 0.0
          %3549 = vmatpush1.msra.mxu0 0.0
          %3550 = vmatprep.subr.mxu0 0.0
          %3551 = vmatpush1.msra.mxu0 0.0
          %3552 = vmatprep.subr.mxu0 0.0
          %3553 = vmatpush1.msra.mxu0 0.0
          %3554 = vmatprep.subr.mxu0 0.0
          %3555 = vmatpush1.msra.mxu0 0.0
          %3556 = vmatprep.mubr.f32.mxu0 0.0
          %v3557 = vand.u32 %v3487, 4294901760
          %v3558 = vsub.f32 %v3487, %v3557
          %v3559 = vand.u32 %v3558, 4294901760
          %v3560 = vsub.f32 %v3558, %v3559
          %v3561 = vand.u32 %v3560, 4294901760
          %3562 = vmatmul.mubr.f32.gmra.mrb[0].mxu0 %v3561
          %v3563 = vpop.f32.mrb[0].mxu0
          %v3564 = vadd.f32 0.0, %v3563
          %v3565 = vpop.f32.mrb[0].mxu0
          %3566 = vdwg.mxu0
          %3567 = vmatprep.subr.mxu0 0.0
          %v3568 = vand.u32 %v3489, 4294901760
          %v3569 = vsub.f32 %v3489, %v3568
          %v3570 = vand.u32 %v3569, 4294901760
          %v3571 = vsub.f32 %v3569, %v3570
          %v3572 = vand.u32 %v3571, 4294901760
          %3573 = vmatpush1.msra.mxu0 %v3572
          %3574 = vmatprep.subr.mxu0 0.0
          %3575 = vmatpush1.msra.mxu0 0.0
          %3576 = vmatprep.subr.mxu0 0.0
          %3577 = vmatpush1.msra.mxu0 0.0
          %3578 = vmatprep.subr.mxu0 0.0
          %3579 = vmatpush1.msra.mxu0 0.0
          %3580 = vmatprep.subr.mxu0 0.0
          %3581 = vmatpush1.msra.mxu0 0.0
          %3582 = vmatprep.subr.mxu0 0.0
          %3583 = vmatpush1.msra.mxu0 0.0
          %3584 = vmatprep.subr.mxu0 0.0
          %3585 = vmatpush1.msra.mxu0 0.0
          %3586 = vmatprep.subr.mxu0 0.0
          %3587 = vmatpush1.msra.mxu0 0.0
          %3588 = vmatprep.subr.mxu0 0.0
          %3589 = vmatpush1.msra.mxu0 0.0
          %3590 = vmatprep.subr.mxu0 0.0
          %3591 = vmatpush1.msra.mxu0 0.0
          %3592 = vmatprep.subr.mxu0 0.0
          %3593 = vmatpush1.msra.mxu0 0.0
          %3594 = vmatprep.subr.mxu0 0.0
          %3595 = vmatpush1.msra.mxu0 0.0
          %3596 = vmatprep.subr.mxu0 0.0
          %3597 = vmatpush1.msra.mxu0 0.0
          %3598 = vmatprep.subr.mxu0 0.0
          %3599 = vmatpush1.msra.mxu0 0.0
          %3600 = vmatprep.subr.mxu0 0.0
          %3601 = vmatpush1.msra.mxu0 0.0
          %3602 = vmatprep.subr.mxu0 0.0
          %3603 = vmatpush1.msra.mxu0 0.0
          %3604 = vmatprep.subr.mxu0 0.0
          %3605 = vmatpush1.msra.mxu0 0.0
          %3606 = vmatprep.subr.mxu0 0.0
          %3607 = vmatpush1.msra.mxu0 0.0
          %3608 = vmatprep.subr.mxu0 0.0
          %3609 = vmatpush1.msra.mxu0 0.0
          %3610 = vmatprep.subr.mxu0 0.0
          %3611 = vmatpush1.msra.mxu0 0.0
          %3612 = vmatprep.subr.mxu0 0.0
          %3613 = vmatpush1.msra.mxu0 0.0
          %3614 = vmatprep.subr.mxu0 0.0
          %3615 = vmatpush1.msra.mxu0 0.0
          %3616 = vmatprep.subr.mxu0 0.0
          %3617 = vmatpush1.msra.mxu0 0.0
          %3618 = vmatprep.subr.mxu0 0.0
          %3619 = vmatpush1.msra.mxu0 0.0
          %3620 = vmatprep.subr.mxu0 0.0
          %3621 = vmatpush1.msra.mxu0 0.0
          %3622 = vmatprep.subr.mxu0 0.0
          %3623 = vmatpush1.msra.mxu0 0.0
          %3624 = vmatprep.subr.mxu0 0.0
          %3625 = vmatpush1.msra.mxu0 0.0
          %3626 = vmatprep.subr.mxu0 0.0
          %3627 = vmatpush1.msra.mxu0 0.0
          %3628 = vmatprep.subr.mxu0 0.0
          %3629 = vmatpush1.msra.mxu0 0.0
          %3630 = vmatprep.subr.mxu0 0.0
          %3631 = vmatpush1.msra.mxu0 0.0
          %3632 = vmatprep.subr.mxu0 0.0
          %3633 = vmatpush1.msra.mxu0 0.0
          %3634 = vmatprep.subr.mxu0 0.0
          %3635 = vmatpush1.msra.mxu0 0.0
          %3636 = vmatprep.mubr.f32.mxu0 0.0
          %v3637 = vand.u32 %v3487, 4294901760
          %3638 = vmatmul.mubr.f32.gmra.mrb[0].mxu0 %v3637
          %v3639 = vpop.f32.mrb[0].mxu0
          %v3640 = vadd.f32 %v3564, %v3639
          %v3641 = vpop.f32.mrb[0].mxu0
          %3642 = vdwg.mxu0
          %3643 = vmatprep.subr.mxu0 0.0
          %v3644 = vand.u32 %v3489, 4294901760
          %v3645 = vsub.f32 %v3489, %v3644
          %3646 = vmatpush1.msra.mxu0 %v3645
          %3647 = vmatprep.subr.mxu0 0.0
          %3648 = vmatpush1.msra.mxu0 0.0
          %3649 = vmatprep.subr.mxu0 0.0
          %3650 = vmatpush1.msra.mxu0 0.0
          %3651 = vmatprep.subr.mxu0 0.0
          %3652 = vmatpush1.msra.mxu0 0.0
          %3653 = vmatprep.subr.mxu0 0.0
          %3654 = vmatpush1.msra.mxu0 0.0
          %3655 = vmatprep.subr.mxu0 0.0
          %3656 = vmatpush1.msra.mxu0 0.0
          %3657 = vmatprep.subr.mxu0 0.0
          %3658 = vmatpush1.msra.mxu0 0.0
          %3659 = vmatprep.subr.mxu0 0.0
          %3660 = vmatpush1.msra.mxu0 0.0
          %3661 = vmatprep.subr.mxu0 0.0
          %3662 = vmatpush1.msra.mxu0 0.0
          %3663 = vmatprep.subr.mxu0 0.0
          %3664 = vmatpush1.msra.mxu0 0.0
          %3665 = vmatprep.subr.mxu0 0.0
          %3666 = vmatpush1.msra.mxu0 0.0
          %3667 = vmatprep.subr.mxu0 0.0
          %3668 = vmatpush1.msra.mxu0 0.0
          %3669 = vmatprep.subr.mxu0 0.0
          %3670 = vmatpush1.msra.mxu0 0.0
          %3671 = vmatprep.subr.mxu0 0.0
          %3672 = vmatpush1.msra.mxu0 0.0
          %3673 = vmatprep.subr.mxu0 0.0
          %3674 = vmatpush1.msra.mxu0 0.0
          %3675 = vmatprep.subr.mxu0 0.0
          %3676 = vmatpush1.msra.mxu0 0.0
          %3677 = vmatprep.subr.mxu0 0.0
          %3678 = vmatpush1.msra.mxu0 0.0
          %3679 = vmatprep.subr.mxu0 0.0
          %3680 = vmatpush1.msra.mxu0 0.0
          %3681 = vmatprep.subr.mxu0 0.0
          %3682 = vmatpush1.msra.mxu0 0.0
          %3683 = vmatprep.subr.mxu0 0.0
          %3684 = vmatpush1.msra.mxu0 0.0
          %3685 = vmatprep.subr.mxu0 0.0
          %3686 = vmatpush1.msra.mxu0 0.0
          %3687 = vmatprep.subr.mxu0 0.0
          %3688 = vmatpush1.msra.mxu0 0.0
          %3689 = vmatprep.subr.mxu0 0.0
          %3690 = vmatpush1.msra.mxu0 0.0
          %3691 = vmatprep.subr.mxu0 0.0
          %3692 = vmatpush1.msra.mxu0 0.0
          %3693 = vmatprep.subr.mxu0 0.0
          %3694 = vmatpush1.msra.mxu0 0.0
          %3695 = vmatprep.subr.mxu0 0.0
          %3696 = vmatpush1.msra.mxu0 0.0
          %3697 = vmatprep.subr.mxu0 0.0
          %3698 = vmatpush1.msra.mxu0 0.0
          %3699 = vmatprep.subr.mxu0 0.0
          %3700 = vmatpush1.msra.mxu0 0.0
          %3701 = vmatprep.subr.mxu0 0.0
          %3702 = vmatpush1.msra.mxu0 0.0
          %3703 = vmatprep.subr.mxu0 0.0
          %3704 = vmatpush1.msra.mxu0 0.0
          %3705 = vmatprep.subr.mxu0 0.0
          %3706 = vmatpush1.msra.mxu0 0.0
          %3707 = vmatprep.subr.mxu0 0.0
          %3708 = vmatpush1.msra.mxu0 0.0
          %3709 = vmatprep.mubr.f32.mxu0 0.0
          %v3710 = vand.u32 %v3487, 4294901760
          %v3711 = vsub.f32 %v3487, %v3710
          %3712 = vmatmul.mubr.f32.gmra.mrb[0].mxu0 %v3711
          %v3713 = vpop.f32.mrb[0].mxu0
          %v3714 = vadd.f32 %v3640, %v3713
          %v3715 = vpop.f32.mrb[0].mxu0
          %3716 = vdwg.mxu0
          %3717 = vmatprep.subr.mxu0 0.0
          %v3718 = vand.u32 %v3489, 4294901760
          %3719 = vmatpush1.msra.mxu0 %v3718
          %3720 = vmatprep.subr.mxu0 0.0
          %3721 = vmatpush1.msra.mxu0 0.0
          %3722 = vmatprep.subr.mxu0 0.0
          %3723 = vmatpush1.msra.mxu0 0.0
          %3724 = vmatprep.subr.mxu0 0.0
          %3725 = vmatpush1.msra.mxu0 0.0
          %3726 = vmatprep.subr.mxu0 0.0
          %3727 = vmatpush1.msra.mxu0 0.0
          %3728 = vmatprep.subr.mxu0 0.0
          %3729 = vmatpush1.msra.mxu0 0.0
          %3730 = vmatprep.subr.mxu0 0.0
          %3731 = vmatpush1.msra.mxu0 0.0
          %3732 = vmatprep.subr.mxu0 0.0
          %3733 = vmatpush1.msra.mxu0 0.0
          %3734 = vmatprep.subr.mxu0 0.0
          %3735 = vmatpush1.msra.mxu0 0.0
          %3736 = vmatprep.subr.mxu0 0.0
          %3737 = vmatpush1.msra.mxu0 0.0
          %3738 = vmatprep.subr.mxu0 0.0
          %3739 = vmatpush1.msra.mxu0 0.0
          %3740 = vmatprep.subr.mxu0 0.0
          %3741 = vmatpush1.msra.mxu0 0.0
          %3742 = vmatprep.subr.mxu0 0.0
          %3743 = vmatpush1.msra.mxu0 0.0
          %3744 = vmatprep.subr.mxu0 0.0
          %3745 = vmatpush1.msra.mxu0 0.0
          %3746 = vmatprep.subr.mxu0 0.0
          %3747 = vmatpush1.msra.mxu0 0.0
          %3748 = vmatprep.subr.mxu0 0.0
          %3749 = vmatpush1.msra.mxu0 0.0
          %3750 = vmatprep.subr.mxu0 0.0
          %3751 = vmatpush1.msra.mxu0 0.0
          %3752 = vmatprep.subr.mxu0 0.0
          %3753 = vmatpush1.msra.mxu0 0.0
          %3754 = vmatprep.subr.mxu0 0.0
          %3755 = vmatpush1.msra.mxu0 0.0
          %3756 = vmatprep.subr.mxu0 0.0
          %3757 = vmatpush1.msra.mxu0 0.0
          %3758 = vmatprep.subr.mxu0 0.0
          %3759 = vmatpush1.msra.mxu0 0.0
          %3760 = vmatprep.subr.mxu0 0.0
          %3761 = vmatpush1.msra.mxu0 0.0
          %3762 = vmatprep.subr.mxu0 0.0
          %3763 = vmatpush1.msra.mxu0 0.0
          %3764 = vmatprep.subr.mxu0 0.0
          %3765 = vmatpush1.msra.mxu0 0.0
          %3766 = vmatprep.subr.mxu0 0.0
          %3767 = vmatpush1.msra.mxu0 0.0
          %3768 = vmatprep.subr.mxu0 0.0
          %3769 = vmatpush1.msra.mxu0 0.0
          %3770 = vmatprep.subr.mxu0 0.0
          %3771 = vmatpush1.msra.mxu0 0.0
          %3772 = vmatprep.subr.mxu0 0.0
          %3773 = vmatpush1.msra.mxu0 0.0
          %3774 = vmatprep.subr.mxu0 0.0
          %3775 = vmatpush1.msra.mxu0 0.0
          %3776 = vmatprep.subr.mxu0 0.0
          %3777 = vmatpush1.msra.mxu0 0.0
          %3778 = vmatprep.subr.mxu0 0.0
          %3779 = vmatpush1.msra.mxu0 0.0
          %3780 = vmatprep.subr.mxu0 0.0
          %3781 = vmatpush1.msra.mxu0 0.0
          %3782 = vmatprep.mubr.f32.mxu0 0.0
          %v3783 = vand.u32 %v3487, 4294901760
          %v3784 = vsub.f32 %v3487, %v3783
          %v3785 = vand.u32 %v3784, 4294901760
          %3786 = vmatmul.mubr.f32.gmra.mrb[0].mxu0 %v3785
          %v3787 = vpop.f32.mrb[0].mxu0
          %v3788 = vadd.f32 %v3714, %v3787
          %v3789 = vpop.f32.mrb[0].mxu0
          %3790 = vdwg.mxu0
          %3791 = vmatprep.subr.mxu0 0.0
          %v3792 = vand.u32 %v3489, 4294901760
          %v3793 = vsub.f32 %v3489, %v3792
          %v3794 = vand.u32 %v3793, 4294901760
          %3795 = vmatpush1.msra.mxu0 %v3794
          %3796 = vmatprep.subr.mxu0 0.0
          %3797 = vmatpush1.msra.mxu0 0.0
          %3798 = vmatprep.subr.mxu0 0.0
          %3799 = vmatpush1.msra.mxu0 0.0
          %3800 = vmatprep.subr.mxu0 0.0
          %3801 = vmatpush1.msra.mxu0 0.0
          %3802 = vmatprep.subr.mxu0 0.0
          %3803 = vmatpush1.msra.mxu0 0.0
          %3804 = vmatprep.subr.mxu0 0.0
          %3805 = vmatpush1.msra.mxu0 0.0
          %3806 = vmatprep.subr.mxu0 0.0
          %3807 = vmatpush1.msra.mxu0 0.0
          %3808 = vmatprep.subr.mxu0 0.0
          %3809 = vmatpush1.msra.mxu0 0.0
          %3810 = vmatprep.subr.mxu0 0.0
          %3811 = vmatpush1.msra.mxu0 0.0
          %3812 = vmatprep.subr.mxu0 0.0
          %3813 = vmatpush1.msra.mxu0 0.0
          %3814 = vmatprep.subr.mxu0 0.0
          %3815 = vmatpush1.msra.mxu0 0.0
          %3816 = vmatprep.subr.mxu0 0.0
          %3817 = vmatpush1.msra.mxu0 0.0
          %3818 = vmatprep.subr.mxu0 0.0
          %3819 = vmatpush1.msra.mxu0 0.0
          %3820 = vmatprep.subr.mxu0 0.0
          %3821 = vmatpush1.msra.mxu0 0.0
          %3822 = vmatprep.subr.mxu0 0.0
          %3823 = vmatpush1.msra.mxu0 0.0
          %3824 = vmatprep.subr.mxu0 0.0
          %3825 = vmatpush1.msra.mxu0 0.0
          %3826 = vmatprep.subr.mxu0 0.0
          %3827 = vmatpush1.msra.mxu0 0.0
          %3828 = vmatprep.subr.mxu0 0.0
          %3829 = vmatpush1.msra.mxu0 0.0
          %3830 = vmatprep.subr.mxu0 0.0
          %3831 = vmatpush1.msra.mxu0 0.0
          %3832 = vmatprep.subr.mxu0 0.0
          %3833 = vmatpush1.msra.mxu0 0.0
          %3834 = vmatprep.subr.mxu0 0.0
          %3835 = vmatpush1.msra.mxu0 0.0
          %3836 = vmatprep.subr.mxu0 0.0
          %3837 = vmatpush1.msra.mxu0 0.0
          %3838 = vmatprep.subr.mxu0 0.0
          %3839 = vmatpush1.msra.mxu0 0.0
          %3840 = vmatprep.subr.mxu0 0.0
          %3841 = vmatpush1.msra.mxu0 0.0
          %3842 = vmatprep.subr.mxu0 0.0
          %3843 = vmatpush1.msra.mxu0 0.0
          %3844 = vmatprep.subr.mxu0 0.0
          %3845 = vmatpush1.msra.mxu0 0.0
          %3846 = vmatprep.subr.mxu0 0.0
          %3847 = vmatpush1.msra.mxu0 0.0
          %3848 = vmatprep.subr.mxu0 0.0
          %3849 = vmatpush1.msra.mxu0 0.0
          %3850 = vmatprep.subr.mxu0 0.0
          %3851 = vmatpush1.msra.mxu0 0.0
          %3852 = vmatprep.subr.mxu0 0.0
          %3853 = vmatpush1.msra.mxu0 0.0
          %3854 = vmatprep.subr.mxu0 0.0
          %3855 = vmatpush1.msra.mxu0 0.0
          %3856 = vmatprep.subr.mxu0 0.0
          %3857 = vmatpush1.msra.mxu0 0.0
          %3858 = vmatprep.mubr.f32.mxu0 0.0
          %v3859 = vand.u32 %v3487, 4294901760
          %3860 = vmatmul.mubr.f32.gmra.mrb[0].mxu0 %v3859
          %v3861 = vpop.f32.mrb[0].mxu0
          %v3862 = vadd.f32 %v3788, %v3861
          %v3863 = vpop.f32.mrb[0].mxu0
          %3864 = vdwg.mxu0
          %3865 = vmatprep.subr.mxu0 0.0
          %v3866 = vand.u32 %v3489, 4294901760
          %3867 = vmatpush1.msra.mxu0 %v3866
          %3868 = vmatprep.subr.mxu0 0.0
          %3869 = vmatpush1.msra.mxu0 0.0
          %3870 = vmatprep.subr.mxu0 0.0
          %3871 = vmatpush1.msra.mxu0 0.0
          %3872 = vmatprep.subr.mxu0 0.0
          %3873 = vmatpush1.msra.mxu0 0.0
          %3874 = vmatprep.subr.mxu0 0.0
          %3875 = vmatpush1.msra.mxu0 0.0
          %3876 = vmatprep.subr.mxu0 0.0
          %3877 = vmatpush1.msra.mxu0 0.0
          %3878 = vmatprep.subr.mxu0 0.0
          %3879 = vmatpush1.msra.mxu0 0.0
          %3880 = vmatprep.subr.mxu0 0.0
          %3881 = vmatpush1.msra.mxu0 0.0
          %3882 = vmatprep.subr.mxu0 0.0
          %3883 = vmatpush1.msra.mxu0 0.0
          %3884 = vmatprep.subr.mxu0 0.0
          %3885 = vmatpush1.msra.mxu0 0.0
          %3886 = vmatprep.subr.mxu0 0.0
          %3887 = vmatpush1.msra.mxu0 0.0
          %3888 = vmatprep.subr.mxu0 0.0
          %3889 = vmatpush1.msra.mxu0 0.0
          %3890 = vmatprep.subr.mxu0 0.0
          %3891 = vmatpush1.msra.mxu0 0.0
          %3892 = vmatprep.subr.mxu0 0.0
          %3893 = vmatpush1.msra.mxu0 0.0
          %3894 = vmatprep.subr.mxu0 0.0
          %3895 = vmatpush1.msra.mxu0 0.0
          %3896 = vmatprep.subr.mxu0 0.0
          %3897 = vmatpush1.msra.mxu0 0.0
          %3898 = vmatprep.subr.mxu0 0.0
          %3899 = vmatpush1.msra.mxu0 0.0
          %3900 = vmatprep.subr.mxu0 0.0
          %3901 = vmatpush1.msra.mxu0 0.0
          %3902 = vmatprep.subr.mxu0 0.0
          %3903 = vmatpush1.msra.mxu0 0.0
          %3904 = vmatprep.subr.mxu0 0.0
          %3905 = vmatpush1.msra.mxu0 0.0
          %3906 = vmatprep.subr.mxu0 0.0
          %3907 = vmatpush1.msra.mxu0 0.0
          %3908 = vmatprep.subr.mxu0 0.0
          %3909 = vmatpush1.msra.mxu0 0.0
          %3910 = vmatprep.subr.mxu0 0.0
          %3911 = vmatpush1.msra.mxu0 0.0
          %3912 = vmatprep.subr.mxu0 0.0
          %3913 = vmatpush1.msra.mxu0 0.0
          %3914 = vmatprep.subr.mxu0 0.0
          %3915 = vmatpush1.msra.mxu0 0.0
          %3916 = vmatprep.subr.mxu0 0.0
          %3917 = vmatpush1.msra.mxu0 0.0
          %3918 = vmatprep.subr.mxu0 0.0
          %3919 = vmatpush1.msra.mxu0 0.0
          %3920 = vmatprep.subr.mxu0 0.0
          %3921 = vmatpush1.msra.mxu0 0.0
          %3922 = vmatprep.subr.mxu0 0.0
          %3923 = vmatpush1.msra.mxu0 0.0
          %3924 = vmatprep.subr.mxu0 0.0
          %3925 = vmatpush1.msra.mxu0 0.0
          %3926 = vmatprep.subr.mxu0 0.0
          %3927 = vmatpush1.msra.mxu0 0.0
          %3928 = vmatprep.subr.mxu0 0.0
          %3929 = vmatpush1.msra.mxu0 0.0
          %3930 = vmatprep.mubr.f32.mxu0 0.0
          %v3931 = vand.u32 %v3487, 4294901760
          %3932 = vmatmul.mubr.f32.gmra.mrb[0].mxu0 %v3931
          %v3933 = vpop.f32.mrb[0].mxu0
          %v3934 = vadd.f32 %v3862, %v3933
          %v3935 = vpop.f32.mrb[0].mxu0
          %3936 = vdwg.mxu0
          %v3937 = vsel %vm2588, %v2579, 0
          %3939 = vmatprep.subr.mxu0 0.0
          %v3940 = vand.u32 %v3937, 4294901760
          %3941 = vmatpush1.msra.mxu0 %v3940
          %3942 = vmatprep.subr.mxu0 0.0
          %3943 = vmatpush1.msra.mxu0 0.0
          %3944 = vmatprep.subr.mxu0 0.0
          %3945 = vmatpush1.msra.mxu0 0.0
          %3946 = vmatprep.subr.mxu0 0.0
          %3947 = vmatpush1.msra.mxu0 0.0
          %3948 = vmatprep.subr.mxu0 0.0
          %3949 = vmatpush1.msra.mxu0 0.0
          %3950 = vmatprep.subr.mxu0 0.0
          %3951 = vmatpush1.msra.mxu0 0.0
          %3952 = vmatprep.subr.mxu0 0.0
          %3953 = vmatpush1.msra.mxu0 0.0
          %3954 = vmatprep.subr.mxu0 0.0
          %3955 = vmatpush1.msra.mxu0 0.0
          %3956 = vmatprep.subr.mxu0 0.0
          %3957 = vmatpush1.msra.mxu0 0.0
          %3958 = vmatprep.subr.mxu0 0.0
          %3959 = vmatpush1.msra.mxu0 0.0
          %3960 = vmatprep.subr.mxu0 0.0
          %3961 = vmatpush1.msra.mxu0 0.0
          %3962 = vmatprep.subr.mxu0 0.0
          %3963 = vmatpush1.msra.mxu0 0.0
          %3964 = vmatprep.subr.mxu0 0.0
          %3965 = vmatpush1.msra.mxu0 0.0
          %3966 = vmatprep.subr.mxu0 0.0
          %3967 = vmatpush1.msra.mxu0 0.0
          %3968 = vmatprep.subr.mxu0 0.0
          %3969 = vmatpush1.msra.mxu0 0.0
          %3970 = vmatprep.subr.mxu0 0.0
          %3971 = vmatpush1.msra.mxu0 0.0
          %3972 = vmatprep.subr.mxu0 0.0
          %3973 = vmatpush1.msra.mxu0 0.0
          %3974 = vmatprep.subr.mxu0 0.0
          %3975 = vmatpush1.msra.mxu0 0.0
          %3976 = vmatprep.subr.mxu0 0.0
          %3977 = vmatpush1.msra.mxu0 0.0
          %3978 = vmatprep.subr.mxu0 0.0
          %3979 = vmatpush1.msra.mxu0 0.0
          %3980 = vmatprep.subr.mxu0 0.0
          %3981 = vmatpush1.msra.mxu0 0.0
          %3982 = vmatprep.subr.mxu0 0.0
          %3983 = vmatpush1.msra.mxu0 0.0
          %3984 = vmatprep.subr.mxu0 0.0
          %3985 = vmatpush1.msra.mxu0 0.0
          %3986 = vmatprep.subr.mxu0 0.0
          %3987 = vmatpush1.msra.mxu0 0.0
          %3988 = vmatprep.subr.mxu0 0.0
          %3989 = vmatpush1.msra.mxu0 0.0
          %3990 = vmatprep.subr.mxu0 0.0
          %3991 = vmatpush1.msra.mxu0 0.0
          %3992 = vmatprep.subr.mxu0 0.0
          %3993 = vmatpush1.msra.mxu0 0.0
          %3994 = vmatprep.subr.mxu0 0.0
          %3995 = vmatpush1.msra.mxu0 0.0
          %3996 = vmatprep.subr.mxu0 0.0
          %3997 = vmatpush1.msra.mxu0 0.0
          %3998 = vmatprep.subr.mxu0 0.0
          %3999 = vmatpush1.msra.mxu0 0.0
          %4000 = vmatprep.subr.mxu0 0.0
          %4001 = vmatpush1.msra.mxu0 0.0
          %4002 = vmatprep.subr.mxu0 0.0
          %4003 = vmatpush1.msra.mxu0 0.0
          %4004 = vmatprep.mubr.f32.mxu0 0.0
          %v4005 = vand.u32 %v3487, 4294901760
          %v4006 = vsub.f32 %v3487, %v4005
          %v4007 = vand.u32 %v4006, 4294901760
          %v4008 = vsub.f32 %v4006, %v4007
          %v4009 = vand.u32 %v4008, 4294901760
          %4010 = vmatmul.mubr.f32.gmra.mrb[0].mxu0 %v4009
          %v4011 = vpop.f32.mrb[0].mxu0
          %v4012 = vadd.f32 0.0, %v4011
          %v4013 = vpop.f32.mrb[0].mxu0
          %4014 = vdwg.mxu0
          %4015 = vmatprep.subr.mxu0 0.0
          %v4016 = vand.u32 %v3937, 4294901760
          %v4017 = vsub.f32 %v3937, %v4016
          %v4018 = vand.u32 %v4017, 4294901760
          %v4019 = vsub.f32 %v4017, %v4018
          %v4020 = vand.u32 %v4019, 4294901760
          %4021 = vmatpush1.msra.mxu0 %v4020
          %4022 = vmatprep.subr.mxu0 0.0
          %4023 = vmatpush1.msra.mxu0 0.0
          %4024 = vmatprep.subr.mxu0 0.0
          %4025 = vmatpush1.msra.mxu0 0.0
          %4026 = vmatprep.subr.mxu0 0.0
          %4027 = vmatpush1.msra.mxu0 0.0
          %4028 = vmatprep.subr.mxu0 0.0
          %4029 = vmatpush1.msra.mxu0 0.0
          %4030 = vmatprep.subr.mxu0 0.0
          %4031 = vmatpush1.msra.mxu0 0.0
          %4032 = vmatprep.subr.mxu0 0.0
          %4033 = vmatpush1.msra.mxu0 0.0
          %4034 = vmatprep.subr.mxu0 0.0
          %4035 = vmatpush1.msra.mxu0 0.0
          %4036 = vmatprep.subr.mxu0 0.0
          %4037 = vmatpush1.msra.mxu0 0.0
          %4038 = vmatprep.subr.mxu0 0.0
          %4039 = vmatpush1.msra.mxu0 0.0
          %4040 = vmatprep.subr.mxu0 0.0
          %4041 = vmatpush1.msra.mxu0 0.0
          %4042 = vmatprep.subr.mxu0 0.0
          %4043 = vmatpush1.msra.mxu0 0.0
          %4044 = vmatprep.subr.mxu0 0.0
          %4045 = vmatpush1.msra.mxu0 0.0
          %4046 = vmatprep.subr.mxu0 0.0
          %4047 = vmatpush1.msra.mxu0 0.0
          %4048 = vmatprep.subr.mxu0 0.0
          %4049 = vmatpush1.msra.mxu0 0.0
          %4050 = vmatprep.subr.mxu0 0.0
          %4051 = vmatpush1.msra.mxu0 0.0
          %4052 = vmatprep.subr.mxu0 0.0
          %4053 = vmatpush1.msra.mxu0 0.0
          %4054 = vmatprep.subr.mxu0 0.0
          %4055 = vmatpush1.msra.mxu0 0.0
          %4056 = vmatprep.subr.mxu0 0.0
          %4057 = vmatpush1.msra.mxu0 0.0
          %4058 = vmatprep.subr.mxu0 0.0
          %4059 = vmatpush1.msra.mxu0 0.0
          %4060 = vmatprep.subr.mxu0 0.0
          %4061 = vmatpush1.msra.mxu0 0.0
          %4062 = vmatprep.subr.mxu0 0.0
          %4063 = vmatpush1.msra.mxu0 0.0
          %4064 = vmatprep.subr.mxu0 0.0
          %4065 = vmatpush1.msra.mxu0 0.0
          %4066 = vmatprep.subr.mxu0 0.0
          %4067 = vmatpush1.msra.mxu0 0.0
          %4068 = vmatprep.subr.mxu0 0.0
          %4069 = vmatpush1.msra.mxu0 0.0
          %4070 = vmatprep.subr.mxu0 0.0
          %4071 = vmatpush1.msra.mxu0 0.0
          %4072 = vmatprep.subr.mxu0 0.0
          %4073 = vmatpush1.msra.mxu0 0.0
          %4074 = vmatprep.subr.mxu0 0.0
          %4075 = vmatpush1.msra.mxu0 0.0
          %4076 = vmatprep.subr.mxu0 0.0
          %4077 = vmatpush1.msra.mxu0 0.0
          %4078 = vmatprep.subr.mxu0 0.0
          %4079 = vmatpush1.msra.mxu0 0.0
          %4080 = vmatprep.subr.mxu0 0.0
          %4081 = vmatpush1.msra.mxu0 0.0
          %4082 = vmatprep.subr.mxu0 0.0
          %4083 = vmatpush1.msra.mxu0 0.0
          %4084 = vmatprep.mubr.f32.mxu0 0.0
          %v4085 = vand.u32 %v3487, 4294901760
          %4086 = vmatmul.mubr.f32.gmra.mrb[0].mxu0 %v4085
          %v4087 = vpop.f32.mrb[0].mxu0
          %v4088 = vadd.f32 %v4012, %v4087
          %v4089 = vpop.f32.mrb[0].mxu0
          %4090 = vdwg.mxu0
          %4091 = vmatprep.subr.mxu0 0.0
          %v4092 = vand.u32 %v3937, 4294901760
          %v4093 = vsub.f32 %v3937, %v4092
          %4094 = vmatpush1.msra.mxu0 %v4093
          %4095 = vmatprep.subr.mxu0 0.0
          %4096 = vmatpush1.msra.mxu0 0.0
          %4097 = vmatprep.subr.mxu0 0.0
          %4098 = vmatpush1.msra.mxu0 0.0
          %4099 = vmatprep.subr.mxu0 0.0
          %4100 = vmatpush1.msra.mxu0 0.0
          %4101 = vmatprep.subr.mxu0 0.0
          %4102 = vmatpush1.msra.mxu0 0.0
          %4103 = vmatprep.subr.mxu0 0.0
          %4104 = vmatpush1.msra.mxu0 0.0
          %4105 = vmatprep.subr.mxu0 0.0
          %4106 = vmatpush1.msra.mxu0 0.0
          %4107 = vmatprep.subr.mxu0 0.0
          %4108 = vmatpush1.msra.mxu0 0.0
          %4109 = vmatprep.subr.mxu0 0.0
          %4110 = vmatpush1.msra.mxu0 0.0
          %4111 = vmatprep.subr.mxu0 0.0
          %4112 = vmatpush1.msra.mxu0 0.0
          %4113 = vmatprep.subr.mxu0 0.0
          %4114 = vmatpush1.msra.mxu0 0.0
          %4115 = vmatprep.subr.mxu0 0.0
          %4116 = vmatpush1.msra.mxu0 0.0
          %4117 = vmatprep.subr.mxu0 0.0
          %4118 = vmatpush1.msra.mxu0 0.0
          %4119 = vmatprep.subr.mxu0 0.0
          %4120 = vmatpush1.msra.mxu0 0.0
          %4121 = vmatprep.subr.mxu0 0.0
          %4122 = vmatpush1.msra.mxu0 0.0
          %4123 = vmatprep.subr.mxu0 0.0
          %4124 = vmatpush1.msra.mxu0 0.0
          %4125 = vmatprep.subr.mxu0 0.0
          %4126 = vmatpush1.msra.mxu0 0.0
          %4127 = vmatprep.subr.mxu0 0.0
          %4128 = vmatpush1.msra.mxu0 0.0
          %4129 = vmatprep.subr.mxu0 0.0
          %4130 = vmatpush1.msra.mxu0 0.0
          %4131 = vmatprep.subr.mxu0 0.0
          %4132 = vmatpush1.msra.mxu0 0.0
          %4133 = vmatprep.subr.mxu0 0.0
          %4134 = vmatpush1.msra.mxu0 0.0
          %4135 = vmatprep.subr.mxu0 0.0
          %4136 = vmatpush1.msra.mxu0 0.0
          %4137 = vmatprep.subr.mxu0 0.0
          %4138 = vmatpush1.msra.mxu0 0.0
          %4139 = vmatprep.subr.mxu0 0.0
          %4140 = vmatpush1.msra.mxu0 0.0
          %4141 = vmatprep.subr.mxu0 0.0
          %4142 = vmatpush1.msra.mxu0 0.0
          %4143 = vmatprep.subr.mxu0 0.0
          %4144 = vmatpush1.msra.mxu0 0.0
          %4145 = vmatprep.subr.mxu0 0.0
          %4146 = vmatpush1.msra.mxu0 0.0
          %4147 = vmatprep.subr.mxu0 0.0
          %4148 = vmatpush1.msra.mxu0 0.0
          %4149 = vmatprep.subr.mxu0 0.0
          %4150 = vmatpush1.msra.mxu0 0.0
          %4151 = vmatprep.subr.mxu0 0.0
          %4152 = vmatpush1.msra.mxu0 0.0
          %4153 = vmatprep.subr.mxu0 0.0
          %4154 = vmatpush1.msra.mxu0 0.0
          %4155 = vmatprep.subr.mxu0 0.0
          %4156 = vmatpush1.msra.mxu0 0.0
          %4157 = vmatprep.mubr.f32.mxu0 0.0
          %v4158 = vand.u32 %v3487, 4294901760
          %v4159 = vsub.f32 %v3487, %v4158
          %4160 = vmatmul.mubr.f32.gmra.mrb[0].mxu0 %v4159
          %v4161 = vpop.f32.mrb[0].mxu0
          %v4162 = vadd.f32 %v4088, %v4161
          %v4163 = vpop.f32.mrb[0].mxu0
          %4164 = vdwg.mxu0
          %4165 = vmatprep.subr.mxu0 0.0
          %v4166 = vand.u32 %v3937, 4294901760
          %4167 = vmatpush1.msra.mxu0 %v4166
          %4168 = vmatprep.subr.mxu0 0.0
          %4169 = vmatpush1.msra.mxu0 0.0
          %4170 = vmatprep.subr.mxu0 0.0
          %4171 = vmatpush1.msra.mxu0 0.0
          %4172 = vmatprep.subr.mxu0 0.0
          %4173 = vmatpush1.msra.mxu0 0.0
          %4174 = vmatprep.subr.mxu0 0.0
          %4175 = vmatpush1.msra.mxu0 0.0
          %4176 = vmatprep.subr.mxu0 0.0
          %4177 = vmatpush1.msra.mxu0 0.0
          %4178 = vmatprep.subr.mxu0 0.0
          %4179 = vmatpush1.msra.mxu0 0.0
          %4180 = vmatprep.subr.mxu0 0.0
          %4181 = vmatpush1.msra.mxu0 0.0
          %4182 = vmatprep.subr.mxu0 0.0
          %4183 = vmatpush1.msra.mxu0 0.0
          %4184 = vmatprep.subr.mxu0 0.0
          %4185 = vmatpush1.msra.mxu0 0.0
          %4186 = vmatprep.subr.mxu0 0.0
          %4187 = vmatpush1.msra.mxu0 0.0
          %4188 = vmatprep.subr.mxu0 0.0
          %4189 = vmatpush1.msra.mxu0 0.0
          %4190 = vmatprep.subr.mxu0 0.0
          %4191 = vmatpush1.msra.mxu0 0.0
          %4192 = vmatprep.subr.mxu0 0.0
          %4193 = vmatpush1.msra.mxu0 0.0
          %4194 = vmatprep.subr.mxu0 0.0
          %4195 = vmatpush1.msra.mxu0 0.0
          %4196 = vmatprep.subr.mxu0 0.0
          %4197 = vmatpush1.msra.mxu0 0.0
          %4198 = vmatprep.subr.mxu0 0.0
          %4199 = vmatpush1.msra.mxu0 0.0
          %4200 = vmatprep.subr.mxu0 0.0
          %4201 = vmatpush1.msra.mxu0 0.0
          %4202 = vmatprep.subr.mxu0 0.0
          %4203 = vmatpush1.msra.mxu0 0.0
          %4204 = vmatprep.subr.mxu0 0.0
          %4205 = vmatpush1.msra.mxu0 0.0
          %4206 = vmatprep.subr.mxu0 0.0
          %4207 = vmatpush1.msra.mxu0 0.0
          %4208 = vmatprep.subr.mxu0 0.0
          %4209 = vmatpush1.msra.mxu0 0.0
          %4210 = vmatprep.subr.mxu0 0.0
          %4211 = vmatpush1.msra.mxu0 0.0
          %4212 = vmatprep.subr.mxu0 0.0
          %4213 = vmatpush1.msra.mxu0 0.0
          %4214 = vmatprep.subr.mxu0 0.0
          %4215 = vmatpush1.msra.mxu0 0.0
          %4216 = vmatprep.subr.mxu0 0.0
          %4217 = vmatpush1.msra.mxu0 0.0
          %4218 = vmatprep.subr.mxu0 0.0
          %4219 = vmatpush1.msra.mxu0 0.0
          %4220 = vmatprep.subr.mxu0 0.0
          %4221 = vmatpush1.msra.mxu0 0.0
          %4222 = vmatprep.subr.mxu0 0.0
          %4223 = vmatpush1.msra.mxu0 0.0
          %4224 = vmatprep.subr.mxu0 0.0
          %4225 = vmatpush1.msra.mxu0 0.0
          %4226 = vmatprep.subr.mxu0 0.0
          %4227 = vmatpush1.msra.mxu0 0.0
          %4228 = vmatprep.subr.mxu0 0.0
          %4229 = vmatpush1.msra.mxu0 0.0
          %4230 = vmatprep.mubr.f32.mxu0 0.0
          %v4231 = vand.u32 %v3487, 4294901760
          %v4232 = vsub.f32 %v3487, %v4231
          %v4233 = vand.u32 %v4232, 4294901760
          %4234 = vmatmul.mubr.f32.gmra.mrb[0].mxu0 %v4233
          %v4235 = vpop.f32.mrb[0].mxu0
          %v4236 = vadd.f32 %v4162, %v4235
          %v4237 = vpop.f32.mrb[0].mxu0
          %4238 = vdwg.mxu0
          %4239 = vmatprep.subr.mxu0 0.0
          %v4240 = vand.u32 %v3937, 4294901760
          %v4241 = vsub.f32 %v3937, %v4240
          %v4242 = vand.u32 %v4241, 4294901760
          %4243 = vmatpush1.msra.mxu0 %v4242
          %4244 = vmatprep.subr.mxu0 0.0
          %4245 = vmatpush1.msra.mxu0 0.0
          %4246 = vmatprep.subr.mxu0 0.0
          %4247 = vmatpush1.msra.mxu0 0.0
          %4248 = vmatprep.subr.mxu0 0.0
          %4249 = vmatpush1.msra.mxu0 0.0
          %4250 = vmatprep.subr.mxu0 0.0
          %4251 = vmatpush1.msra.mxu0 0.0
          %4252 = vmatprep.subr.mxu0 0.0
          %4253 = vmatpush1.msra.mxu0 0.0
          %4254 = vmatprep.subr.mxu0 0.0
          %4255 = vmatpush1.msra.mxu0 0.0
          %4256 = vmatprep.subr.mxu0 0.0
          %4257 = vmatpush1.msra.mxu0 0.0
          %4258 = vmatprep.subr.mxu0 0.0
          %4259 = vmatpush1.msra.mxu0 0.0
          %4260 = vmatprep.subr.mxu0 0.0
          %4261 = vmatpush1.msra.mxu0 0.0
          %4262 = vmatprep.subr.mxu0 0.0
          %4263 = vmatpush1.msra.mxu0 0.0
          %4264 = vmatprep.subr.mxu0 0.0
          %4265 = vmatpush1.msra.mxu0 0.0
          %4266 = vmatprep.subr.mxu0 0.0
          %4267 = vmatpush1.msra.mxu0 0.0
          %4268 = vmatprep.subr.mxu0 0.0
          %4269 = vmatpush1.msra.mxu0 0.0
          %4270 = vmatprep.subr.mxu0 0.0
          %4271 = vmatpush1.msra.mxu0 0.0
          %4272 = vmatprep.subr.mxu0 0.0
          %4273 = vmatpush1.msra.mxu0 0.0
          %4274 = vmatprep.subr.mxu0 0.0
          %4275 = vmatpush1.msra.mxu0 0.0
          %4276 = vmatprep.subr.mxu0 0.0
          %4277 = vmatpush1.msra.mxu0 0.0
          %4278 = vmatprep.subr.mxu0 0.0
          %4279 = vmatpush1.msra.mxu0 0.0
          %4280 = vmatprep.subr.mxu0 0.0
          %4281 = vmatpush1.msra.mxu0 0.0
          %4282 = vmatprep.subr.mxu0 0.0
          %4283 = vmatpush1.msra.mxu0 0.0
          %4284 = vmatprep.subr.mxu0 0.0
          %4285 = vmatpush1.msra.mxu0 0.0
          %4286 = vmatprep.subr.mxu0 0.0
          %4287 = vmatpush1.msra.mxu0 0.0
          %4288 = vmatprep.subr.mxu0 0.0
          %4289 = vmatpush1.msra.mxu0 0.0
          %4290 = vmatprep.subr.mxu0 0.0
          %4291 = vmatpush1.msra.mxu0 0.0
          %4292 = vmatprep.subr.mxu0 0.0
          %4293 = vmatpush1.msra.mxu0 0.0
          %4294 = vmatprep.subr.mxu0 0.0
          %4295 = vmatpush1.msra.mxu0 0.0
          %4296 = vmatprep.subr.mxu0 0.0
          %4297 = vmatpush1.msra.mxu0 0.0
          %4298 = vmatprep.subr.mxu0 0.0
          %4299 = vmatpush1.msra.mxu0 0.0
          %4300 = vmatprep.subr.mxu0 0.0
          %4301 = vmatpush1.msra.mxu0 0.0
          %4302 = vmatprep.subr.mxu0 0.0
          %4303 = vmatpush1.msra.mxu0 0.0
          %4304 = vmatprep.subr.mxu0 0.0
          %4305 = vmatpush1.msra.mxu0 0.0
          %4306 = vmatprep.mubr.f32.mxu0 0.0
          %v4307 = vand.u32 %v3487, 4294901760
          %4308 = vmatmul.mubr.f32.gmra.mrb[0].mxu0 %v4307
          %v4309 = vpop.f32.mrb[0].mxu0
          %v4310 = vadd.f32 %v4236, %v4309
          %v4311 = vpop.f32.mrb[0].mxu0
          %4312 = vdwg.mxu0
          %4313 = vmatprep.subr.mxu0 0.0
          %v4314 = vand.u32 %v3937, 4294901760
          %4315 = vmatpush1.msra.mxu0 %v4314
          %4316 = vmatprep.subr.mxu0 0.0
          %4317 = vmatpush1.msra.mxu0 0.0
          %4318 = vmatprep.subr.mxu0 0.0
          %4319 = vmatpush1.msra.mxu0 0.0
          %4320 = vmatprep.subr.mxu0 0.0
          %4321 = vmatpush1.msra.mxu0 0.0
          %4322 = vmatprep.subr.mxu0 0.0
          %4323 = vmatpush1.msra.mxu0 0.0
          %4324 = vmatprep.subr.mxu0 0.0
          %4325 = vmatpush1.msra.mxu0 0.0
          %4326 = vmatprep.subr.mxu0 0.0
          %4327 = vmatpush1.msra.mxu0 0.0
          %4328 = vmatprep.subr.mxu0 0.0
          %4329 = vmatpush1.msra.mxu0 0.0
          %4330 = vmatprep.subr.mxu0 0.0
          %4331 = vmatpush1.msra.mxu0 0.0
          %4332 = vmatprep.subr.mxu0 0.0
          %4333 = vmatpush1.msra.mxu0 0.0
          %4334 = vmatprep.subr.mxu0 0.0
          %4335 = vmatpush1.msra.mxu0 0.0
          %4336 = vmatprep.subr.mxu0 0.0
          %4337 = vmatpush1.msra.mxu0 0.0
          %4338 = vmatprep.subr.mxu0 0.0
          %4339 = vmatpush1.msra.mxu0 0.0
          %4340 = vmatprep.subr.mxu0 0.0
          %4341 = vmatpush1.msra.mxu0 0.0
          %4342 = vmatprep.subr.mxu0 0.0
          %4343 = vmatpush1.msra.mxu0 0.0
          %4344 = vmatprep.subr.mxu0 0.0
          %4345 = vmatpush1.msra.mxu0 0.0
          %4346 = vmatprep.subr.mxu0 0.0
          %4347 = vmatpush1.msra.mxu0 0.0
          %4348 = vmatprep.subr.mxu0 0.0
          %4349 = vmatpush1.msra.mxu0 0.0
          %4350 = vmatprep.subr.mxu0 0.0
          %4351 = vmatpush1.msra.mxu0 0.0
          %4352 = vmatprep.subr.mxu0 0.0
          %4353 = vmatpush1.msra.mxu0 0.0
          %4354 = vmatprep.subr.mxu0 0.0
          %4355 = vmatpush1.msra.mxu0 0.0
          %4356 = vmatprep.subr.mxu0 0.0
          %4357 = vmatpush1.msra.mxu0 0.0
          %4358 = vmatprep.subr.mxu0 0.0
          %4359 = vmatpush1.msra.mxu0 0.0
          %4360 = vmatprep.subr.mxu0 0.0
          %4361 = vmatpush1.msra.mxu0 0.0
          %4362 = vmatprep.subr.mxu0 0.0
          %4363 = vmatpush1.msra.mxu0 0.0
          %4364 = vmatprep.subr.mxu0 0.0
          %4365 = vmatpush1.msra.mxu0 0.0
          %4366 = vmatprep.subr.mxu0 0.0
          %4367 = vmatpush1.msra.mxu0 0.0
          %4368 = vmatprep.subr.mxu0 0.0
          %4369 = vmatpush1.msra.mxu0 0.0
          %4370 = vmatprep.subr.mxu0 0.0
          %4371 = vmatpush1.msra.mxu0 0.0
          %4372 = vmatprep.subr.mxu0 0.0
          %4373 = vmatpush1.msra.mxu0 0.0
          %4374 = vmatprep.subr.mxu0 0.0
          %4375 = vmatpush1.msra.mxu0 0.0
          %4376 = vmatprep.subr.mxu0 0.0
          %4377 = vmatpush1.msra.mxu0 0.0
          %4378 = vmatprep.mubr.f32.mxu0 0.0
          %v4379 = vand.u32 %v3487, 4294901760
          %4380 = vmatmul.mubr.f32.gmra.mrb[0].mxu0 %v4379
          %v4381 = vpop.f32.mrb[0].mxu0
          %v4382 = vadd.f32 %v4310, %v4381
          %v4383 = vpop.f32.mrb[0].mxu0
          %4384 = vdwg.mxu0
          %v4385 = vsub.f32 %v2575, %v3934
          %v4386 = vmul.f32 %v4385, %v4385
          %v4387 = vsub.f32 %v2575, %v4382
          %v4388 = vmul.f32 %v4387, %v4387
          %v4389 = vadd.f32 %v4386, %v4388
          %v4390 = vsub.f32 %v2575, %v3035
          %v4391 = vmul.f32 %v4390, %v4390
          %v4392 = vadd.f32 %v4389, %v4391
          %v4393 = vsub.f32 %v2575, %v3484
          %v4394 = vmul.f32 %v4393, %v4393
          %v4395 = vadd.f32 %v4392, %v4394
          %4396 = vst.msk [vmem:[%s221] sm:$0xf] %vm2569, %v4395
        $region40: #{tpu_custom_call.1} parent=27 // pred_fallthru
          _
        %s4397 = sand.u32 %s98, 1
        %s4398 = scalar_lea.sflag [#allocation4], %s4397
        %s4399 = sand.u32 %s98, 1
        %s4400 = smul.addr %s4399, 4
        %s4401 = scalar_lea.vmem [#allocation7], %s4400
        // Predicated region
        $region41: #{tpu_custom_call.1} parent=27 // pred_check
          %p4402 = pneg %p108
        $region42: #{tpu_custom_call.1} parent=27 // pred_check_branch
          %4404 = sbr.rel (%p4402) target = $region44
        $region43: #{tpu_custom_call.1} parent=27 // pred_region
          %s4406 = ssub.s32 64, 64
          %4407 = vsyncadd %s4398, %s4406
          %s4408 = smul.addr %s26, 64
          %s4409 = scalar_lea.hbm %s2, %s4408
          %s4411 = sshll.u32 %s4401, 4
          %s4412 = int_to_ptr.vmem [resolvable:$true] %s4411
          %4414 = dma.vmem_to_hbm [thread:$0]  %s4412, 64, %s4409, %s4398
        $region44: #{tpu_custom_call.1} parent=27 // pred_fallthru
          _
      $region28: #{tpu_custom_call.1} parent=5 // pred_fallthru
        _
      %p4415 = scmp.le.s32.totalorder 2, %s17
      // Predicated region
      $region45: #{tpu_custom_call.1} parent=5 // pred_check
        %p4416 = pneg %p4415
      $region46: #{tpu_custom_call.1} parent=5 // pred_check_branch
        %4418 = sbr.rel (%p4416) target = $region48
      $region47: #{tpu_custom_call.1} parent=5 // pred_region
        %s4419 = ssub.s32 %s17, 2
        // Predicated region
        $region49: #{tpu_custom_call.1} parent=47 // pred_check
          %p4420 = pneg %p114
        $region50: #{tpu_custom_call.1} parent=47 // pred_check_branch
          %4422 = sbr.rel (%p4420) target = $region52
        $region51: #{tpu_custom_call.1} parent=47 // pred_region
          %s4423 = sand.u32 %s99, 1
          %s4424 = scalar_lea.sflag [#allocation4], %s4423
          %s4425 = sand.u32 %s99, 1
          %s4426 = smul.addr %s4425, 4
          %s4427 = scalar_lea.vmem [#allocation7], %s4426
          %4428 = dma.done %s4424, 64
        $region52: #{tpu_custom_call.1} parent=47 // pred_fallthru
          _
      $region48: #{tpu_custom_call.1} parent=5 // pred_fallthru
        _
    $region6: #{tpu_custom_call.1} parent=1 // loop_footer
      %s21 = sadd.s32 1, %s17
    $region7: #{tpu_custom_call.1} parent=1 // loop_footer_branch
      %16 = sbr.rel target = $region3
    $region8: #{tpu_custom_call.1} parent=1 // loop_exit
      _
    %4429 = vsyncpa [#allocation3], 1
    %s4430 = scalar_lea.sflag [#allocation3], 1
    %4431 = vsyncpa %s4430, 1
    %4432 = vsyncpa [#allocation6], 1
    %s4433 = scalar_lea.sflag [#allocation6], 1
    %4434 = vsyncpa %s4433, 1
    %4435 = vsyncpa [#allocation4], 1
    %s4436 = scalar_lea.sflag [#allocation4], 1
    %4437 = vsyncpa %s4436, 1

</llo_original>
